<compile_context>
chip_gen: v7x
topology: tpu7x:2x2x1
jax: 0.10.0
libtpu: 0.0.40
codegen_flags: <defaults>
</compile_context>

<pallas_src>
import math

import jax
import jax.numpy as jnp
from jax.experimental import pallas as pl
from jax.experimental.pallas import tpu as pltpu

_LANES = 128
_MIN_SUBS = 8      # minimum sublane groups per block (1024 boxes)
_MAX_SUBS = 32     # maximum sublane groups per block (4096 boxes)


def _shoelace2(xs, ys):
    """2x signed area of the polygon given by parallel coordinate lists."""
    n = len(xs)
    s = xs[0] * ys[1] - xs[1] * ys[0]
    for k in range(1, n):
        kn = (k + 1) % n
        s = s + (xs[k] * ys[kn] - xs[kn] * ys[k])
    return s


def _iou_kernel(pred_ref, targ_ref, out_ref):
    # pred_ref / targ_ref: (8, subs, 128) f32 -> each coordinate plane is a
    # dense (subs, 128) tile; every op below is a full-width VPU op.
    px = [pred_ref[2 * k] for k in range(4)]
    py = [pred_ref[2 * k + 1] for k in range(4)]
    qx = [targ_ref[2 * k] for k in range(4)]
    qy = [targ_ref[2 * k + 1] for k in range(4)]

    one = jnp.float32(1.0)

    two_area_p = _shoelace2(px, py)
    two_area_q = _shoelace2(qx, qy)
    area_p = 0.5 * jnp.abs(two_area_p)
    area_q = 0.5 * jnp.abs(two_area_q)

    # Hoisted clip-polygon (target) half-planes, orientation-corrected once:
    # point (x, y) is inside half-plane k  <=>
    #   ux[k] * (y - qy[k]) - uy[k] * (x - qx[k]) >= 0.
    sgn_q = jnp.where(two_area_q >= 0.0, one, -one)
    ux = [sgn_q * (qx[(k + 1) % 4] - qx[k]) for k in range(4)]
    uy = [sgn_q * (qy[(k + 1) % 4] - qy[k]) for k in range(4)]

    def distances(vx, vy, k):
        d = [ux[k] * (vy[i] - qy[k]) - uy[k] * (vx[i] - qx[k])
             for i in range(len(vx))]
        ins = [di >= 0.0 for di in d]
        return d, ins

    def emit(sx, sy, ds, s_in, evx, evy, de, e_in, k):
        """Fixed-slot Sutherland-Hodgman emission for one subject edge s->e.

        Always emits exactly two points.  Duplicates and filler points lying on
        the clip line are chosen so the shoelace sum of the emitted sequence
        equals the shoelace sum of the true clipped polygon; no exact-zero
        floating-point assumptions are needed (robust to FMA / fast-math)."""
        denom = ds - de
        denom = jnp.where(denom == 0.0, one, denom)   # only hit when not mixed
        t = ds / denom                                # exact f32 divide
        ix = sx + t * (evx - sx)
        iy = sy + t * (evy - sy)
        both_in = jnp.logical_and(s_in, e_in)
        both_out = jnp.logical_and(jnp.logical_not(s_in), jnp.logical_not(e_in))
        # slot 1: kept start vertex / filler on the clip line / crossing point.
        w1x = jnp.where(both_in, sx, jnp.where(both_out, qx[k], ix))
        w1y = jnp.where(both_in, sy, jnp.where(both_out, qy[k], iy))
        # slot 2: end vertex if it survived, else a harmless duplicate of slot 1.
        w2x = jnp.where(e_in, evx, w1x)
        w2y = jnp.where(e_in, evy, w1y)
        return w1x, w1y, w2x, w2y

    def clip(vx, vy, k):
        """One SH round: n-point polygon -> 2n-point polygon (fixed slots)."""
        n = len(vx)
        d, ins = distances(vx, vy, k)
        ox, oy = [], []
        for i in range(n):
            j = (i + 1) % n
            w1x, w1y, w2x, w2y = emit(vx[i], vy[i], d[i], ins[i],
                                      vx[j], vy[j], d[j], ins[j], k)
            ox += [w1x, w2x]
            oy += [w1y, w2y]
        return ox, oy

    def clip_and_area(vx, vy, k):
        """Final SH round fused with the shoelace accumulation (never
        materializes the 2n-point list -> lower vreg pressure)."""
        n = len(vx)
        d, ins = distances(vx, vy, k)
        acc = None
        first = prev = None
        for i in range(n):
            j = (i + 1) % n
            w1x, w1y, w2x, w2y = emit(vx[i], vy[i], d[i], ins[i],
                                      vx[j], vy[j], d[j], ins[j], k)
            if i == 0:
                first = (w1x, w1y)
                acc = w1x * w2y - w2x * w1y
            else:
                acc = acc + (prev[0] * w1y - w1x * prev[1])
                acc = acc + (w1x * w2y - w2x * w1y)
            prev = (w2x, w2y)
        acc = acc + (prev[0] * first[1] - first[0] * prev[1])
        return acc

    # Clip pred-quad by the 4 half-planes of target-quad: 4 -> 8 -> 16 -> 32
    # vertices, last round fused with the area accumulation.
    vx, vy = px, py
    for k in range(3):
        vx, vy = clip(vx, vy, k)
    two_inter = clip_and_area(vx, vy, 3)

    inter = 0.5 * jnp.abs(two_inter)
    inter = jnp.minimum(inter, jnp.minimum(area_p, area_q))   # IoU <= 1 guard
    union = area_p + area_q - inter
    safe_union = jnp.where(union > 0.0, union, one)
    iou = jnp.where(union > 0.0, inter / safe_union, jnp.zeros_like(inter))
    out_ref[...] = one - iou


def iou_loss(pred, target, reduction="none", loss_type="iou"):
    # TODO(synk): 'giou' needs shapely minimum_rotated_rectangle - not implemented.
    assert loss_type == "iou"
    assert pred.shape == target.shape and pred.ndim == 2 and pred.shape[1] == 8
    n = pred.shape[0]

    min_block = _MIN_SUBS * _LANES
    n_pad = ((n + min_block - 1) // min_block) * min_block
    g = n_pad // _LANES                         # box groups of 128 (multiple of 8)
    subs = math.gcd(g, _MAX_SUBS)               # 8 / 16 / 32, always divides g
    grid = g // subs

    def prep(x):
        x = x.astype(jnp.float32)
        if n_pad != n:
            x = jnp.pad(x, ((0, n_pad - n), (0, 0)))
        # (n_pad, 8) -> (8, g, 128): coords on leading axis, boxes on (sublane, lane)
        return x.reshape(g, _LANES, 8).transpose(2, 0, 1)

    pred_r = prep(pred)
    targ_r = prep(target)

    out = pl.pallas_call(
        _iou_kernel,
        out_shape=jax.ShapeDtypeStruct((g, _LANES), jnp.float32),
        grid_spec=pltpu.PrefetchScalarGridSpec(
            num_scalar_prefetch=0,
            grid=(grid,),
            in_specs=[
                pl.BlockSpec((8, subs, _LANES), lambda i: (0, i, 0)),
                pl.BlockSpec((8, subs, _LANES), lambda i: (0, i, 0)),
            ],
            out_specs=pl.BlockSpec((subs, _LANES), lambda i: (i, 0)),
        ),
        compiler_params=pltpu.CompilerParams(dimension_semantics=("parallel",)),
    )(pred_r, targ_r)

    loss = out.reshape(n_pad)[:n]               # drop padded boxes before reducing
    if reduction == "mean":
        return loss.mean()
    if reduction == "sum":
        return loss.sum()
    return loss


def make_boxes(key, n):
    """Deterministic convex quads: rotated rectangles, CCW order, flattened to (n, 8)."""
    k1, k2, k3, k4 = jax.random.split(key, 4)
    cx = jax.random.uniform(k1, (n,), minval=4.0, maxval=12.0)
    cy = jax.random.uniform(k2, (n,), minval=4.0, maxval=12.0)
    wh = jax.random.uniform(k3, (n, 2), minval=2.0, maxval=6.0)
    ang = jax.random.uniform(k4, (n,), minval=0.0, maxval=jnp.pi)
    hw, hh = wh[:, 0] / 2.0, wh[:, 1] / 2.0
    local = jnp.stack(
        [jnp.stack([-hw, -hh], -1),
         jnp.stack([hw, -hh], -1),
         jnp.stack([hw, hh], -1),
         jnp.stack([-hw, hh], -1)], axis=1)            # (n, 4, 2)
    c, s = jnp.cos(ang), jnp.sin(ang)
    rot = jnp.stack([jnp.stack([c, -s], -1),
                     jnp.stack([s, c], -1)], axis=1)   # (n, 2, 2)
    pts = jnp.einsum("nij,nkj->nki", rot, local) + jnp.stack([cx, cy], -1)[:, None, :]
    return pts.reshape(n, 8).astype(jnp.float32)


if __name__ == "__main__":
    key = jax.random.PRNGKey(0)
    kp, kt = jax.random.split(key)
    N = 8
    pred = make_boxes(kp, N)     # [8, 8]
    target = make_boxes(kt, N)   # [8, 8]

    loss = iou_loss(pred, target, reduction="none", loss_type="iou")
    jax.block_until_ready(loss)
    assert loss.shape == (N,)
    assert bool(jnp.all(jnp.isfinite(loss)))
    assert bool(jnp.all((loss >= -1e-2) & (loss <= 1.0 + 1e-2)))

    # identical boxes -> IoU ~ 1 -> loss ~ 0
    self_loss = iou_loss(pred, pred)
    jax.block_until_ready(self_loss)
    assert bool(jnp.all(self_loss < 5e-3))

    # known geometry: half-overlapping unit squares (IoU 1/3), disjoint (0), identical (1)
    kp_boxes = jnp.array([[0, 0, 1, 0, 1, 1, 0, 1],
                          [0, 0, 1, 0, 1, 1, 0, 1],
                          [0, 0, 1, 0, 1, 1, 0, 1]], dtype=jnp.float32)
    kt_boxes = jnp.array([[0.5, 0, 1.5, 0, 1.5, 1, 0.5, 1],
                          [2, 2, 3, 2, 3, 3, 2, 3],
                          [0, 0, 1, 0, 1, 1, 0, 1]], dtype=jnp.float32)
    known = iou_loss(kp_boxes, kt_boxes)
    jax.block_until_ready(known)
    expected = jnp.array([2.0 / 3.0, 1.0, 0.0], dtype=jnp.float32)
    assert bool(jnp.all(jnp.abs(known - expected) < 5e-3))

    # reduction paths
    lm = iou_loss(pred, target, reduction="mean")
    ls = iou_loss(pred, target, reduction="sum")
    jax.block_until_ready((lm, ls))
    assert bool(jnp.abs(lm - loss.mean()) < 1e-5)
    assert bool(jnp.abs(ls - loss.sum()) < 1e-4)

    print("KERNEL_OK")
</pallas_src>

<mosaic_0001>
module attributes {stable_mosaic.version = 11 : i64} {
  func.func @_iou_kernel(%arg0: i32, %arg1: memref<8x8x128xf32, #tpu.memory_space<vmem>>, %arg2: memref<8x8x128xf32, #tpu.memory_space<vmem>>, %arg3: memref<8x128xf32, #tpu.memory_space<vmem>>) attributes {dimension_semantics = [#tpu.dimension_semantics<parallel>], iteration_bounds = array<i64: 1>, scalar_prefetch = 0 : i64, scratch_operands = 0 : i64, tpu.core_type = #tpu.core_type<tc>, window_params = [{transform_indices = @transform_0, window_bounds = array<i64: 8, 8, 128>}, {transform_indices = @transform_1, window_bounds = array<i64: 8, 8, 128>}, {transform_indices = @transform_2, window_bounds = array<i64: 8, 128>}]} {
    %c0 = arith.constant 0 : index
    %c0_0 = arith.constant 0 : index
    %c0_1 = arith.constant 0 : index
    %0 = vector.load %arg1[%c0, %c0_0, %c0_1] : memref<8x8x128xf32, #tpu.memory_space<vmem>>, vector<1x8x128xf32>
    %1 = vector.shape_cast %0 : vector<1x8x128xf32> to vector<8x128xf32>
    %c2 = arith.constant 2 : index
    %c0_2 = arith.constant 0 : index
    %c0_3 = arith.constant 0 : index
    %2 = vector.load %arg1[%c2, %c0_2, %c0_3] : memref<8x8x128xf32, #tpu.memory_space<vmem>>, vector<1x8x128xf32>
    %3 = vector.shape_cast %2 : vector<1x8x128xf32> to vector<8x128xf32>
    %c4 = arith.constant 4 : index
    %c0_4 = arith.constant 0 : index
    %c0_5 = arith.constant 0 : index
    %4 = vector.load %arg1[%c4, %c0_4, %c0_5] : memref<8x8x128xf32, #tpu.memory_space<vmem>>, vector<1x8x128xf32>
    %5 = vector.shape_cast %4 : vector<1x8x128xf32> to vector<8x128xf32>
    %c6 = arith.constant 6 : index
    %c0_6 = arith.constant 0 : index
    %c0_7 = arith.constant 0 : index
    %6 = vector.load %arg1[%c6, %c0_6, %c0_7] : memref<8x8x128xf32, #tpu.memory_space<vmem>>, vector<1x8x128xf32>
    %7 = vector.shape_cast %6 : vector<1x8x128xf32> to vector<8x128xf32>
    %c1 = arith.constant 1 : index
    %c0_8 = arith.constant 0 : index
    %c0_9 = arith.constant 0 : index
    %8 = vector.load %arg1[%c1, %c0_8, %c0_9] : memref<8x8x128xf32, #tpu.memory_space<vmem>>, vector<1x8x128xf32>
    %9 = vector.shape_cast %8 : vector<1x8x128xf32> to vector<8x128xf32>
    %c3 = arith.constant 3 : index
    %c0_10 = arith.constant 0 : index
    %c0_11 = arith.constant 0 : index
    %10 = vector.load %arg1[%c3, %c0_10, %c0_11] : memref<8x8x128xf32, #tpu.memory_space<vmem>>, vector<1x8x128xf32>
    %11 = vector.shape_cast %10 : vector<1x8x128xf32> to vector<8x128xf32>
    %c5 = arith.constant 5 : index
    %c0_12 = arith.constant 0 : index
    %c0_13 = arith.constant 0 : index
    %12 = vector.load %arg1[%c5, %c0_12, %c0_13] : memref<8x8x128xf32, #tpu.memory_space<vmem>>, vector<1x8x128xf32>
    %13 = vector.shape_cast %12 : vector<1x8x128xf32> to vector<8x128xf32>
    %c7 = arith.constant 7 : index
    %c0_14 = arith.constant 0 : index
    %c0_15 = arith.constant 0 : index
    %14 = vector.load %arg1[%c7, %c0_14, %c0_15] : memref<8x8x128xf32, #tpu.memory_space<vmem>>, vector<1x8x128xf32>
    %15 = vector.shape_cast %14 : vector<1x8x128xf32> to vector<8x128xf32>
    %c0_16 = arith.constant 0 : index
    %c0_17 = arith.constant 0 : index
    %c0_18 = arith.constant 0 : index
    %16 = vector.load %arg2[%c0_16, %c0_17, %c0_18] : memref<8x8x128xf32, #tpu.memory_space<vmem>>, vector<1x8x128xf32>
    %17 = vector.shape_cast %16 : vector<1x8x128xf32> to vector<8x128xf32>
    %c2_19 = arith.constant 2 : index
    %c0_20 = arith.constant 0 : index
    %c0_21 = arith.constant 0 : index
    %18 = vector.load %arg2[%c2_19, %c0_20, %c0_21] : memref<8x8x128xf32, #tpu.memory_space<vmem>>, vector<1x8x128xf32>
    %19 = vector.shape_cast %18 : vector<1x8x128xf32> to vector<8x128xf32>
    %c4_22 = arith.constant 4 : index
    %c0_23 = arith.constant 0 : index
    %c0_24 = arith.constant 0 : index
    %20 = vector.load %arg2[%c4_22, %c0_23, %c0_24] : memref<8x8x128xf32, #tpu.memory_space<vmem>>, vector<1x8x128xf32>
    %21 = vector.shape_cast %20 : vector<1x8x128xf32> to vector<8x128xf32>
    %c6_25 = arith.constant 6 : index
    %c0_26 = arith.constant 0 : index
    %c0_27 = arith.constant 0 : index
    %22 = vector.load %arg2[%c6_25, %c0_26, %c0_27] : memref<8x8x128xf32, #tpu.memory_space<vmem>>, vector<1x8x128xf32>
    %23 = vector.shape_cast %22 : vector<1x8x128xf32> to vector<8x128xf32>
    %c1_28 = arith.constant 1 : index
    %c0_29 = arith.constant 0 : index
    %c0_30 = arith.constant 0 : index
    %24 = vector.load %arg2[%c1_28, %c0_29, %c0_30] : memref<8x8x128xf32, #tpu.memory_space<vmem>>, vector<1x8x128xf32>
    %25 = vector.shape_cast %24 : vector<1x8x128xf32> to vector<8x128xf32>
    %c3_31 = arith.constant 3 : index
    %c0_32 = arith.constant 0 : index
    %c0_33 = arith.constant 0 : index
    %26 = vector.load %arg2[%c3_31, %c0_32, %c0_33] : memref<8x8x128xf32, #tpu.memory_space<vmem>>, vector<1x8x128xf32>
    %27 = vector.shape_cast %26 : vector<1x8x128xf32> to vector<8x128xf32>
    %c5_34 = arith.constant 5 : index
    %c0_35 = arith.constant 0 : index
    %c0_36 = arith.constant 0 : index
    %28 = vector.load %arg2[%c5_34, %c0_35, %c0_36] : memref<8x8x128xf32, #tpu.memory_space<vmem>>, vector<1x8x128xf32>
    %29 = vector.shape_cast %28 : vector<1x8x128xf32> to vector<8x128xf32>
    %c7_37 = arith.constant 7 : index
    %c0_38 = arith.constant 0 : index
    %c0_39 = arith.constant 0 : index
    %30 = vector.load %arg2[%c7_37, %c0_38, %c0_39] : memref<8x8x128xf32, #tpu.memory_space<vmem>>, vector<1x8x128xf32>
    %31 = vector.shape_cast %30 : vector<1x8x128xf32> to vector<8x128xf32>
    %32 = arith.mulf %1, %11 : vector<8x128xf32>
    %33 = arith.mulf %3, %9 : vector<8x128xf32>
    %34 = arith.subf %32, %33 : vector<8x128xf32>
    %35 = arith.mulf %3, %13 : vector<8x128xf32>
    %36 = arith.mulf %5, %11 : vector<8x128xf32>
    %37 = arith.subf %35, %36 : vector<8x128xf32>
    %38 = arith.addf %34, %37 : vector<8x128xf32>
    %39 = arith.mulf %5, %15 : vector<8x128xf32>
    %40 = arith.mulf %7, %13 : vector<8x128xf32>
    %41 = arith.subf %39, %40 : vector<8x128xf32>
    %42 = arith.addf %38, %41 : vector<8x128xf32>
    %43 = arith.mulf %7, %9 : vector<8x128xf32>
    %44 = arith.mulf %1, %15 : vector<8x128xf32>
    %45 = arith.subf %43, %44 : vector<8x128xf32>
    %46 = arith.addf %42, %45 : vector<8x128xf32>
    %47 = arith.mulf %17, %27 : vector<8x128xf32>
    %48 = arith.mulf %19, %25 : vector<8x128xf32>
    %49 = arith.subf %47, %48 : vector<8x128xf32>
    %50 = arith.mulf %19, %29 : vector<8x128xf32>
    %51 = arith.mulf %21, %27 : vector<8x128xf32>
    %52 = arith.subf %50, %51 : vector<8x128xf32>
    %53 = arith.addf %49, %52 : vector<8x128xf32>
    %54 = arith.mulf %21, %31 : vector<8x128xf32>
    %55 = arith.mulf %23, %29 : vector<8x128xf32>
    %56 = arith.subf %54, %55 : vector<8x128xf32>
    %57 = arith.addf %53, %56 : vector<8x128xf32>
    %58 = arith.mulf %23, %25 : vector<8x128xf32>
    %59 = arith.mulf %17, %31 : vector<8x128xf32>
    %60 = arith.subf %58, %59 : vector<8x128xf32>
    %61 = arith.addf %57, %60 : vector<8x128xf32>
    %62 = math.absf %46 : vector<8x128xf32>
    %cst = arith.constant 5.000000e-01 : f32
    %63 = vector.broadcast %cst : f32 to vector<8x128xf32>
    %64 = arith.mulf %63, %62 : vector<8x128xf32>
    %65 = math.absf %61 : vector<8x128xf32>
    %cst_40 = arith.constant 5.000000e-01 : f32
    %66 = vector.broadcast %cst_40 : f32 to vector<8x128xf32>
    %67 = arith.mulf %66, %65 : vector<8x128xf32>
    %cst_41 = arith.constant 0.000000e+00 : f32
    %68 = vector.broadcast %cst_41 : f32 to vector<8x128xf32>
    %69 = arith.cmpf oge, %61, %68 : vector<8x128xf32>
    %cst_42 = arith.constant 0.000000e+00 : f32
    %cst_43 = arith.constant 1.000000e+00 : f32
    %70 = arith.subf %cst_42, %cst_43 : f32
    %cst_44 = arith.constant 1.000000e+00 : f32
    %71 = vector.broadcast %cst_44 : f32 to vector<8x128xf32>
    %72 = vector.broadcast %70 : f32 to vector<8x128xf32>
    %73 = arith.select %69, %71, %72 : vector<8x128xi1>, vector<8x128xf32>
    %74 = arith.subf %19, %17 : vector<8x128xf32>
    %75 = arith.mulf %73, %74 : vector<8x128xf32>
    %76 = arith.subf %21, %19 : vector<8x128xf32>
    %77 = arith.mulf %73, %76 : vector<8x128xf32>
    %78 = arith.subf %23, %21 : vector<8x128xf32>
    %79 = arith.mulf %73, %78 : vector<8x128xf32>
    %80 = arith.subf %17, %23 : vector<8x128xf32>
    %81 = arith.mulf %73, %80 : vector<8x128xf32>
    %82 = arith.subf %27, %25 : vector<8x128xf32>
    %83 = arith.mulf %73, %82 : vector<8x128xf32>
    %84 = arith.subf %29, %27 : vector<8x128xf32>
    %85 = arith.mulf %73, %84 : vector<8x128xf32>
    %86 = arith.subf %31, %29 : vector<8x128xf32>
    %87 = arith.mulf %73, %86 : vector<8x128xf32>
    %88 = arith.subf %25, %31 : vector<8x128xf32>
    %89 = arith.mulf %73, %88 : vector<8x128xf32>
    %90 = arith.subf %9, %25 : vector<8x128xf32>
    %91 = arith.mulf %75, %90 : vector<8x128xf32>
    %92 = arith.subf %1, %17 : vector<8x128xf32>
    %93 = arith.mulf %83, %92 : vector<8x128xf32>
    %94 = arith.subf %91, %93 : vector<8x128xf32>
    %95 = arith.subf %11, %25 : vector<8x128xf32>
    %96 = arith.mulf %75, %95 : vector<8x128xf32>
    %97 = arith.subf %3, %17 : vector<8x128xf32>
    %98 = arith.mulf %83, %97 : vector<8x128xf32>
    %99 = arith.subf %96, %98 : vector<8x128xf32>
    %100 = arith.subf %13, %25 : vector<8x128xf32>
    %101 = arith.mulf %75, %100 : vector<8x128xf32>
    %102 = arith.subf %5, %17 : vector<8x128xf32>
    %103 = arith.mulf %83, %102 : vector<8x128xf32>
    %104 = arith.subf %101, %103 : vector<8x128xf32>
    %105 = arith.subf %15, %25 : vector<8x128xf32>
    %106 = arith.mulf %75, %105 : vector<8x128xf32>
    %107 = arith.subf %7, %17 : vector<8x128xf32>
    %108 = arith.mulf %83, %107 : vector<8x128xf32>
    %109 = arith.subf %106, %108 : vector<8x128xf32>
    %cst_45 = arith.constant 0.000000e+00 : f32
    %110 = vector.broadcast %cst_45 : f32 to vector<8x128xf32>
    %111 = arith.cmpf oge, %94, %110 : vector<8x128xf32>
    %cst_46 = arith.constant 0.000000e+00 : f32
    %112 = vector.broadcast %cst_46 : f32 to vector<8x128xf32>
    %113 = arith.cmpf oge, %99, %112 : vector<8x128xf32>
    %cst_47 = arith.constant 0.000000e+00 : f32
    %114 = vector.broadcast %cst_47 : f32 to vector<8x128xf32>
    %115 = arith.cmpf oge, %104, %114 : vector<8x128xf32>
    %cst_48 = arith.constant 0.000000e+00 : f32
    %116 = vector.broadcast %cst_48 : f32 to vector<8x128xf32>
    %117 = arith.cmpf oge, %109, %116 : vector<8x128xf32>
    %118 = arith.subf %94, %99 : vector<8x128xf32>
    %cst_49 = arith.constant 0.000000e+00 : f32
    %119 = vector.broadcast %cst_49 : f32 to vector<8x128xf32>
    %120 = arith.cmpf oeq, %118, %119 : vector<8x128xf32>
    %cst_50 = arith.constant 1.000000e+00 : f32
    %121 = vector.broadcast %cst_50 : f32 to vector<8x128xf32>
    %122 = arith.select %120, %121, %118 : vector<8x128xi1>, vector<8x128xf32>
    %123 = arith.divf %94, %122 : vector<8x128xf32>
    %124 = arith.subf %3, %1 : vector<8x128xf32>
    %125 = arith.mulf %123, %124 : vector<8x128xf32>
    %126 = arith.addf %1, %125 : vector<8x128xf32>
    %127 = arith.subf %11, %9 : vector<8x128xf32>
    %128 = arith.mulf %123, %127 : vector<8x128xf32>
    %129 = arith.addf %9, %128 : vector<8x128xf32>
    %130 = arith.andi %111, %113 : vector<8x128xi1>
    %cst_51 = arith.constant dense<true> : vector<8x128xi1>
    %131 = arith.xori %111, %cst_51 : vector<8x128xi1>
    %cst_52 = arith.constant dense<true> : vector<8x128xi1>
    %132 = arith.xori %113, %cst_52 : vector<8x128xi1>
    %133 = arith.andi %131, %132 : vector<8x128xi1>
    %134 = arith.select %133, %17, %126 : vector<8x128xi1>, vector<8x128xf32>
    %135 = arith.select %130, %1, %134 : vector<8x128xi1>, vector<8x128xf32>
    %136 = arith.select %133, %25, %129 : vector<8x128xi1>, vector<8x128xf32>
    %137 = arith.select %130, %9, %136 : vector<8x128xi1>, vector<8x128xf32>
    %138 = arith.select %113, %3, %135 : vector<8x128xi1>, vector<8x128xf32>
    %139 = arith.select %113, %11, %137 : vector<8x128xi1>, vector<8x128xf32>
    %140 = arith.subf %99, %104 : vector<8x128xf32>
    %cst_53 = arith.constant 0.000000e+00 : f32
    %141 = vector.broadcast %cst_53 : f32 to vector<8x128xf32>
    %142 = arith.cmpf oeq, %140, %141 : vector<8x128xf32>
    %cst_54 = arith.constant 1.000000e+00 : f32
    %143 = vector.broadcast %cst_54 : f32 to vector<8x128xf32>
    %144 = arith.select %142, %143, %140 : vector<8x128xi1>, vector<8x128xf32>
    %145 = arith.divf %99, %144 : vector<8x128xf32>
    %146 = arith.subf %5, %3 : vector<8x128xf32>
    %147 = arith.mulf %145, %146 : vector<8x128xf32>
    %148 = arith.addf %3, %147 : vector<8x128xf32>
    %149 = arith.subf %13, %11 : vector<8x128xf32>
    %150 = arith.mulf %145, %149 : vector<8x128xf32>
    %151 = arith.addf %11, %150 : vector<8x128xf32>
    %152 = arith.andi %113, %115 : vector<8x128xi1>
    %cst_55 = arith.constant dense<true> : vector<8x128xi1>
    %153 = arith.xori %113, %cst_55 : vector<8x128xi1>
    %cst_56 = arith.constant dense<true> : vector<8x128xi1>
    %154 = arith.xori %115, %cst_56 : vector<8x128xi1>
    %155 = arith.andi %153, %154 : vector<8x128xi1>
    %156 = arith.select %155, %17, %148 : vector<8x128xi1>, vector<8x128xf32>
    %157 = arith.select %152, %3, %156 : vector<8x128xi1>, vector<8x128xf32>
    %158 = arith.select %155, %25, %151 : vector<8x128xi1>, vector<8x128xf32>
    %159 = arith.select %152, %11, %158 : vector<8x128xi1>, vector<8x128xf32>
    %160 = arith.select %115, %5, %157 : vector<8x128xi1>, vector<8x128xf32>
    %161 = arith.select %115, %13, %159 : vector<8x128xi1>, vector<8x128xf32>
    %162 = arith.subf %104, %109 : vector<8x128xf32>
    %cst_57 = arith.constant 0.000000e+00 : f32
    %163 = vector.broadcast %cst_57 : f32 to vector<8x128xf32>
    %164 = arith.cmpf oeq, %162, %163 : vector<8x128xf32>
    %cst_58 = arith.constant 1.000000e+00 : f32
    %165 = vector.broadcast %cst_58 : f32 to vector<8x128xf32>
    %166 = arith.select %164, %165, %162 : vector<8x128xi1>, vector<8x128xf32>
    %167 = arith.divf %104, %166 : vector<8x128xf32>
    %168 = arith.subf %7, %5 : vector<8x128xf32>
    %169 = arith.mulf %167, %168 : vector<8x128xf32>
    %170 = arith.addf %5, %169 : vector<8x128xf32>
    %171 = arith.subf %15, %13 : vector<8x128xf32>
    %172 = arith.mulf %167, %171 : vector<8x128xf32>
    %173 = arith.addf %13, %172 : vector<8x128xf32>
    %174 = arith.andi %115, %117 : vector<8x128xi1>
    %cst_59 = arith.constant dense<true> : vector<8x128xi1>
    %175 = arith.xori %115, %cst_59 : vector<8x128xi1>
    %cst_60 = arith.constant dense<true> : vector<8x128xi1>
    %176 = arith.xori %117, %cst_60 : vector<8x128xi1>
    %177 = arith.andi %175, %176 : vector<8x128xi1>
    %178 = arith.select %177, %17, %170 : vector<8x128xi1>, vector<8x128xf32>
    %179 = arith.select %174, %5, %178 : vector<8x128xi1>, vector<8x128xf32>
    %180 = arith.select %177, %25, %173 : vector<8x128xi1>, vector<8x128xf32>
    %181 = arith.select %174, %13, %180 : vector<8x128xi1>, vector<8x128xf32>
    %182 = arith.select %117, %7, %179 : vector<8x128xi1>, vector<8x128xf32>
    %183 = arith.select %117, %15, %181 : vector<8x128xi1>, vector<8x128xf32>
    %184 = arith.subf %109, %94 : vector<8x128xf32>
    %cst_61 = arith.constant 0.000000e+00 : f32
    %185 = vector.broadcast %cst_61 : f32 to vector<8x128xf32>
    %186 = arith.cmpf oeq, %184, %185 : vector<8x128xf32>
    %cst_62 = arith.constant 1.000000e+00 : f32
    %187 = vector.broadcast %cst_62 : f32 to vector<8x128xf32>
    %188 = arith.select %186, %187, %184 : vector<8x128xi1>, vector<8x128xf32>
    %189 = arith.divf %109, %188 : vector<8x128xf32>
    %190 = arith.subf %1, %7 : vector<8x128xf32>
    %191 = arith.mulf %189, %190 : vector<8x128xf32>
    %192 = arith.addf %7, %191 : vector<8x128xf32>
    %193 = arith.subf %9, %15 : vector<8x128xf32>
    %194 = arith.mulf %189, %193 : vector<8x128xf32>
    %195 = arith.addf %15, %194 : vector<8x128xf32>
    %196 = arith.andi %117, %111 : vector<8x128xi1>
    %cst_63 = arith.constant dense<true> : vector<8x128xi1>
    %197 = arith.xori %117, %cst_63 : vector<8x128xi1>
    %cst_64 = arith.constant dense<true> : vector<8x128xi1>
    %198 = arith.xori %111, %cst_64 : vector<8x128xi1>
    %199 = arith.andi %197, %198 : vector<8x128xi1>
    %200 = arith.select %199, %17, %192 : vector<8x128xi1>, vector<8x128xf32>
    %201 = arith.select %196, %7, %200 : vector<8x128xi1>, vector<8x128xf32>
    %202 = arith.select %199, %25, %195 : vector<8x128xi1>, vector<8x128xf32>
    %203 = arith.select %196, %15, %202 : vector<8x128xi1>, vector<8x128xf32>
    %204 = arith.select %111, %1, %201 : vector<8x128xi1>, vector<8x128xf32>
    %205 = arith.select %111, %9, %203 : vector<8x128xi1>, vector<8x128xf32>
    %206 = arith.subf %137, %27 : vector<8x128xf32>
    %207 = arith.mulf %77, %206 : vector<8x128xf32>
    %208 = arith.subf %135, %19 : vector<8x128xf32>
    %209 = arith.mulf %85, %208 : vector<8x128xf32>
    %210 = arith.subf %207, %209 : vector<8x128xf32>
    %211 = arith.subf %139, %27 : vector<8x128xf32>
    %212 = arith.mulf %77, %211 : vector<8x128xf32>
    %213 = arith.subf %138, %19 : vector<8x128xf32>
    %214 = arith.mulf %85, %213 : vector<8x128xf32>
    %215 = arith.subf %212, %214 : vector<8x128xf32>
    %216 = arith.subf %159, %27 : vector<8x128xf32>
    %217 = arith.mulf %77, %216 : vector<8x128xf32>
    %218 = arith.subf %157, %19 : vector<8x128xf32>
    %219 = arith.mulf %85, %218 : vector<8x128xf32>
    %220 = arith.subf %217, %219 : vector<8x128xf32>
    %221 = arith.subf %161, %27 : vector<8x128xf32>
    %222 = arith.mulf %77, %221 : vector<8x128xf32>
    %223 = arith.subf %160, %19 : vector<8x128xf32>
    %224 = arith.mulf %85, %223 : vector<8x128xf32>
    %225 = arith.subf %222, %224 : vector<8x128xf32>
    %226 = arith.subf %181, %27 : vector<8x128xf32>
    %227 = arith.mulf %77, %226 : vector<8x128xf32>
    %228 = arith.subf %179, %19 : vector<8x128xf32>
    %229 = arith.mulf %85, %228 : vector<8x128xf32>
    %230 = arith.subf %227, %229 : vector<8x128xf32>
    %231 = arith.subf %183, %27 : vector<8x128xf32>
    %232 = arith.mulf %77, %231 : vector<8x128xf32>
    %233 = arith.subf %182, %19 : vector<8x128xf32>
    %234 = arith.mulf %85, %233 : vector<8x128xf32>
    %235 = arith.subf %232, %234 : vector<8x128xf32>
    %236 = arith.subf %203, %27 : vector<8x128xf32>
    %237 = arith.mulf %77, %236 : vector<8x128xf32>
    %238 = arith.subf %201, %19 : vector<8x128xf32>
    %239 = arith.mulf %85, %238 : vector<8x128xf32>
    %240 = arith.subf %237, %239 : vector<8x128xf32>
    %241 = arith.subf %205, %27 : vector<8x128xf32>
    %242 = arith.mulf %77, %241 : vector<8x128xf32>
    %243 = arith.subf %204, %19 : vector<8x128xf32>
    %244 = arith.mulf %85, %243 : vector<8x128xf32>
    %245 = arith.subf %242, %244 : vector<8x128xf32>
    %cst_65 = arith.constant 0.000000e+00 : f32
    %246 = vector.broadcast %cst_65 : f32 to vector<8x128xf32>
    %247 = arith.cmpf oge, %210, %246 : vector<8x128xf32>
    %cst_66 = arith.constant 0.000000e+00 : f32
    %248 = vector.broadcast %cst_66 : f32 to vector<8x128xf32>
    %249 = arith.cmpf oge, %215, %248 : vector<8x128xf32>
    %cst_67 = arith.constant 0.000000e+00 : f32
    %250 = vector.broadcast %cst_67 : f32 to vector<8x128xf32>
    %251 = arith.cmpf oge, %220, %250 : vector<8x128xf32>
    %cst_68 = arith.constant 0.000000e+00 : f32
    %252 = vector.broadcast %cst_68 : f32 to vector<8x128xf32>
    %253 = arith.cmpf oge, %225, %252 : vector<8x128xf32>
    %cst_69 = arith.constant 0.000000e+00 : f32
    %254 = vector.broadcast %cst_69 : f32 to vector<8x128xf32>
    %255 = arith.cmpf oge, %230, %254 : vector<8x128xf32>
    %cst_70 = arith.constant 0.000000e+00 : f32
    %256 = vector.broadcast %cst_70 : f32 to vector<8x128xf32>
    %257 = arith.cmpf oge, %235, %256 : vector<8x128xf32>
    %cst_71 = arith.constant 0.000000e+00 : f32
    %258 = vector.broadcast %cst_71 : f32 to vector<8x128xf32>
    %259 = arith.cmpf oge, %240, %258 : vector<8x128xf32>
    %cst_72 = arith.constant 0.000000e+00 : f32
    %260 = vector.broadcast %cst_72 : f32 to vector<8x128xf32>
    %261 = arith.cmpf oge, %245, %260 : vector<8x128xf32>
    %262 = arith.subf %210, %215 : vector<8x128xf32>
    %cst_73 = arith.constant 0.000000e+00 : f32
    %263 = vector.broadcast %cst_73 : f32 to vector<8x128xf32>
    %264 = arith.cmpf oeq, %262, %263 : vector<8x128xf32>
    %cst_74 = arith.constant 1.000000e+00 : f32
    %265 = vector.broadcast %cst_74 : f32 to vector<8x128xf32>
    %266 = arith.select %264, %265, %262 : vector<8x128xi1>, vector<8x128xf32>
    %267 = arith.divf %210, %266 : vector<8x128xf32>
    %268 = arith.subf %138, %135 : vector<8x128xf32>
    %269 = arith.mulf %267, %268 : vector<8x128xf32>
    %270 = arith.addf %135, %269 : vector<8x128xf32>
    %271 = arith.subf %139, %137 : vector<8x128xf32>
    %272 = arith.mulf %267, %271 : vector<8x128xf32>
    %273 = arith.addf %137, %272 : vector<8x128xf32>
    %274 = arith.andi %247, %249 : vector<8x128xi1>
    %cst_75 = arith.constant dense<true> : vector<8x128xi1>
    %275 = arith.xori %247, %cst_75 : vector<8x128xi1>
    %cst_76 = arith.constant dense<true> : vector<8x128xi1>
    %276 = arith.xori %249, %cst_76 : vector<8x128xi1>
    %277 = arith.andi %275, %276 : vector<8x128xi1>
    %278 = arith.select %277, %19, %270 : vector<8x128xi1>, vector<8x128xf32>
    %279 = arith.select %274, %135, %278 : vector<8x128xi1>, vector<8x128xf32>
    %280 = arith.select %277, %27, %273 : vector<8x128xi1>, vector<8x128xf32>
    %281 = arith.select %274, %137, %280 : vector<8x128xi1>, vector<8x128xf32>
    %282 = arith.select %249, %138, %279 : vector<8x128xi1>, vector<8x128xf32>
    %283 = arith.select %249, %139, %281 : vector<8x128xi1>, vector<8x128xf32>
    %284 = arith.subf %215, %220 : vector<8x128xf32>
    %cst_77 = arith.constant 0.000000e+00 : f32
    %285 = vector.broadcast %cst_77 : f32 to vector<8x128xf32>
    %286 = arith.cmpf oeq, %284, %285 : vector<8x128xf32>
    %cst_78 = arith.constant 1.000000e+00 : f32
    %287 = vector.broadcast %cst_78 : f32 to vector<8x128xf32>
    %288 = arith.select %286, %287, %284 : vector<8x128xi1>, vector<8x128xf32>
    %289 = arith.divf %215, %288 : vector<8x128xf32>
    %290 = arith.subf %157, %138 : vector<8x128xf32>
    %291 = arith.mulf %289, %290 : vector<8x128xf32>
    %292 = arith.addf %138, %291 : vector<8x128xf32>
    %293 = arith.subf %159, %139 : vector<8x128xf32>
    %294 = arith.mulf %289, %293 : vector<8x128xf32>
    %295 = arith.addf %139, %294 : vector<8x128xf32>
    %296 = arith.andi %249, %251 : vector<8x128xi1>
    %cst_79 = arith.constant dense<true> : vector<8x128xi1>
    %297 = arith.xori %249, %cst_79 : vector<8x128xi1>
    %cst_80 = arith.constant dense<true> : vector<8x128xi1>
    %298 = arith.xori %251, %cst_80 : vector<8x128xi1>
    %299 = arith.andi %297, %298 : vector<8x128xi1>
    %300 = arith.select %299, %19, %292 : vector<8x128xi1>, vector<8x128xf32>
    %301 = arith.select %296, %138, %300 : vector<8x128xi1>, vector<8x128xf32>
    %302 = arith.select %299, %27, %295 : vector<8x128xi1>, vector<8x128xf32>
    %303 = arith.select %296, %139, %302 : vector<8x128xi1>, vector<8x128xf32>
    %304 = arith.select %251, %157, %301 : vector<8x128xi1>, vector<8x128xf32>
    %305 = arith.select %251, %159, %303 : vector<8x128xi1>, vector<8x128xf32>
    %306 = arith.subf %220, %225 : vector<8x128xf32>
    %cst_81 = arith.constant 0.000000e+00 : f32
    %307 = vector.broadcast %cst_81 : f32 to vector<8x128xf32>
    %308 = arith.cmpf oeq, %306, %307 : vector<8x128xf32>
    %cst_82 = arith.constant 1.000000e+00 : f32
    %309 = vector.broadcast %cst_82 : f32 to vector<8x128xf32>
    %310 = arith.select %308, %309, %306 : vector<8x128xi1>, vector<8x128xf32>
    %311 = arith.divf %220, %310 : vector<8x128xf32>
    %312 = arith.subf %160, %157 : vector<8x128xf32>
    %313 = arith.mulf %311, %312 : vector<8x128xf32>
    %314 = arith.addf %157, %313 : vector<8x128xf32>
    %315 = arith.subf %161, %159 : vector<8x128xf32>
    %316 = arith.mulf %311, %315 : vector<8x128xf32>
    %317 = arith.addf %159, %316 : vector<8x128xf32>
    %318 = arith.andi %251, %253 : vector<8x128xi1>
    %cst_83 = arith.constant dense<true> : vector<8x128xi1>
    %319 = arith.xori %251, %cst_83 : vector<8x128xi1>
    %cst_84 = arith.constant dense<true> : vector<8x128xi1>
    %320 = arith.xori %253, %cst_84 : vector<8x128xi1>
    %321 = arith.andi %319, %320 : vector<8x128xi1>
    %322 = arith.select %321, %19, %314 : vector<8x128xi1>, vector<8x128xf32>
    %323 = arith.select %318, %157, %322 : vector<8x128xi1>, vector<8x128xf32>
    %324 = arith.select %321, %27, %317 : vector<8x128xi1>, vector<8x128xf32>
    %325 = arith.select %318, %159, %324 : vector<8x128xi1>, vector<8x128xf32>
    %326 = arith.select %253, %160, %323 : vector<8x128xi1>, vector<8x128xf32>
    %327 = arith.select %253, %161, %325 : vector<8x128xi1>, vector<8x128xf32>
    %328 = arith.subf %225, %230 : vector<8x128xf32>
    %cst_85 = arith.constant 0.000000e+00 : f32
    %329 = vector.broadcast %cst_85 : f32 to vector<8x128xf32>
    %330 = arith.cmpf oeq, %328, %329 : vector<8x128xf32>
    %cst_86 = arith.constant 1.000000e+00 : f32
    %331 = vector.broadcast %cst_86 : f32 to vector<8x128xf32>
    %332 = arith.select %330, %331, %328 : vector<8x128xi1>, vector<8x128xf32>
    %333 = arith.divf %225, %332 : vector<8x128xf32>
    %334 = arith.subf %179, %160 : vector<8x128xf32>
    %335 = arith.mulf %333, %334 : vector<8x128xf32>
    %336 = arith.addf %160, %335 : vector<8x128xf32>
    %337 = arith.subf %181, %161 : vector<8x128xf32>
    %338 = arith.mulf %333, %337 : vector<8x128xf32>
    %339 = arith.addf %161, %338 : vector<8x128xf32>
    %340 = arith.andi %253, %255 : vector<8x128xi1>
    %cst_87 = arith.constant dense<true> : vector<8x128xi1>
    %341 = arith.xori %253, %cst_87 : vector<8x128xi1>
    %cst_88 = arith.constant dense<true> : vector<8x128xi1>
    %342 = arith.xori %255, %cst_88 : vector<8x128xi1>
    %343 = arith.andi %341, %342 : vector<8x128xi1>
    %344 = arith.select %343, %19, %336 : vector<8x128xi1>, vector<8x128xf32>
    %345 = arith.select %340, %160, %344 : vector<8x128xi1>, vector<8x128xf32>
    %346 = arith.select %343, %27, %339 : vector<8x128xi1>, vector<8x128xf32>
    %347 = arith.select %340, %161, %346 : vector<8x128xi1>, vector<8x128xf32>
    %348 = arith.select %255, %179, %345 : vector<8x128xi1>, vector<8x128xf32>
    %349 = arith.select %255, %181, %347 : vector<8x128xi1>, vector<8x128xf32>
    %350 = arith.subf %230, %235 : vector<8x128xf32>
    %cst_89 = arith.constant 0.000000e+00 : f32
    %351 = vector.broadcast %cst_89 : f32 to vector<8x128xf32>
    %352 = arith.cmpf oeq, %350, %351 : vector<8x128xf32>
    %cst_90 = arith.constant 1.000000e+00 : f32
    %353 = vector.broadcast %cst_90 : f32 to vector<8x128xf32>
    %354 = arith.select %352, %353, %350 : vector<8x128xi1>, vector<8x128xf32>
    %355 = arith.divf %230, %354 : vector<8x128xf32>
    %356 = arith.subf %182, %179 : vector<8x128xf32>
    %357 = arith.mulf %355, %356 : vector<8x128xf32>
    %358 = arith.addf %179, %357 : vector<8x128xf32>
    %359 = arith.subf %183, %181 : vector<8x128xf32>
    %360 = arith.mulf %355, %359 : vector<8x128xf32>
    %361 = arith.addf %181, %360 : vector<8x128xf32>
    %362 = arith.andi %255, %257 : vector<8x128xi1>
    %cst_91 = arith.constant dense<true> : vector<8x128xi1>
    %363 = arith.xori %255, %cst_91 : vector<8x128xi1>
    %cst_92 = arith.constant dense<true> : vector<8x128xi1>
    %364 = arith.xori %257, %cst_92 : vector<8x128xi1>
    %365 = arith.andi %363, %364 : vector<8x128xi1>
    %366 = arith.select %365, %19, %358 : vector<8x128xi1>, vector<8x128xf32>
    %367 = arith.select %362, %179, %366 : vector<8x128xi1>, vector<8x128xf32>
    %368 = arith.select %365, %27, %361 : vector<8x128xi1>, vector<8x128xf32>
    %369 = arith.select %362, %181, %368 : vector<8x128xi1>, vector<8x128xf32>
    %370 = arith.select %257, %182, %367 : vector<8x128xi1>, vector<8x128xf32>
    %371 = arith.select %257, %183, %369 : vector<8x128xi1>, vector<8x128xf32>
    %372 = arith.subf %235, %240 : vector<8x128xf32>
    %cst_93 = arith.constant 0.000000e+00 : f32
    %373 = vector.broadcast %cst_93 : f32 to vector<8x128xf32>
    %374 = arith.cmpf oeq, %372, %373 : vector<8x128xf32>
    %cst_94 = arith.constant 1.000000e+00 : f32
    %375 = vector.broadcast %cst_94 : f32 to vector<8x128xf32>
    %376 = arith.select %374, %375, %372 : vector<8x128xi1>, vector<8x128xf32>
    %377 = arith.divf %235, %376 : vector<8x128xf32>
    %378 = arith.subf %201, %182 : vector<8x128xf32>
    %379 = arith.mulf %377, %378 : vector<8x128xf32>
    %380 = arith.addf %182, %379 : vector<8x128xf32>
    %381 = arith.subf %203, %183 : vector<8x128xf32>
    %382 = arith.mulf %377, %381 : vector<8x128xf32>
    %383 = arith.addf %183, %382 : vector<8x128xf32>
    %384 = arith.andi %257, %259 : vector<8x128xi1>
    %cst_95 = arith.constant dense<true> : vector<8x128xi1>
    %385 = arith.xori %257, %cst_95 : vector<8x128xi1>
    %cst_96 = arith.constant dense<true> : vector<8x128xi1>
    %386 = arith.xori %259, %cst_96 : vector<8x128xi1>
    %387 = arith.andi %385, %386 : vector<8x128xi1>
    %388 = arith.select %387, %19, %380 : vector<8x128xi1>, vector<8x128xf32>
    %389 = arith.select %384, %182, %388 : vector<8x128xi1>, vector<8x128xf32>
    %390 = arith.select %387, %27, %383 : vector<8x128xi1>, vector<8x128xf32>
    %391 = arith.select %384, %183, %390 : vector<8x128xi1>, vector<8x128xf32>
    %392 = arith.select %259, %201, %389 : vector<8x128xi1>, vector<8x128xf32>
    %393 = arith.select %259, %203, %391 : vector<8x128xi1>, vector<8x128xf32>
    %394 = arith.subf %240, %245 : vector<8x128xf32>
    %cst_97 = arith.constant 0.000000e+00 : f32
    %395 = vector.broadcast %cst_97 : f32 to vector<8x128xf32>
    %396 = arith.cmpf oeq, %394, %395 : vector<8x128xf32>
    %cst_98 = arith.constant 1.000000e+00 : f32
    %397 = vector.broadcast %cst_98 : f32 to vector<8x128xf32>
    %398 = arith.select %396, %397, %394 : vector<8x128xi1>, vector<8x128xf32>
    %399 = arith.divf %240, %398 : vector<8x128xf32>
    %400 = arith.subf %204, %201 : vector<8x128xf32>
    %401 = arith.mulf %399, %400 : vector<8x128xf32>
    %402 = arith.addf %201, %401 : vector<8x128xf32>
    %403 = arith.subf %205, %203 : vector<8x128xf32>
    %404 = arith.mulf %399, %403 : vector<8x128xf32>
    %405 = arith.addf %203, %404 : vector<8x128xf32>
    %406 = arith.andi %259, %261 : vector<8x128xi1>
    %cst_99 = arith.constant dense<true> : vector<8x128xi1>
    %407 = arith.xori %259, %cst_99 : vector<8x128xi1>
    %cst_100 = arith.constant dense<true> : vector<8x128xi1>
    %408 = arith.xori %261, %cst_100 : vector<8x128xi1>
    %409 = arith.andi %407, %408 : vector<8x128xi1>
    %410 = arith.select %409, %19, %402 : vector<8x128xi1>, vector<8x128xf32>
    %411 = arith.select %406, %201, %410 : vector<8x128xi1>, vector<8x128xf32>
    %412 = arith.select %409, %27, %405 : vector<8x128xi1>, vector<8x128xf32>
    %413 = arith.select %406, %203, %412 : vector<8x128xi1>, vector<8x128xf32>
    %414 = arith.select %261, %204, %411 : vector<8x128xi1>, vector<8x128xf32>
    %415 = arith.select %261, %205, %413 : vector<8x128xi1>, vector<8x128xf32>
    %416 = arith.subf %245, %210 : vector<8x128xf32>
    %cst_101 = arith.constant 0.000000e+00 : f32
    %417 = vector.broadcast %cst_101 : f32 to vector<8x128xf32>
    %418 = arith.cmpf oeq, %416, %417 : vector<8x128xf32>
    %cst_102 = arith.constant 1.000000e+00 : f32
    %419 = vector.broadcast %cst_102 : f32 to vector<8x128xf32>
    %420 = arith.select %418, %419, %416 : vector<8x128xi1>, vector<8x128xf32>
    %421 = arith.divf %245, %420 : vector<8x128xf32>
    %422 = arith.subf %135, %204 : vector<8x128xf32>
    %423 = arith.mulf %421, %422 : vector<8x128xf32>
    %424 = arith.addf %204, %423 : vector<8x128xf32>
    %425 = arith.subf %137, %205 : vector<8x128xf32>
    %426 = arith.mulf %421, %425 : vector<8x128xf32>
    %427 = arith.addf %205, %426 : vector<8x128xf32>
    %428 = arith.andi %261, %247 : vector<8x128xi1>
    %cst_103 = arith.constant dense<true> : vector<8x128xi1>
    %429 = arith.xori %261, %cst_103 : vector<8x128xi1>
    %cst_104 = arith.constant dense<true> : vector<8x128xi1>
    %430 = arith.xori %247, %cst_104 : vector<8x128xi1>
    %431 = arith.andi %429, %430 : vector<8x128xi1>
    %432 = arith.select %431, %19, %424 : vector<8x128xi1>, vector<8x128xf32>
    %433 = arith.select %428, %204, %432 : vector<8x128xi1>, vector<8x128xf32>
    %434 = arith.select %431, %27, %427 : vector<8x128xi1>, vector<8x128xf32>
    %435 = arith.select %428, %205, %434 : vector<8x128xi1>, vector<8x128xf32>
    %436 = arith.select %247, %135, %433 : vector<8x128xi1>, vector<8x128xf32>
    %437 = arith.select %247, %137, %435 : vector<8x128xi1>, vector<8x128xf32>
    %438 = arith.subf %281, %29 : vector<8x128xf32>
    %439 = arith.mulf %79, %438 : vector<8x128xf32>
    %440 = arith.subf %279, %21 : vector<8x128xf32>
    %441 = arith.mulf %87, %440 : vector<8x128xf32>
    %442 = arith.subf %439, %441 : vector<8x128xf32>
    %443 = arith.subf %283, %29 : vector<8x128xf32>
    %444 = arith.mulf %79, %443 : vector<8x128xf32>
    %445 = arith.subf %282, %21 : vector<8x128xf32>
    %446 = arith.mulf %87, %445 : vector<8x128xf32>
    %447 = arith.subf %444, %446 : vector<8x128xf32>
    %448 = arith.subf %303, %29 : vector<8x128xf32>
    %449 = arith.mulf %79, %448 : vector<8x128xf32>
    %450 = arith.subf %301, %21 : vector<8x128xf32>
    %451 = arith.mulf %87, %450 : vector<8x128xf32>
    %452 = arith.subf %449, %451 : vector<8x128xf32>
    %453 = arith.subf %305, %29 : vector<8x128xf32>
    %454 = arith.mulf %79, %453 : vector<8x128xf32>
    %455 = arith.subf %304, %21 : vector<8x128xf32>
    %456 = arith.mulf %87, %455 : vector<8x128xf32>
    %457 = arith.subf %454, %456 : vector<8x128xf32>
    %458 = arith.subf %325, %29 : vector<8x128xf32>
    %459 = arith.mulf %79, %458 : vector<8x128xf32>
    %460 = arith.subf %323, %21 : vector<8x128xf32>
    %461 = arith.mulf %87, %460 : vector<8x128xf32>
    %462 = arith.subf %459, %461 : vector<8x128xf32>
    %463 = arith.subf %327, %29 : vector<8x128xf32>
    %464 = arith.mulf %79, %463 : vector<8x128xf32>
    %465 = arith.subf %326, %21 : vector<8x128xf32>
    %466 = arith.mulf %87, %465 : vector<8x128xf32>
    %467 = arith.subf %464, %466 : vector<8x128xf32>
    %468 = arith.subf %347, %29 : vector<8x128xf32>
    %469 = arith.mulf %79, %468 : vector<8x128xf32>
    %470 = arith.subf %345, %21 : vector<8x128xf32>
    %471 = arith.mulf %87, %470 : vector<8x128xf32>
    %472 = arith.subf %469, %471 : vector<8x128xf32>
    %473 = arith.subf %349, %29 : vector<8x128xf32>
    %474 = arith.mulf %79, %473 : vector<8x128xf32>
    %475 = arith.subf %348, %21 : vector<8x128xf32>
    %476 = arith.mulf %87, %475 : vector<8x128xf32>
    %477 = arith.subf %474, %476 : vector<8x128xf32>
    %478 = arith.subf %369, %29 : vector<8x128xf32>
    %479 = arith.mulf %79, %478 : vector<8x128xf32>
    %480 = arith.subf %367, %21 : vector<8x128xf32>
    %481 = arith.mulf %87, %480 : vector<8x128xf32>
    %482 = arith.subf %479, %481 : vector<8x128xf32>
    %483 = arith.subf %371, %29 : vector<8x128xf32>
    %484 = arith.mulf %79, %483 : vector<8x128xf32>
    %485 = arith.subf %370, %21 : vector<8x128xf32>
    %486 = arith.mulf %87, %485 : vector<8x128xf32>
    %487 = arith.subf %484, %486 : vector<8x128xf32>
    %488 = arith.subf %391, %29 : vector<8x128xf32>
    %489 = arith.mulf %79, %488 : vector<8x128xf32>
    %490 = arith.subf %389, %21 : vector<8x128xf32>
    %491 = arith.mulf %87, %490 : vector<8x128xf32>
    %492 = arith.subf %489, %491 : vector<8x128xf32>
    %493 = arith.subf %393, %29 : vector<8x128xf32>
    %494 = arith.mulf %79, %493 : vector<8x128xf32>
    %495 = arith.subf %392, %21 : vector<8x128xf32>
    %496 = arith.mulf %87, %495 : vector<8x128xf32>
    %497 = arith.subf %494, %496 : vector<8x128xf32>
    %498 = arith.subf %413, %29 : vector<8x128xf32>
    %499 = arith.mulf %79, %498 : vector<8x128xf32>
    %500 = arith.subf %411, %21 : vector<8x128xf32>
    %501 = arith.mulf %87, %500 : vector<8x128xf32>
    %502 = arith.subf %499, %501 : vector<8x128xf32>
    %503 = arith.subf %415, %29 : vector<8x128xf32>
    %504 = arith.mulf %79, %503 : vector<8x128xf32>
    %505 = arith.subf %414, %21 : vector<8x128xf32>
    %506 = arith.mulf %87, %505 : vector<8x128xf32>
    %507 = arith.subf %504, %506 : vector<8x128xf32>
    %508 = arith.subf %435, %29 : vector<8x128xf32>
    %509 = arith.mulf %79, %508 : vector<8x128xf32>
    %510 = arith.subf %433, %21 : vector<8x128xf32>
    %511 = arith.mulf %87, %510 : vector<8x128xf32>
    %512 = arith.subf %509, %511 : vector<8x128xf32>
    %513 = arith.subf %437, %29 : vector<8x128xf32>
    %514 = arith.mulf %79, %513 : vector<8x128xf32>
    %515 = arith.subf %436, %21 : vector<8x128xf32>
    %516 = arith.mulf %87, %515 : vector<8x128xf32>
    %517 = arith.subf %514, %516 : vector<8x128xf32>
    %cst_105 = arith.constant 0.000000e+00 : f32
    %518 = vector.broadcast %cst_105 : f32 to vector<8x128xf32>
    %519 = arith.cmpf oge, %442, %518 : vector<8x128xf32>
    %cst_106 = arith.constant 0.000000e+00 : f32
    %520 = vector.broadcast %cst_106 : f32 to vector<8x128xf32>
    %521 = arith.cmpf oge, %447, %520 : vector<8x128xf32>
    %cst_107 = arith.constant 0.000000e+00 : f32
    %522 = vector.broadcast %cst_107 : f32 to vector<8x128xf32>
    %523 = arith.cmpf oge, %452, %522 : vector<8x128xf32>
    %cst_108 = arith.constant 0.000000e+00 : f32
    %524 = vector.broadcast %cst_108 : f32 to vector<8x128xf32>
    %525 = arith.cmpf oge, %457, %524 : vector<8x128xf32>
    %cst_109 = arith.constant 0.000000e+00 : f32
    %526 = vector.broadcast %cst_109 : f32 to vector<8x128xf32>
    %527 = arith.cmpf oge, %462, %526 : vector<8x128xf32>
    %cst_110 = arith.constant 0.000000e+00 : f32
    %528 = vector.broadcast %cst_110 : f32 to vector<8x128xf32>
    %529 = arith.cmpf oge, %467, %528 : vector<8x128xf32>
    %cst_111 = arith.constant 0.000000e+00 : f32
    %530 = vector.broadcast %cst_111 : f32 to vector<8x128xf32>
    %531 = arith.cmpf oge, %472, %530 : vector<8x128xf32>
    %cst_112 = arith.constant 0.000000e+00 : f32
    %532 = vector.broadcast %cst_112 : f32 to vector<8x128xf32>
    %533 = arith.cmpf oge, %477, %532 : vector<8x128xf32>
    %cst_113 = arith.constant 0.000000e+00 : f32
    %534 = vector.broadcast %cst_113 : f32 to vector<8x128xf32>
    %535 = arith.cmpf oge, %482, %534 : vector<8x128xf32>
    %cst_114 = arith.constant 0.000000e+00 : f32
    %536 = vector.broadcast %cst_114 : f32 to vector<8x128xf32>
    %537 = arith.cmpf oge, %487, %536 : vector<8x128xf32>
    %cst_115 = arith.constant 0.000000e+00 : f32
    %538 = vector.broadcast %cst_115 : f32 to vector<8x128xf32>
    %539 = arith.cmpf oge, %492, %538 : vector<8x128xf32>
    %cst_116 = arith.constant 0.000000e+00 : f32
    %540 = vector.broadcast %cst_116 : f32 to vector<8x128xf32>
    %541 = arith.cmpf oge, %497, %540 : vector<8x128xf32>
    %cst_117 = arith.constant 0.000000e+00 : f32
    %542 = vector.broadcast %cst_117 : f32 to vector<8x128xf32>
    %543 = arith.cmpf oge, %502, %542 : vector<8x128xf32>
    %cst_118 = arith.constant 0.000000e+00 : f32
    %544 = vector.broadcast %cst_118 : f32 to vector<8x128xf32>
    %545 = arith.cmpf oge, %507, %544 : vector<8x128xf32>
    %cst_119 = arith.constant 0.000000e+00 : f32
    %546 = vector.broadcast %cst_119 : f32 to vector<8x128xf32>
    %547 = arith.cmpf oge, %512, %546 : vector<8x128xf32>
    %cst_120 = arith.constant 0.000000e+00 : f32
    %548 = vector.broadcast %cst_120 : f32 to vector<8x128xf32>
    %549 = arith.cmpf oge, %517, %548 : vector<8x128xf32>
    %550 = arith.subf %442, %447 : vector<8x128xf32>
    %cst_121 = arith.constant 0.000000e+00 : f32
    %551 = vector.broadcast %cst_121 : f32 to vector<8x128xf32>
    %552 = arith.cmpf oeq, %550, %551 : vector<8x128xf32>
    %cst_122 = arith.constant 1.000000e+00 : f32
    %553 = vector.broadcast %cst_122 : f32 to vector<8x128xf32>
    %554 = arith.select %552, %553, %550 : vector<8x128xi1>, vector<8x128xf32>
    %555 = arith.divf %442, %554 : vector<8x128xf32>
    %556 = arith.subf %282, %279 : vector<8x128xf32>
    %557 = arith.mulf %555, %556 : vector<8x128xf32>
    %558 = arith.addf %279, %557 : vector<8x128xf32>
    %559 = arith.subf %283, %281 : vector<8x128xf32>
    %560 = arith.mulf %555, %559 : vector<8x128xf32>
    %561 = arith.addf %281, %560 : vector<8x128xf32>
    %562 = arith.andi %519, %521 : vector<8x128xi1>
    %cst_123 = arith.constant dense<true> : vector<8x128xi1>
    %563 = arith.xori %519, %cst_123 : vector<8x128xi1>
    %cst_124 = arith.constant dense<true> : vector<8x128xi1>
    %564 = arith.xori %521, %cst_124 : vector<8x128xi1>
    %565 = arith.andi %563, %564 : vector<8x128xi1>
    %566 = arith.select %565, %21, %558 : vector<8x128xi1>, vector<8x128xf32>
    %567 = arith.select %562, %279, %566 : vector<8x128xi1>, vector<8x128xf32>
    %568 = arith.select %565, %29, %561 : vector<8x128xi1>, vector<8x128xf32>
    %569 = arith.select %562, %281, %568 : vector<8x128xi1>, vector<8x128xf32>
    %570 = arith.select %521, %282, %567 : vector<8x128xi1>, vector<8x128xf32>
    %571 = arith.select %521, %283, %569 : vector<8x128xi1>, vector<8x128xf32>
    %572 = arith.subf %447, %452 : vector<8x128xf32>
    %cst_125 = arith.constant 0.000000e+00 : f32
    %573 = vector.broadcast %cst_125 : f32 to vector<8x128xf32>
    %574 = arith.cmpf oeq, %572, %573 : vector<8x128xf32>
    %cst_126 = arith.constant 1.000000e+00 : f32
    %575 = vector.broadcast %cst_126 : f32 to vector<8x128xf32>
    %576 = arith.select %574, %575, %572 : vector<8x128xi1>, vector<8x128xf32>
    %577 = arith.divf %447, %576 : vector<8x128xf32>
    %578 = arith.subf %301, %282 : vector<8x128xf32>
    %579 = arith.mulf %577, %578 : vector<8x128xf32>
    %580 = arith.addf %282, %579 : vector<8x128xf32>
    %581 = arith.subf %303, %283 : vector<8x128xf32>
    %582 = arith.mulf %577, %581 : vector<8x128xf32>
    %583 = arith.addf %283, %582 : vector<8x128xf32>
    %584 = arith.andi %521, %523 : vector<8x128xi1>
    %cst_127 = arith.constant dense<true> : vector<8x128xi1>
    %585 = arith.xori %521, %cst_127 : vector<8x128xi1>
    %cst_128 = arith.constant dense<true> : vector<8x128xi1>
    %586 = arith.xori %523, %cst_128 : vector<8x128xi1>
    %587 = arith.andi %585, %586 : vector<8x128xi1>
    %588 = arith.select %587, %21, %580 : vector<8x128xi1>, vector<8x128xf32>
    %589 = arith.select %584, %282, %588 : vector<8x128xi1>, vector<8x128xf32>
    %590 = arith.select %587, %29, %583 : vector<8x128xi1>, vector<8x128xf32>
    %591 = arith.select %584, %283, %590 : vector<8x128xi1>, vector<8x128xf32>
    %592 = arith.select %523, %301, %589 : vector<8x128xi1>, vector<8x128xf32>
    %593 = arith.select %523, %303, %591 : vector<8x128xi1>, vector<8x128xf32>
    %594 = arith.subf %452, %457 : vector<8x128xf32>
    %cst_129 = arith.constant 0.000000e+00 : f32
    %595 = vector.broadcast %cst_129 : f32 to vector<8x128xf32>
    %596 = arith.cmpf oeq, %594, %595 : vector<8x128xf32>
    %cst_130 = arith.constant 1.000000e+00 : f32
    %597 = vector.broadcast %cst_130 : f32 to vector<8x128xf32>
    %598 = arith.select %596, %597, %594 : vector<8x128xi1>, vector<8x128xf32>
    %599 = arith.divf %452, %598 : vector<8x128xf32>
    %600 = arith.subf %304, %301 : vector<8x128xf32>
    %601 = arith.mulf %599, %600 : vector<8x128xf32>
    %602 = arith.addf %301, %601 : vector<8x128xf32>
    %603 = arith.subf %305, %303 : vector<8x128xf32>
    %604 = arith.mulf %599, %603 : vector<8x128xf32>
    %605 = arith.addf %303, %604 : vector<8x128xf32>
    %606 = arith.andi %523, %525 : vector<8x128xi1>
    %cst_131 = arith.constant dense<true> : vector<8x128xi1>
    %607 = arith.xori %523, %cst_131 : vector<8x128xi1>
    %cst_132 = arith.constant dense<true> : vector<8x128xi1>
    %608 = arith.xori %525, %cst_132 : vector<8x128xi1>
    %609 = arith.andi %607, %608 : vector<8x128xi1>
    %610 = arith.select %609, %21, %602 : vector<8x128xi1>, vector<8x128xf32>
    %611 = arith.select %606, %301, %610 : vector<8x128xi1>, vector<8x128xf32>
    %612 = arith.select %609, %29, %605 : vector<8x128xi1>, vector<8x128xf32>
    %613 = arith.select %606, %303, %612 : vector<8x128xi1>, vector<8x128xf32>
    %614 = arith.select %525, %304, %611 : vector<8x128xi1>, vector<8x128xf32>
    %615 = arith.select %525, %305, %613 : vector<8x128xi1>, vector<8x128xf32>
    %616 = arith.subf %457, %462 : vector<8x128xf32>
    %cst_133 = arith.constant 0.000000e+00 : f32
    %617 = vector.broadcast %cst_133 : f32 to vector<8x128xf32>
    %618 = arith.cmpf oeq, %616, %617 : vector<8x128xf32>
    %cst_134 = arith.constant 1.000000e+00 : f32
    %619 = vector.broadcast %cst_134 : f32 to vector<8x128xf32>
    %620 = arith.select %618, %619, %616 : vector<8x128xi1>, vector<8x128xf32>
    %621 = arith.divf %457, %620 : vector<8x128xf32>
    %622 = arith.subf %323, %304 : vector<8x128xf32>
    %623 = arith.mulf %621, %622 : vector<8x128xf32>
    %624 = arith.addf %304, %623 : vector<8x128xf32>
    %625 = arith.subf %325, %305 : vector<8x128xf32>
    %626 = arith.mulf %621, %625 : vector<8x128xf32>
    %627 = arith.addf %305, %626 : vector<8x128xf32>
    %628 = arith.andi %525, %527 : vector<8x128xi1>
    %cst_135 = arith.constant dense<true> : vector<8x128xi1>
    %629 = arith.xori %525, %cst_135 : vector<8x128xi1>
    %cst_136 = arith.constant dense<true> : vector<8x128xi1>
    %630 = arith.xori %527, %cst_136 : vector<8x128xi1>
    %631 = arith.andi %629, %630 : vector<8x128xi1>
    %632 = arith.select %631, %21, %624 : vector<8x128xi1>, vector<8x128xf32>
    %633 = arith.select %628, %304, %632 : vector<8x128xi1>, vector<8x128xf32>
    %634 = arith.select %631, %29, %627 : vector<8x128xi1>, vector<8x128xf32>
    %635 = arith.select %628, %305, %634 : vector<8x128xi1>, vector<8x128xf32>
    %636 = arith.select %527, %323, %633 : vector<8x128xi1>, vector<8x128xf32>
    %637 = arith.select %527, %325, %635 : vector<8x128xi1>, vector<8x128xf32>
    %638 = arith.subf %462, %467 : vector<8x128xf32>
    %cst_137 = arith.constant 0.000000e+00 : f32
    %639 = vector.broadcast %cst_137 : f32 to vector<8x128xf32>
    %640 = arith.cmpf oeq, %638, %639 : vector<8x128xf32>
    %cst_138 = arith.constant 1.000000e+00 : f32
    %641 = vector.broadcast %cst_138 : f32 to vector<8x128xf32>
    %642 = arith.select %640, %641, %638 : vector<8x128xi1>, vector<8x128xf32>
    %643 = arith.divf %462, %642 : vector<8x128xf32>
    %644 = arith.subf %326, %323 : vector<8x128xf32>
    %645 = arith.mulf %643, %644 : vector<8x128xf32>
    %646 = arith.addf %323, %645 : vector<8x128xf32>
    %647 = arith.subf %327, %325 : vector<8x128xf32>
    %648 = arith.mulf %643, %647 : vector<8x128xf32>
    %649 = arith.addf %325, %648 : vector<8x128xf32>
    %650 = arith.andi %527, %529 : vector<8x128xi1>
    %cst_139 = arith.constant dense<true> : vector<8x128xi1>
    %651 = arith.xori %527, %cst_139 : vector<8x128xi1>
    %cst_140 = arith.constant dense<true> : vector<8x128xi1>
    %652 = arith.xori %529, %cst_140 : vector<8x128xi1>
    %653 = arith.andi %651, %652 : vector<8x128xi1>
    %654 = arith.select %653, %21, %646 : vector<8x128xi1>, vector<8x128xf32>
    %655 = arith.select %650, %323, %654 : vector<8x128xi1>, vector<8x128xf32>
    %656 = arith.select %653, %29, %649 : vector<8x128xi1>, vector<8x128xf32>
    %657 = arith.select %650, %325, %656 : vector<8x128xi1>, vector<8x128xf32>
    %658 = arith.select %529, %326, %655 : vector<8x128xi1>, vector<8x128xf32>
    %659 = arith.select %529, %327, %657 : vector<8x128xi1>, vector<8x128xf32>
    %660 = arith.subf %467, %472 : vector<8x128xf32>
    %cst_141 = arith.constant 0.000000e+00 : f32
    %661 = vector.broadcast %cst_141 : f32 to vector<8x128xf32>
    %662 = arith.cmpf oeq, %660, %661 : vector<8x128xf32>
    %cst_142 = arith.constant 1.000000e+00 : f32
    %663 = vector.broadcast %cst_142 : f32 to vector<8x128xf32>
    %664 = arith.select %662, %663, %660 : vector<8x128xi1>, vector<8x128xf32>
    %665 = arith.divf %467, %664 : vector<8x128xf32>
    %666 = arith.subf %345, %326 : vector<8x128xf32>
    %667 = arith.mulf %665, %666 : vector<8x128xf32>
    %668 = arith.addf %326, %667 : vector<8x128xf32>
    %669 = arith.subf %347, %327 : vector<8x128xf32>
    %670 = arith.mulf %665, %669 : vector<8x128xf32>
    %671 = arith.addf %327, %670 : vector<8x128xf32>
    %672 = arith.andi %529, %531 : vector<8x128xi1>
    %cst_143 = arith.constant dense<true> : vector<8x128xi1>
    %673 = arith.xori %529, %cst_143 : vector<8x128xi1>
    %cst_144 = arith.constant dense<true> : vector<8x128xi1>
    %674 = arith.xori %531, %cst_144 : vector<8x128xi1>
    %675 = arith.andi %673, %674 : vector<8x128xi1>
    %676 = arith.select %675, %21, %668 : vector<8x128xi1>, vector<8x128xf32>
    %677 = arith.select %672, %326, %676 : vector<8x128xi1>, vector<8x128xf32>
    %678 = arith.select %675, %29, %671 : vector<8x128xi1>, vector<8x128xf32>
    %679 = arith.select %672, %327, %678 : vector<8x128xi1>, vector<8x128xf32>
    %680 = arith.select %531, %345, %677 : vector<8x128xi1>, vector<8x128xf32>
    %681 = arith.select %531, %347, %679 : vector<8x128xi1>, vector<8x128xf32>
    %682 = arith.subf %472, %477 : vector<8x128xf32>
    %cst_145 = arith.constant 0.000000e+00 : f32
    %683 = vector.broadcast %cst_145 : f32 to vector<8x128xf32>
    %684 = arith.cmpf oeq, %682, %683 : vector<8x128xf32>
    %cst_146 = arith.constant 1.000000e+00 : f32
    %685 = vector.broadcast %cst_146 : f32 to vector<8x128xf32>
    %686 = arith.select %684, %685, %682 : vector<8x128xi1>, vector<8x128xf32>
    %687 = arith.divf %472, %686 : vector<8x128xf32>
    %688 = arith.subf %348, %345 : vector<8x128xf32>
    %689 = arith.mulf %687, %688 : vector<8x128xf32>
    %690 = arith.addf %345, %689 : vector<8x128xf32>
    %691 = arith.subf %349, %347 : vector<8x128xf32>
    %692 = arith.mulf %687, %691 : vector<8x128xf32>
    %693 = arith.addf %347, %692 : vector<8x128xf32>
    %694 = arith.andi %531, %533 : vector<8x128xi1>
    %cst_147 = arith.constant dense<true> : vector<8x128xi1>
    %695 = arith.xori %531, %cst_147 : vector<8x128xi1>
    %cst_148 = arith.constant dense<true> : vector<8x128xi1>
    %696 = arith.xori %533, %cst_148 : vector<8x128xi1>
    %697 = arith.andi %695, %696 : vector<8x128xi1>
    %698 = arith.select %697, %21, %690 : vector<8x128xi1>, vector<8x128xf32>
    %699 = arith.select %694, %345, %698 : vector<8x128xi1>, vector<8x128xf32>
    %700 = arith.select %697, %29, %693 : vector<8x128xi1>, vector<8x128xf32>
    %701 = arith.select %694, %347, %700 : vector<8x128xi1>, vector<8x128xf32>
    %702 = arith.select %533, %348, %699 : vector<8x128xi1>, vector<8x128xf32>
    %703 = arith.select %533, %349, %701 : vector<8x128xi1>, vector<8x128xf32>
    %704 = arith.subf %477, %482 : vector<8x128xf32>
    %cst_149 = arith.constant 0.000000e+00 : f32
    %705 = vector.broadcast %cst_149 : f32 to vector<8x128xf32>
    %706 = arith.cmpf oeq, %704, %705 : vector<8x128xf32>
    %cst_150 = arith.constant 1.000000e+00 : f32
    %707 = vector.broadcast %cst_150 : f32 to vector<8x128xf32>
    %708 = arith.select %706, %707, %704 : vector<8x128xi1>, vector<8x128xf32>
    %709 = arith.divf %477, %708 : vector<8x128xf32>
    %710 = arith.subf %367, %348 : vector<8x128xf32>
    %711 = arith.mulf %709, %710 : vector<8x128xf32>
    %712 = arith.addf %348, %711 : vector<8x128xf32>
    %713 = arith.subf %369, %349 : vector<8x128xf32>
    %714 = arith.mulf %709, %713 : vector<8x128xf32>
    %715 = arith.addf %349, %714 : vector<8x128xf32>
    %716 = arith.andi %533, %535 : vector<8x128xi1>
    %cst_151 = arith.constant dense<true> : vector<8x128xi1>
    %717 = arith.xori %533, %cst_151 : vector<8x128xi1>
    %cst_152 = arith.constant dense<true> : vector<8x128xi1>
    %718 = arith.xori %535, %cst_152 : vector<8x128xi1>
    %719 = arith.andi %717, %718 : vector<8x128xi1>
    %720 = arith.select %719, %21, %712 : vector<8x128xi1>, vector<8x128xf32>
    %721 = arith.select %716, %348, %720 : vector<8x128xi1>, vector<8x128xf32>
    %722 = arith.select %719, %29, %715 : vector<8x128xi1>, vector<8x128xf32>
    %723 = arith.select %716, %349, %722 : vector<8x128xi1>, vector<8x128xf32>
    %724 = arith.select %535, %367, %721 : vector<8x128xi1>, vector<8x128xf32>
    %725 = arith.select %535, %369, %723 : vector<8x128xi1>, vector<8x128xf32>
    %726 = arith.subf %482, %487 : vector<8x128xf32>
    %cst_153 = arith.constant 0.000000e+00 : f32
    %727 = vector.broadcast %cst_153 : f32 to vector<8x128xf32>
    %728 = arith.cmpf oeq, %726, %727 : vector<8x128xf32>
    %cst_154 = arith.constant 1.000000e+00 : f32
    %729 = vector.broadcast %cst_154 : f32 to vector<8x128xf32>
    %730 = arith.select %728, %729, %726 : vector<8x128xi1>, vector<8x128xf32>
    %731 = arith.divf %482, %730 : vector<8x128xf32>
    %732 = arith.subf %370, %367 : vector<8x128xf32>
    %733 = arith.mulf %731, %732 : vector<8x128xf32>
    %734 = arith.addf %367, %733 : vector<8x128xf32>
    %735 = arith.subf %371, %369 : vector<8x128xf32>
    %736 = arith.mulf %731, %735 : vector<8x128xf32>
    %737 = arith.addf %369, %736 : vector<8x128xf32>
    %738 = arith.andi %535, %537 : vector<8x128xi1>
    %cst_155 = arith.constant dense<true> : vector<8x128xi1>
    %739 = arith.xori %535, %cst_155 : vector<8x128xi1>
    %cst_156 = arith.constant dense<true> : vector<8x128xi1>
    %740 = arith.xori %537, %cst_156 : vector<8x128xi1>
    %741 = arith.andi %739, %740 : vector<8x128xi1>
    %742 = arith.select %741, %21, %734 : vector<8x128xi1>, vector<8x128xf32>
    %743 = arith.select %738, %367, %742 : vector<8x128xi1>, vector<8x128xf32>
    %744 = arith.select %741, %29, %737 : vector<8x128xi1>, vector<8x128xf32>
    %745 = arith.select %738, %369, %744 : vector<8x128xi1>, vector<8x128xf32>
    %746 = arith.select %537, %370, %743 : vector<8x128xi1>, vector<8x128xf32>
    %747 = arith.select %537, %371, %745 : vector<8x128xi1>, vector<8x128xf32>
    %748 = arith.subf %487, %492 : vector<8x128xf32>
    %cst_157 = arith.constant 0.000000e+00 : f32
    %749 = vector.broadcast %cst_157 : f32 to vector<8x128xf32>
    %750 = arith.cmpf oeq, %748, %749 : vector<8x128xf32>
    %cst_158 = arith.constant 1.000000e+00 : f32
    %751 = vector.broadcast %cst_158 : f32 to vector<8x128xf32>
    %752 = arith.select %750, %751, %748 : vector<8x128xi1>, vector<8x128xf32>
    %753 = arith.divf %487, %752 : vector<8x128xf32>
    %754 = arith.subf %389, %370 : vector<8x128xf32>
    %755 = arith.mulf %753, %754 : vector<8x128xf32>
    %756 = arith.addf %370, %755 : vector<8x128xf32>
    %757 = arith.subf %391, %371 : vector<8x128xf32>
    %758 = arith.mulf %753, %757 : vector<8x128xf32>
    %759 = arith.addf %371, %758 : vector<8x128xf32>
    %760 = arith.andi %537, %539 : vector<8x128xi1>
    %cst_159 = arith.constant dense<true> : vector<8x128xi1>
    %761 = arith.xori %537, %cst_159 : vector<8x128xi1>
    %cst_160 = arith.constant dense<true> : vector<8x128xi1>
    %762 = arith.xori %539, %cst_160 : vector<8x128xi1>
    %763 = arith.andi %761, %762 : vector<8x128xi1>
    %764 = arith.select %763, %21, %756 : vector<8x128xi1>, vector<8x128xf32>
    %765 = arith.select %760, %370, %764 : vector<8x128xi1>, vector<8x128xf32>
    %766 = arith.select %763, %29, %759 : vector<8x128xi1>, vector<8x128xf32>
    %767 = arith.select %760, %371, %766 : vector<8x128xi1>, vector<8x128xf32>
    %768 = arith.select %539, %389, %765 : vector<8x128xi1>, vector<8x128xf32>
    %769 = arith.select %539, %391, %767 : vector<8x128xi1>, vector<8x128xf32>
    %770 = arith.subf %492, %497 : vector<8x128xf32>
    %cst_161 = arith.constant 0.000000e+00 : f32
    %771 = vector.broadcast %cst_161 : f32 to vector<8x128xf32>
    %772 = arith.cmpf oeq, %770, %771 : vector<8x128xf32>
    %cst_162 = arith.constant 1.000000e+00 : f32
    %773 = vector.broadcast %cst_162 : f32 to vector<8x128xf32>
    %774 = arith.select %772, %773, %770 : vector<8x128xi1>, vector<8x128xf32>
    %775 = arith.divf %492, %774 : vector<8x128xf32>
    %776 = arith.subf %392, %389 : vector<8x128xf32>
    %777 = arith.mulf %775, %776 : vector<8x128xf32>
    %778 = arith.addf %389, %777 : vector<8x128xf32>
    %779 = arith.subf %393, %391 : vector<8x128xf32>
    %780 = arith.mulf %775, %779 : vector<8x128xf32>
    %781 = arith.addf %391, %780 : vector<8x128xf32>
    %782 = arith.andi %539, %541 : vector<8x128xi1>
    %cst_163 = arith.constant dense<true> : vector<8x128xi1>
    %783 = arith.xori %539, %cst_163 : vector<8x128xi1>
    %cst_164 = arith.constant dense<true> : vector<8x128xi1>
    %784 = arith.xori %541, %cst_164 : vector<8x128xi1>
    %785 = arith.andi %783, %784 : vector<8x128xi1>
    %786 = arith.select %785, %21, %778 : vector<8x128xi1>, vector<8x128xf32>
    %787 = arith.select %782, %389, %786 : vector<8x128xi1>, vector<8x128xf32>
    %788 = arith.select %785, %29, %781 : vector<8x128xi1>, vector<8x128xf32>
    %789 = arith.select %782, %391, %788 : vector<8x128xi1>, vector<8x128xf32>
    %790 = arith.select %541, %392, %787 : vector<8x128xi1>, vector<8x128xf32>
    %791 = arith.select %541, %393, %789 : vector<8x128xi1>, vector<8x128xf32>
    %792 = arith.subf %497, %502 : vector<8x128xf32>
    %cst_165 = arith.constant 0.000000e+00 : f32
    %793 = vector.broadcast %cst_165 : f32 to vector<8x128xf32>
    %794 = arith.cmpf oeq, %792, %793 : vector<8x128xf32>
    %cst_166 = arith.constant 1.000000e+00 : f32
    %795 = vector.broadcast %cst_166 : f32 to vector<8x128xf32>
    %796 = arith.select %794, %795, %792 : vector<8x128xi1>, vector<8x128xf32>
    %797 = arith.divf %497, %796 : vector<8x128xf32>
    %798 = arith.subf %411, %392 : vector<8x128xf32>
    %799 = arith.mulf %797, %798 : vector<8x128xf32>
    %800 = arith.addf %392, %799 : vector<8x128xf32>
    %801 = arith.subf %413, %393 : vector<8x128xf32>
    %802 = arith.mulf %797, %801 : vector<8x128xf32>
    %803 = arith.addf %393, %802 : vector<8x128xf32>
    %804 = arith.andi %541, %543 : vector<8x128xi1>
    %cst_167 = arith.constant dense<true> : vector<8x128xi1>
    %805 = arith.xori %541, %cst_167 : vector<8x128xi1>
    %cst_168 = arith.constant dense<true> : vector<8x128xi1>
    %806 = arith.xori %543, %cst_168 : vector<8x128xi1>
    %807 = arith.andi %805, %806 : vector<8x128xi1>
    %808 = arith.select %807, %21, %800 : vector<8x128xi1>, vector<8x128xf32>
    %809 = arith.select %804, %392, %808 : vector<8x128xi1>, vector<8x128xf32>
    %810 = arith.select %807, %29, %803 : vector<8x128xi1>, vector<8x128xf32>
    %811 = arith.select %804, %393, %810 : vector<8x128xi1>, vector<8x128xf32>
    %812 = arith.select %543, %411, %809 : vector<8x128xi1>, vector<8x128xf32>
    %813 = arith.select %543, %413, %811 : vector<8x128xi1>, vector<8x128xf32>
    %814 = arith.subf %502, %507 : vector<8x128xf32>
    %cst_169 = arith.constant 0.000000e+00 : f32
    %815 = vector.broadcast %cst_169 : f32 to vector<8x128xf32>
    %816 = arith.cmpf oeq, %814, %815 : vector<8x128xf32>
    %cst_170 = arith.constant 1.000000e+00 : f32
    %817 = vector.broadcast %cst_170 : f32 to vector<8x128xf32>
    %818 = arith.select %816, %817, %814 : vector<8x128xi1>, vector<8x128xf32>
    %819 = arith.divf %502, %818 : vector<8x128xf32>
    %820 = arith.subf %414, %411 : vector<8x128xf32>
    %821 = arith.mulf %819, %820 : vector<8x128xf32>
    %822 = arith.addf %411, %821 : vector<8x128xf32>
    %823 = arith.subf %415, %413 : vector<8x128xf32>
    %824 = arith.mulf %819, %823 : vector<8x128xf32>
    %825 = arith.addf %413, %824 : vector<8x128xf32>
    %826 = arith.andi %543, %545 : vector<8x128xi1>
    %cst_171 = arith.constant dense<true> : vector<8x128xi1>
    %827 = arith.xori %543, %cst_171 : vector<8x128xi1>
    %cst_172 = arith.constant dense<true> : vector<8x128xi1>
    %828 = arith.xori %545, %cst_172 : vector<8x128xi1>
    %829 = arith.andi %827, %828 : vector<8x128xi1>
    %830 = arith.select %829, %21, %822 : vector<8x128xi1>, vector<8x128xf32>
    %831 = arith.select %826, %411, %830 : vector<8x128xi1>, vector<8x128xf32>
    %832 = arith.select %829, %29, %825 : vector<8x128xi1>, vector<8x128xf32>
    %833 = arith.select %826, %413, %832 : vector<8x128xi1>, vector<8x128xf32>
    %834 = arith.select %545, %414, %831 : vector<8x128xi1>, vector<8x128xf32>
    %835 = arith.select %545, %415, %833 : vector<8x128xi1>, vector<8x128xf32>
    %836 = arith.subf %507, %512 : vector<8x128xf32>
    %cst_173 = arith.constant 0.000000e+00 : f32
    %837 = vector.broadcast %cst_173 : f32 to vector<8x128xf32>
    %838 = arith.cmpf oeq, %836, %837 : vector<8x128xf32>
    %cst_174 = arith.constant 1.000000e+00 : f32
    %839 = vector.broadcast %cst_174 : f32 to vector<8x128xf32>
    %840 = arith.select %838, %839, %836 : vector<8x128xi1>, vector<8x128xf32>
    %841 = arith.divf %507, %840 : vector<8x128xf32>
    %842 = arith.subf %433, %414 : vector<8x128xf32>
    %843 = arith.mulf %841, %842 : vector<8x128xf32>
    %844 = arith.addf %414, %843 : vector<8x128xf32>
    %845 = arith.subf %435, %415 : vector<8x128xf32>
    %846 = arith.mulf %841, %845 : vector<8x128xf32>
    %847 = arith.addf %415, %846 : vector<8x128xf32>
    %848 = arith.andi %545, %547 : vector<8x128xi1>
    %cst_175 = arith.constant dense<true> : vector<8x128xi1>
    %849 = arith.xori %545, %cst_175 : vector<8x128xi1>
    %cst_176 = arith.constant dense<true> : vector<8x128xi1>
    %850 = arith.xori %547, %cst_176 : vector<8x128xi1>
    %851 = arith.andi %849, %850 : vector<8x128xi1>
    %852 = arith.select %851, %21, %844 : vector<8x128xi1>, vector<8x128xf32>
    %853 = arith.select %848, %414, %852 : vector<8x128xi1>, vector<8x128xf32>
    %854 = arith.select %851, %29, %847 : vector<8x128xi1>, vector<8x128xf32>
    %855 = arith.select %848, %415, %854 : vector<8x128xi1>, vector<8x128xf32>
    %856 = arith.select %547, %433, %853 : vector<8x128xi1>, vector<8x128xf32>
    %857 = arith.select %547, %435, %855 : vector<8x128xi1>, vector<8x128xf32>
    %858 = arith.subf %512, %517 : vector<8x128xf32>
    %cst_177 = arith.constant 0.000000e+00 : f32
    %859 = vector.broadcast %cst_177 : f32 to vector<8x128xf32>
    %860 = arith.cmpf oeq, %858, %859 : vector<8x128xf32>
    %cst_178 = arith.constant 1.000000e+00 : f32
    %861 = vector.broadcast %cst_178 : f32 to vector<8x128xf32>
    %862 = arith.select %860, %861, %858 : vector<8x128xi1>, vector<8x128xf32>
    %863 = arith.divf %512, %862 : vector<8x128xf32>
    %864 = arith.subf %436, %433 : vector<8x128xf32>
    %865 = arith.mulf %863, %864 : vector<8x128xf32>
    %866 = arith.addf %433, %865 : vector<8x128xf32>
    %867 = arith.subf %437, %435 : vector<8x128xf32>
    %868 = arith.mulf %863, %867 : vector<8x128xf32>
    %869 = arith.addf %435, %868 : vector<8x128xf32>
    %870 = arith.andi %547, %549 : vector<8x128xi1>
    %cst_179 = arith.constant dense<true> : vector<8x128xi1>
    %871 = arith.xori %547, %cst_179 : vector<8x128xi1>
    %cst_180 = arith.constant dense<true> : vector<8x128xi1>
    %872 = arith.xori %549, %cst_180 : vector<8x128xi1>
    %873 = arith.andi %871, %872 : vector<8x128xi1>
    %874 = arith.select %873, %21, %866 : vector<8x128xi1>, vector<8x128xf32>
    %875 = arith.select %870, %433, %874 : vector<8x128xi1>, vector<8x128xf32>
    %876 = arith.select %873, %29, %869 : vector<8x128xi1>, vector<8x128xf32>
    %877 = arith.select %870, %435, %876 : vector<8x128xi1>, vector<8x128xf32>
    %878 = arith.select %549, %436, %875 : vector<8x128xi1>, vector<8x128xf32>
    %879 = arith.select %549, %437, %877 : vector<8x128xi1>, vector<8x128xf32>
    %880 = arith.subf %517, %442 : vector<8x128xf32>
    %cst_181 = arith.constant 0.000000e+00 : f32
    %881 = vector.broadcast %cst_181 : f32 to vector<8x128xf32>
    %882 = arith.cmpf oeq, %880, %881 : vector<8x128xf32>
    %cst_182 = arith.constant 1.000000e+00 : f32
    %883 = vector.broadcast %cst_182 : f32 to vector<8x128xf32>
    %884 = arith.select %882, %883, %880 : vector<8x128xi1>, vector<8x128xf32>
    %885 = arith.divf %517, %884 : vector<8x128xf32>
    %886 = arith.subf %279, %436 : vector<8x128xf32>
    %887 = arith.mulf %885, %886 : vector<8x128xf32>
    %888 = arith.addf %436, %887 : vector<8x128xf32>
    %889 = arith.subf %281, %437 : vector<8x128xf32>
    %890 = arith.mulf %885, %889 : vector<8x128xf32>
    %891 = arith.addf %437, %890 : vector<8x128xf32>
    %892 = arith.andi %549, %519 : vector<8x128xi1>
    %cst_183 = arith.constant dense<true> : vector<8x128xi1>
    %893 = arith.xori %549, %cst_183 : vector<8x128xi1>
    %cst_184 = arith.constant dense<true> : vector<8x128xi1>
    %894 = arith.xori %519, %cst_184 : vector<8x128xi1>
    %895 = arith.andi %893, %894 : vector<8x128xi1>
    %896 = arith.select %895, %21, %888 : vector<8x128xi1>, vector<8x128xf32>
    %897 = arith.select %892, %436, %896 : vector<8x128xi1>, vector<8x128xf32>
    %898 = arith.select %895, %29, %891 : vector<8x128xi1>, vector<8x128xf32>
    %899 = arith.select %892, %437, %898 : vector<8x128xi1>, vector<8x128xf32>
    %900 = arith.select %519, %279, %897 : vector<8x128xi1>, vector<8x128xf32>
    %901 = arith.select %519, %281, %899 : vector<8x128xi1>, vector<8x128xf32>
    %902 = arith.subf %569, %31 : vector<8x128xf32>
    %903 = arith.mulf %81, %902 : vector<8x128xf32>
    %904 = arith.subf %567, %23 : vector<8x128xf32>
    %905 = arith.mulf %89, %904 : vector<8x128xf32>
    %906 = arith.subf %903, %905 : vector<8x128xf32>
    %907 = arith.subf %571, %31 : vector<8x128xf32>
    %908 = arith.mulf %81, %907 : vector<8x128xf32>
    %909 = arith.subf %570, %23 : vector<8x128xf32>
    %910 = arith.mulf %89, %909 : vector<8x128xf32>
    %911 = arith.subf %908, %910 : vector<8x128xf32>
    %912 = arith.subf %591, %31 : vector<8x128xf32>
    %913 = arith.mulf %81, %912 : vector<8x128xf32>
    %914 = arith.subf %589, %23 : vector<8x128xf32>
    %915 = arith.mulf %89, %914 : vector<8x128xf32>
    %916 = arith.subf %913, %915 : vector<8x128xf32>
    %917 = arith.subf %593, %31 : vector<8x128xf32>
    %918 = arith.mulf %81, %917 : vector<8x128xf32>
    %919 = arith.subf %592, %23 : vector<8x128xf32>
    %920 = arith.mulf %89, %919 : vector<8x128xf32>
    %921 = arith.subf %918, %920 : vector<8x128xf32>
    %922 = arith.subf %613, %31 : vector<8x128xf32>
    %923 = arith.mulf %81, %922 : vector<8x128xf32>
    %924 = arith.subf %611, %23 : vector<8x128xf32>
    %925 = arith.mulf %89, %924 : vector<8x128xf32>
    %926 = arith.subf %923, %925 : vector<8x128xf32>
    %927 = arith.subf %615, %31 : vector<8x128xf32>
    %928 = arith.mulf %81, %927 : vector<8x128xf32>
    %929 = arith.subf %614, %23 : vector<8x128xf32>
    %930 = arith.mulf %89, %929 : vector<8x128xf32>
    %931 = arith.subf %928, %930 : vector<8x128xf32>
    %932 = arith.subf %635, %31 : vector<8x128xf32>
    %933 = arith.mulf %81, %932 : vector<8x128xf32>
    %934 = arith.subf %633, %23 : vector<8x128xf32>
    %935 = arith.mulf %89, %934 : vector<8x128xf32>
    %936 = arith.subf %933, %935 : vector<8x128xf32>
    %937 = arith.subf %637, %31 : vector<8x128xf32>
    %938 = arith.mulf %81, %937 : vector<8x128xf32>
    %939 = arith.subf %636, %23 : vector<8x128xf32>
    %940 = arith.mulf %89, %939 : vector<8x128xf32>
    %941 = arith.subf %938, %940 : vector<8x128xf32>
    %942 = arith.subf %657, %31 : vector<8x128xf32>
    %943 = arith.mulf %81, %942 : vector<8x128xf32>
    %944 = arith.subf %655, %23 : vector<8x128xf32>
    %945 = arith.mulf %89, %944 : vector<8x128xf32>
    %946 = arith.subf %943, %945 : vector<8x128xf32>
    %947 = arith.subf %659, %31 : vector<8x128xf32>
    %948 = arith.mulf %81, %947 : vector<8x128xf32>
    %949 = arith.subf %658, %23 : vector<8x128xf32>
    %950 = arith.mulf %89, %949 : vector<8x128xf32>
    %951 = arith.subf %948, %950 : vector<8x128xf32>
    %952 = arith.subf %679, %31 : vector<8x128xf32>
    %953 = arith.mulf %81, %952 : vector<8x128xf32>
    %954 = arith.subf %677, %23 : vector<8x128xf32>
    %955 = arith.mulf %89, %954 : vector<8x128xf32>
    %956 = arith.subf %953, %955 : vector<8x128xf32>
    %957 = arith.subf %681, %31 : vector<8x128xf32>
    %958 = arith.mulf %81, %957 : vector<8x128xf32>
    %959 = arith.subf %680, %23 : vector<8x128xf32>
    %960 = arith.mulf %89, %959 : vector<8x128xf32>
    %961 = arith.subf %958, %960 : vector<8x128xf32>
    %962 = arith.subf %701, %31 : vector<8x128xf32>
    %963 = arith.mulf %81, %962 : vector<8x128xf32>
    %964 = arith.subf %699, %23 : vector<8x128xf32>
    %965 = arith.mulf %89, %964 : vector<8x128xf32>
    %966 = arith.subf %963, %965 : vector<8x128xf32>
    %967 = arith.subf %703, %31 : vector<8x128xf32>
    %968 = arith.mulf %81, %967 : vector<8x128xf32>
    %969 = arith.subf %702, %23 : vector<8x128xf32>
    %970 = arith.mulf %89, %969 : vector<8x128xf32>
    %971 = arith.subf %968, %970 : vector<8x128xf32>
    %972 = arith.subf %723, %31 : vector<8x128xf32>
    %973 = arith.mulf %81, %972 : vector<8x128xf32>
    %974 = arith.subf %721, %23 : vector<8x128xf32>
    %975 = arith.mulf %89, %974 : vector<8x128xf32>
    %976 = arith.subf %973, %975 : vector<8x128xf32>
    %977 = arith.subf %725, %31 : vector<8x128xf32>
    %978 = arith.mulf %81, %977 : vector<8x128xf32>
    %979 = arith.subf %724, %23 : vector<8x128xf32>
    %980 = arith.mulf %89, %979 : vector<8x128xf32>
    %981 = arith.subf %978, %980 : vector<8x128xf32>
    %982 = arith.subf %745, %31 : vector<8x128xf32>
    %983 = arith.mulf %81, %982 : vector<8x128xf32>
    %984 = arith.subf %743, %23 : vector<8x128xf32>
    %985 = arith.mulf %89, %984 : vector<8x128xf32>
    %986 = arith.subf %983, %985 : vector<8x128xf32>
    %987 = arith.subf %747, %31 : vector<8x128xf32>
    %988 = arith.mulf %81, %987 : vector<8x128xf32>
    %989 = arith.subf %746, %23 : vector<8x128xf32>
    %990 = arith.mulf %89, %989 : vector<8x128xf32>
    %991 = arith.subf %988, %990 : vector<8x128xf32>
    %992 = arith.subf %767, %31 : vector<8x128xf32>
    %993 = arith.mulf %81, %992 : vector<8x128xf32>
    %994 = arith.subf %765, %23 : vector<8x128xf32>
    %995 = arith.mulf %89, %994 : vector<8x128xf32>
    %996 = arith.subf %993, %995 : vector<8x128xf32>
    %997 = arith.subf %769, %31 : vector<8x128xf32>
    %998 = arith.mulf %81, %997 : vector<8x128xf32>
    %999 = arith.subf %768, %23 : vector<8x128xf32>
    %1000 = arith.mulf %89, %999 : vector<8x128xf32>
    %1001 = arith.subf %998, %1000 : vector<8x128xf32>
    %1002 = arith.subf %789, %31 : vector<8x128xf32>
    %1003 = arith.mulf %81, %1002 : vector<8x128xf32>
    %1004 = arith.subf %787, %23 : vector<8x128xf32>
    %1005 = arith.mulf %89, %1004 : vector<8x128xf32>
    %1006 = arith.subf %1003, %1005 : vector<8x128xf32>
    %1007 = arith.subf %791, %31 : vector<8x128xf32>
    %1008 = arith.mulf %81, %1007 : vector<8x128xf32>
    %1009 = arith.subf %790, %23 : vector<8x128xf32>
    %1010 = arith.mulf %89, %1009 : vector<8x128xf32>
    %1011 = arith.subf %1008, %1010 : vector<8x128xf32>
    %1012 = arith.subf %811, %31 : vector<8x128xf32>
    %1013 = arith.mulf %81, %1012 : vector<8x128xf32>
    %1014 = arith.subf %809, %23 : vector<8x128xf32>
    %1015 = arith.mulf %89, %1014 : vector<8x128xf32>
    %1016 = arith.subf %1013, %1015 : vector<8x128xf32>
    %1017 = arith.subf %813, %31 : vector<8x128xf32>
    %1018 = arith.mulf %81, %1017 : vector<8x128xf32>
    %1019 = arith.subf %812, %23 : vector<8x128xf32>
    %1020 = arith.mulf %89, %1019 : vector<8x128xf32>
    %1021 = arith.subf %1018, %1020 : vector<8x128xf32>
    %1022 = arith.subf %833, %31 : vector<8x128xf32>
    %1023 = arith.mulf %81, %1022 : vector<8x128xf32>
    %1024 = arith.subf %831, %23 : vector<8x128xf32>
    %1025 = arith.mulf %89, %1024 : vector<8x128xf32>
    %1026 = arith.subf %1023, %1025 : vector<8x128xf32>
    %1027 = arith.subf %835, %31 : vector<8x128xf32>
    %1028 = arith.mulf %81, %1027 : vector<8x128xf32>
    %1029 = arith.subf %834, %23 : vector<8x128xf32>
    %1030 = arith.mulf %89, %1029 : vector<8x128xf32>
    %1031 = arith.subf %1028, %1030 : vector<8x128xf32>
    %1032 = arith.subf %855, %31 : vector<8x128xf32>
    %1033 = arith.mulf %81, %1032 : vector<8x128xf32>
    %1034 = arith.subf %853, %23 : vector<8x128xf32>
    %1035 = arith.mulf %89, %1034 : vector<8x128xf32>
    %1036 = arith.subf %1033, %1035 : vector<8x128xf32>
    %1037 = arith.subf %857, %31 : vector<8x128xf32>
    %1038 = arith.mulf %81, %1037 : vector<8x128xf32>
    %1039 = arith.subf %856, %23 : vector<8x128xf32>
    %1040 = arith.mulf %89, %1039 : vector<8x128xf32>
    %1041 = arith.subf %1038, %1040 : vector<8x128xf32>
    %1042 = arith.subf %877, %31 : vector<8x128xf32>
    %1043 = arith.mulf %81, %1042 : vector<8x128xf32>
    %1044 = arith.subf %875, %23 : vector<8x128xf32>
    %1045 = arith.mulf %89, %1044 : vector<8x128xf32>
    %1046 = arith.subf %1043, %1045 : vector<8x128xf32>
    %1047 = arith.subf %879, %31 : vector<8x128xf32>
    %1048 = arith.mulf %81, %1047 : vector<8x128xf32>
    %1049 = arith.subf %878, %23 : vector<8x128xf32>
    %1050 = arith.mulf %89, %1049 : vector<8x128xf32>
    %1051 = arith.subf %1048, %1050 : vector<8x128xf32>
    %1052 = arith.subf %899, %31 : vector<8x128xf32>
    %1053 = arith.mulf %81, %1052 : vector<8x128xf32>
    %1054 = arith.subf %897, %23 : vector<8x128xf32>
    %1055 = arith.mulf %89, %1054 : vector<8x128xf32>
    %1056 = arith.subf %1053, %1055 : vector<8x128xf32>
    %1057 = arith.subf %901, %31 : vector<8x128xf32>
    %1058 = arith.mulf %81, %1057 : vector<8x128xf32>
    %1059 = arith.subf %900, %23 : vector<8x128xf32>
    %1060 = arith.mulf %89, %1059 : vector<8x128xf32>
    %1061 = arith.subf %1058, %1060 : vector<8x128xf32>
    %cst_185 = arith.constant 0.000000e+00 : f32
    %1062 = vector.broadcast %cst_185 : f32 to vector<8x128xf32>
    %1063 = arith.cmpf oge, %906, %1062 : vector<8x128xf32>
    %cst_186 = arith.constant 0.000000e+00 : f32
    %1064 = vector.broadcast %cst_186 : f32 to vector<8x128xf32>
    %1065 = arith.cmpf oge, %911, %1064 : vector<8x128xf32>
    %cst_187 = arith.constant 0.000000e+00 : f32
    %1066 = vector.broadcast %cst_187 : f32 to vector<8x128xf32>
    %1067 = arith.cmpf oge, %916, %1066 : vector<8x128xf32>
    %cst_188 = arith.constant 0.000000e+00 : f32
    %1068 = vector.broadcast %cst_188 : f32 to vector<8x128xf32>
    %1069 = arith.cmpf oge, %921, %1068 : vector<8x128xf32>
    %cst_189 = arith.constant 0.000000e+00 : f32
    %1070 = vector.broadcast %cst_189 : f32 to vector<8x128xf32>
    %1071 = arith.cmpf oge, %926, %1070 : vector<8x128xf32>
    %cst_190 = arith.constant 0.000000e+00 : f32
    %1072 = vector.broadcast %cst_190 : f32 to vector<8x128xf32>
    %1073 = arith.cmpf oge, %931, %1072 : vector<8x128xf32>
    %cst_191 = arith.constant 0.000000e+00 : f32
    %1074 = vector.broadcast %cst_191 : f32 to vector<8x128xf32>
    %1075 = arith.cmpf oge, %936, %1074 : vector<8x128xf32>
    %cst_192 = arith.constant 0.000000e+00 : f32
    %1076 = vector.broadcast %cst_192 : f32 to vector<8x128xf32>
    %1077 = arith.cmpf oge, %941, %1076 : vector<8x128xf32>
    %cst_193 = arith.constant 0.000000e+00 : f32
    %1078 = vector.broadcast %cst_193 : f32 to vector<8x128xf32>
    %1079 = arith.cmpf oge, %946, %1078 : vector<8x128xf32>
    %cst_194 = arith.constant 0.000000e+00 : f32
    %1080 = vector.broadcast %cst_194 : f32 to vector<8x128xf32>
    %1081 = arith.cmpf oge, %951, %1080 : vector<8x128xf32>
    %cst_195 = arith.constant 0.000000e+00 : f32
    %1082 = vector.broadcast %cst_195 : f32 to vector<8x128xf32>
    %1083 = arith.cmpf oge, %956, %1082 : vector<8x128xf32>
    %cst_196 = arith.constant 0.000000e+00 : f32
    %1084 = vector.broadcast %cst_196 : f32 to vector<8x128xf32>
    %1085 = arith.cmpf oge, %961, %1084 : vector<8x128xf32>
    %cst_197 = arith.constant 0.000000e+00 : f32
    %1086 = vector.broadcast %cst_197 : f32 to vector<8x128xf32>
    %1087 = arith.cmpf oge, %966, %1086 : vector<8x128xf32>
    %cst_198 = arith.constant 0.000000e+00 : f32
    %1088 = vector.broadcast %cst_198 : f32 to vector<8x128xf32>
    %1089 = arith.cmpf oge, %971, %1088 : vector<8x128xf32>
    %cst_199 = arith.constant 0.000000e+00 : f32
    %1090 = vector.broadcast %cst_199 : f32 to vector<8x128xf32>
    %1091 = arith.cmpf oge, %976, %1090 : vector<8x128xf32>
    %cst_200 = arith.constant 0.000000e+00 : f32
    %1092 = vector.broadcast %cst_200 : f32 to vector<8x128xf32>
    %1093 = arith.cmpf oge, %981, %1092 : vector<8x128xf32>
    %cst_201 = arith.constant 0.000000e+00 : f32
    %1094 = vector.broadcast %cst_201 : f32 to vector<8x128xf32>
    %1095 = arith.cmpf oge, %986, %1094 : vector<8x128xf32>
    %cst_202 = arith.constant 0.000000e+00 : f32
    %1096 = vector.broadcast %cst_202 : f32 to vector<8x128xf32>
    %1097 = arith.cmpf oge, %991, %1096 : vector<8x128xf32>
    %cst_203 = arith.constant 0.000000e+00 : f32
    %1098 = vector.broadcast %cst_203 : f32 to vector<8x128xf32>
    %1099 = arith.cmpf oge, %996, %1098 : vector<8x128xf32>
    %cst_204 = arith.constant 0.000000e+00 : f32
    %1100 = vector.broadcast %cst_204 : f32 to vector<8x128xf32>
    %1101 = arith.cmpf oge, %1001, %1100 : vector<8x128xf32>
    %cst_205 = arith.constant 0.000000e+00 : f32
    %1102 = vector.broadcast %cst_205 : f32 to vector<8x128xf32>
    %1103 = arith.cmpf oge, %1006, %1102 : vector<8x128xf32>
    %cst_206 = arith.constant 0.000000e+00 : f32
    %1104 = vector.broadcast %cst_206 : f32 to vector<8x128xf32>
    %1105 = arith.cmpf oge, %1011, %1104 : vector<8x128xf32>
    %cst_207 = arith.constant 0.000000e+00 : f32
    %1106 = vector.broadcast %cst_207 : f32 to vector<8x128xf32>
    %1107 = arith.cmpf oge, %1016, %1106 : vector<8x128xf32>
    %cst_208 = arith.constant 0.000000e+00 : f32
    %1108 = vector.broadcast %cst_208 : f32 to vector<8x128xf32>
    %1109 = arith.cmpf oge, %1021, %1108 : vector<8x128xf32>
    %cst_209 = arith.constant 0.000000e+00 : f32
    %1110 = vector.broadcast %cst_209 : f32 to vector<8x128xf32>
    %1111 = arith.cmpf oge, %1026, %1110 : vector<8x128xf32>
    %cst_210 = arith.constant 0.000000e+00 : f32
    %1112 = vector.broadcast %cst_210 : f32 to vector<8x128xf32>
    %1113 = arith.cmpf oge, %1031, %1112 : vector<8x128xf32>
    %cst_211 = arith.constant 0.000000e+00 : f32
    %1114 = vector.broadcast %cst_211 : f32 to vector<8x128xf32>
    %1115 = arith.cmpf oge, %1036, %1114 : vector<8x128xf32>
    %cst_212 = arith.constant 0.000000e+00 : f32
    %1116 = vector.broadcast %cst_212 : f32 to vector<8x128xf32>
    %1117 = arith.cmpf oge, %1041, %1116 : vector<8x128xf32>
    %cst_213 = arith.constant 0.000000e+00 : f32
    %1118 = vector.broadcast %cst_213 : f32 to vector<8x128xf32>
    %1119 = arith.cmpf oge, %1046, %1118 : vector<8x128xf32>
    %cst_214 = arith.constant 0.000000e+00 : f32
    %1120 = vector.broadcast %cst_214 : f32 to vector<8x128xf32>
    %1121 = arith.cmpf oge, %1051, %1120 : vector<8x128xf32>
    %cst_215 = arith.constant 0.000000e+00 : f32
    %1122 = vector.broadcast %cst_215 : f32 to vector<8x128xf32>
    %1123 = arith.cmpf oge, %1056, %1122 : vector<8x128xf32>
    %cst_216 = arith.constant 0.000000e+00 : f32
    %1124 = vector.broadcast %cst_216 : f32 to vector<8x128xf32>
    %1125 = arith.cmpf oge, %1061, %1124 : vector<8x128xf32>
    %1126 = arith.subf %906, %911 : vector<8x128xf32>
    %cst_217 = arith.constant 0.000000e+00 : f32
    %1127 = vector.broadcast %cst_217 : f32 to vector<8x128xf32>
    %1128 = arith.cmpf oeq, %1126, %1127 : vector<8x128xf32>
    %cst_218 = arith.constant 1.000000e+00 : f32
    %1129 = vector.broadcast %cst_218 : f32 to vector<8x128xf32>
    %1130 = arith.select %1128, %1129, %1126 : vector<8x128xi1>, vector<8x128xf32>
    %1131 = arith.divf %906, %1130 : vector<8x128xf32>
    %1132 = arith.subf %570, %567 : vector<8x128xf32>
    %1133 = arith.mulf %1131, %1132 : vector<8x128xf32>
    %1134 = arith.addf %567, %1133 : vector<8x128xf32>
    %1135 = arith.subf %571, %569 : vector<8x128xf32>
    %1136 = arith.mulf %1131, %1135 : vector<8x128xf32>
    %1137 = arith.addf %569, %1136 : vector<8x128xf32>
    %1138 = arith.andi %1063, %1065 : vector<8x128xi1>
    %cst_219 = arith.constant dense<true> : vector<8x128xi1>
    %1139 = arith.xori %1063, %cst_219 : vector<8x128xi1>
    %cst_220 = arith.constant dense<true> : vector<8x128xi1>
    %1140 = arith.xori %1065, %cst_220 : vector<8x128xi1>
    %1141 = arith.andi %1139, %1140 : vector<8x128xi1>
    %1142 = arith.select %1141, %23, %1134 : vector<8x128xi1>, vector<8x128xf32>
    %1143 = arith.select %1138, %567, %1142 : vector<8x128xi1>, vector<8x128xf32>
    %1144 = arith.select %1141, %31, %1137 : vector<8x128xi1>, vector<8x128xf32>
    %1145 = arith.select %1138, %569, %1144 : vector<8x128xi1>, vector<8x128xf32>
    %1146 = arith.select %1065, %570, %1143 : vector<8x128xi1>, vector<8x128xf32>
    %1147 = arith.select %1065, %571, %1145 : vector<8x128xi1>, vector<8x128xf32>
    %1148 = arith.mulf %1143, %1147 : vector<8x128xf32>
    %1149 = arith.mulf %1146, %1145 : vector<8x128xf32>
    %1150 = arith.subf %1148, %1149 : vector<8x128xf32>
    %1151 = arith.subf %911, %916 : vector<8x128xf32>
    %cst_221 = arith.constant 0.000000e+00 : f32
    %1152 = vector.broadcast %cst_221 : f32 to vector<8x128xf32>
    %1153 = arith.cmpf oeq, %1151, %1152 : vector<8x128xf32>
    %cst_222 = arith.constant 1.000000e+00 : f32
    %1154 = vector.broadcast %cst_222 : f32 to vector<8x128xf32>
    %1155 = arith.select %1153, %1154, %1151 : vector<8x128xi1>, vector<8x128xf32>
    %1156 = arith.divf %911, %1155 : vector<8x128xf32>
    %1157 = arith.subf %589, %570 : vector<8x128xf32>
    %1158 = arith.mulf %1156, %1157 : vector<8x128xf32>
    %1159 = arith.addf %570, %1158 : vector<8x128xf32>
    %1160 = arith.subf %591, %571 : vector<8x128xf32>
    %1161 = arith.mulf %1156, %1160 : vector<8x128xf32>
    %1162 = arith.addf %571, %1161 : vector<8x128xf32>
    %1163 = arith.andi %1065, %1067 : vector<8x128xi1>
    %cst_223 = arith.constant dense<true> : vector<8x128xi1>
    %1164 = arith.xori %1065, %cst_223 : vector<8x128xi1>
    %cst_224 = arith.constant dense<true> : vector<8x128xi1>
    %1165 = arith.xori %1067, %cst_224 : vector<8x128xi1>
    %1166 = arith.andi %1164, %1165 : vector<8x128xi1>
    %1167 = arith.select %1166, %23, %1159 : vector<8x128xi1>, vector<8x128xf32>
    %1168 = arith.select %1163, %570, %1167 : vector<8x128xi1>, vector<8x128xf32>
    %1169 = arith.select %1166, %31, %1162 : vector<8x128xi1>, vector<8x128xf32>
    %1170 = arith.select %1163, %571, %1169 : vector<8x128xi1>, vector<8x128xf32>
    %1171 = arith.select %1067, %589, %1168 : vector<8x128xi1>, vector<8x128xf32>
    %1172 = arith.select %1067, %591, %1170 : vector<8x128xi1>, vector<8x128xf32>
    %1173 = arith.mulf %1146, %1170 : vector<8x128xf32>
    %1174 = arith.mulf %1168, %1147 : vector<8x128xf32>
    %1175 = arith.subf %1173, %1174 : vector<8x128xf32>
    %1176 = arith.addf %1150, %1175 : vector<8x128xf32>
    %1177 = arith.mulf %1168, %1172 : vector<8x128xf32>
    %1178 = arith.mulf %1171, %1170 : vector<8x128xf32>
    %1179 = arith.subf %1177, %1178 : vector<8x128xf32>
    %1180 = arith.addf %1176, %1179 : vector<8x128xf32>
    %1181 = arith.subf %916, %921 : vector<8x128xf32>
    %cst_225 = arith.constant 0.000000e+00 : f32
    %1182 = vector.broadcast %cst_225 : f32 to vector<8x128xf32>
    %1183 = arith.cmpf oeq, %1181, %1182 : vector<8x128xf32>
    %cst_226 = arith.constant 1.000000e+00 : f32
    %1184 = vector.broadcast %cst_226 : f32 to vector<8x128xf32>
    %1185 = arith.select %1183, %1184, %1181 : vector<8x128xi1>, vector<8x128xf32>
    %1186 = arith.divf %916, %1185 : vector<8x128xf32>
    %1187 = arith.subf %592, %589 : vector<8x128xf32>
    %1188 = arith.mulf %1186, %1187 : vector<8x128xf32>
    %1189 = arith.addf %589, %1188 : vector<8x128xf32>
    %1190 = arith.subf %593, %591 : vector<8x128xf32>
    %1191 = arith.mulf %1186, %1190 : vector<8x128xf32>
    %1192 = arith.addf %591, %1191 : vector<8x128xf32>
    %1193 = arith.andi %1067, %1069 : vector<8x128xi1>
    %cst_227 = arith.constant dense<true> : vector<8x128xi1>
    %1194 = arith.xori %1067, %cst_227 : vector<8x128xi1>
    %cst_228 = arith.constant dense<true> : vector<8x128xi1>
    %1195 = arith.xori %1069, %cst_228 : vector<8x128xi1>
    %1196 = arith.andi %1194, %1195 : vector<8x128xi1>
    %1197 = arith.select %1196, %23, %1189 : vector<8x128xi1>, vector<8x128xf32>
    %1198 = arith.select %1193, %589, %1197 : vector<8x128xi1>, vector<8x128xf32>
    %1199 = arith.select %1196, %31, %1192 : vector<8x128xi1>, vector<8x128xf32>
    %1200 = arith.select %1193, %591, %1199 : vector<8x128xi1>, vector<8x128xf32>
    %1201 = arith.select %1069, %592, %1198 : vector<8x128xi1>, vector<8x128xf32>
    %1202 = arith.select %1069, %593, %1200 : vector<8x128xi1>, vector<8x128xf32>
    %1203 = arith.mulf %1171, %1200 : vector<8x128xf32>
    %1204 = arith.mulf %1198, %1172 : vector<8x128xf32>
    %1205 = arith.subf %1203, %1204 : vector<8x128xf32>
    %1206 = arith.addf %1180, %1205 : vector<8x128xf32>
    %1207 = arith.mulf %1198, %1202 : vector<8x128xf32>
    %1208 = arith.mulf %1201, %1200 : vector<8x128xf32>
    %1209 = arith.subf %1207, %1208 : vector<8x128xf32>
    %1210 = arith.addf %1206, %1209 : vector<8x128xf32>
    %1211 = arith.subf %921, %926 : vector<8x128xf32>
    %cst_229 = arith.constant 0.000000e+00 : f32
    %1212 = vector.broadcast %cst_229 : f32 to vector<8x128xf32>
    %1213 = arith.cmpf oeq, %1211, %1212 : vector<8x128xf32>
    %cst_230 = arith.constant 1.000000e+00 : f32
    %1214 = vector.broadcast %cst_230 : f32 to vector<8x128xf32>
    %1215 = arith.select %1213, %1214, %1211 : vector<8x128xi1>, vector<8x128xf32>
    %1216 = arith.divf %921, %1215 : vector<8x128xf32>
    %1217 = arith.subf %611, %592 : vector<8x128xf32>
    %1218 = arith.mulf %1216, %1217 : vector<8x128xf32>
    %1219 = arith.addf %592, %1218 : vector<8x128xf32>
    %1220 = arith.subf %613, %593 : vector<8x128xf32>
    %1221 = arith.mulf %1216, %1220 : vector<8x128xf32>
    %1222 = arith.addf %593, %1221 : vector<8x128xf32>
    %1223 = arith.andi %1069, %1071 : vector<8x128xi1>
    %cst_231 = arith.constant dense<true> : vector<8x128xi1>
    %1224 = arith.xori %1069, %cst_231 : vector<8x128xi1>
    %cst_232 = arith.constant dense<true> : vector<8x128xi1>
    %1225 = arith.xori %1071, %cst_232 : vector<8x128xi1>
    %1226 = arith.andi %1224, %1225 : vector<8x128xi1>
    %1227 = arith.select %1226, %23, %1219 : vector<8x128xi1>, vector<8x128xf32>
    %1228 = arith.select %1223, %592, %1227 : vector<8x128xi1>, vector<8x128xf32>
    %1229 = arith.select %1226, %31, %1222 : vector<8x128xi1>, vector<8x128xf32>
    %1230 = arith.select %1223, %593, %1229 : vector<8x128xi1>, vector<8x128xf32>
    %1231 = arith.select %1071, %611, %1228 : vector<8x128xi1>, vector<8x128xf32>
    %1232 = arith.select %1071, %613, %1230 : vector<8x128xi1>, vector<8x128xf32>
    %1233 = arith.mulf %1201, %1230 : vector<8x128xf32>
    %1234 = arith.mulf %1228, %1202 : vector<8x128xf32>
    %1235 = arith.subf %1233, %1234 : vector<8x128xf32>
    %1236 = arith.addf %1210, %1235 : vector<8x128xf32>
    %1237 = arith.mulf %1228, %1232 : vector<8x128xf32>
    %1238 = arith.mulf %1231, %1230 : vector<8x128xf32>
    %1239 = arith.subf %1237, %1238 : vector<8x128xf32>
    %1240 = arith.addf %1236, %1239 : vector<8x128xf32>
    %1241 = arith.subf %926, %931 : vector<8x128xf32>
    %cst_233 = arith.constant 0.000000e+00 : f32
    %1242 = vector.broadcast %cst_233 : f32 to vector<8x128xf32>
    %1243 = arith.cmpf oeq, %1241, %1242 : vector<8x128xf32>
    %cst_234 = arith.constant 1.000000e+00 : f32
    %1244 = vector.broadcast %cst_234 : f32 to vector<8x128xf32>
    %1245 = arith.select %1243, %1244, %1241 : vector<8x128xi1>, vector<8x128xf32>
    %1246 = arith.divf %926, %1245 : vector<8x128xf32>
    %1247 = arith.subf %614, %611 : vector<8x128xf32>
    %1248 = arith.mulf %1246, %1247 : vector<8x128xf32>
    %1249 = arith.addf %611, %1248 : vector<8x128xf32>
    %1250 = arith.subf %615, %613 : vector<8x128xf32>
    %1251 = arith.mulf %1246, %1250 : vector<8x128xf32>
    %1252 = arith.addf %613, %1251 : vector<8x128xf32>
    %1253 = arith.andi %1071, %1073 : vector<8x128xi1>
    %cst_235 = arith.constant dense<true> : vector<8x128xi1>
    %1254 = arith.xori %1071, %cst_235 : vector<8x128xi1>
    %cst_236 = arith.constant dense<true> : vector<8x128xi1>
    %1255 = arith.xori %1073, %cst_236 : vector<8x128xi1>
    %1256 = arith.andi %1254, %1255 : vector<8x128xi1>
    %1257 = arith.select %1256, %23, %1249 : vector<8x128xi1>, vector<8x128xf32>
    %1258 = arith.select %1253, %611, %1257 : vector<8x128xi1>, vector<8x128xf32>
    %1259 = arith.select %1256, %31, %1252 : vector<8x128xi1>, vector<8x128xf32>
    %1260 = arith.select %1253, %613, %1259 : vector<8x128xi1>, vector<8x128xf32>
    %1261 = arith.select %1073, %614, %1258 : vector<8x128xi1>, vector<8x128xf32>
    %1262 = arith.select %1073, %615, %1260 : vector<8x128xi1>, vector<8x128xf32>
    %1263 = arith.mulf %1231, %1260 : vector<8x128xf32>
    %1264 = arith.mulf %1258, %1232 : vector<8x128xf32>
    %1265 = arith.subf %1263, %1264 : vector<8x128xf32>
    %1266 = arith.addf %1240, %1265 : vector<8x128xf32>
    %1267 = arith.mulf %1258, %1262 : vector<8x128xf32>
    %1268 = arith.mulf %1261, %1260 : vector<8x128xf32>
    %1269 = arith.subf %1267, %1268 : vector<8x128xf32>
    %1270 = arith.addf %1266, %1269 : vector<8x128xf32>
    %1271 = arith.subf %931, %936 : vector<8x128xf32>
    %cst_237 = arith.constant 0.000000e+00 : f32
    %1272 = vector.broadcast %cst_237 : f32 to vector<8x128xf32>
    %1273 = arith.cmpf oeq, %1271, %1272 : vector<8x128xf32>
    %cst_238 = arith.constant 1.000000e+00 : f32
    %1274 = vector.broadcast %cst_238 : f32 to vector<8x128xf32>
    %1275 = arith.select %1273, %1274, %1271 : vector<8x128xi1>, vector<8x128xf32>
    %1276 = arith.divf %931, %1275 : vector<8x128xf32>
    %1277 = arith.subf %633, %614 : vector<8x128xf32>
    %1278 = arith.mulf %1276, %1277 : vector<8x128xf32>
    %1279 = arith.addf %614, %1278 : vector<8x128xf32>
    %1280 = arith.subf %635, %615 : vector<8x128xf32>
    %1281 = arith.mulf %1276, %1280 : vector<8x128xf32>
    %1282 = arith.addf %615, %1281 : vector<8x128xf32>
    %1283 = arith.andi %1073, %1075 : vector<8x128xi1>
    %cst_239 = arith.constant dense<true> : vector<8x128xi1>
    %1284 = arith.xori %1073, %cst_239 : vector<8x128xi1>
    %cst_240 = arith.constant dense<true> : vector<8x128xi1>
    %1285 = arith.xori %1075, %cst_240 : vector<8x128xi1>
    %1286 = arith.andi %1284, %1285 : vector<8x128xi1>
    %1287 = arith.select %1286, %23, %1279 : vector<8x128xi1>, vector<8x128xf32>
    %1288 = arith.select %1283, %614, %1287 : vector<8x128xi1>, vector<8x128xf32>
    %1289 = arith.select %1286, %31, %1282 : vector<8x128xi1>, vector<8x128xf32>
    %1290 = arith.select %1283, %615, %1289 : vector<8x128xi1>, vector<8x128xf32>
    %1291 = arith.select %1075, %633, %1288 : vector<8x128xi1>, vector<8x128xf32>
    %1292 = arith.select %1075, %635, %1290 : vector<8x128xi1>, vector<8x128xf32>
    %1293 = arith.mulf %1261, %1290 : vector<8x128xf32>
    %1294 = arith.mulf %1288, %1262 : vector<8x128xf32>
    %1295 = arith.subf %1293, %1294 : vector<8x128xf32>
    %1296 = arith.addf %1270, %1295 : vector<8x128xf32>
    %1297 = arith.mulf %1288, %1292 : vector<8x128xf32>
    %1298 = arith.mulf %1291, %1290 : vector<8x128xf32>
    %1299 = arith.subf %1297, %1298 : vector<8x128xf32>
    %1300 = arith.addf %1296, %1299 : vector<8x128xf32>
    %1301 = arith.subf %936, %941 : vector<8x128xf32>
    %cst_241 = arith.constant 0.000000e+00 : f32
    %1302 = vector.broadcast %cst_241 : f32 to vector<8x128xf32>
    %1303 = arith.cmpf oeq, %1301, %1302 : vector<8x128xf32>
    %cst_242 = arith.constant 1.000000e+00 : f32
    %1304 = vector.broadcast %cst_242 : f32 to vector<8x128xf32>
    %1305 = arith.select %1303, %1304, %1301 : vector<8x128xi1>, vector<8x128xf32>
    %1306 = arith.divf %936, %1305 : vector<8x128xf32>
    %1307 = arith.subf %636, %633 : vector<8x128xf32>
    %1308 = arith.mulf %1306, %1307 : vector<8x128xf32>
    %1309 = arith.addf %633, %1308 : vector<8x128xf32>
    %1310 = arith.subf %637, %635 : vector<8x128xf32>
    %1311 = arith.mulf %1306, %1310 : vector<8x128xf32>
    %1312 = arith.addf %635, %1311 : vector<8x128xf32>
    %1313 = arith.andi %1075, %1077 : vector<8x128xi1>
    %cst_243 = arith.constant dense<true> : vector<8x128xi1>
    %1314 = arith.xori %1075, %cst_243 : vector<8x128xi1>
    %cst_244 = arith.constant dense<true> : vector<8x128xi1>
    %1315 = arith.xori %1077, %cst_244 : vector<8x128xi1>
    %1316 = arith.andi %1314, %1315 : vector<8x128xi1>
    %1317 = arith.select %1316, %23, %1309 : vector<8x128xi1>, vector<8x128xf32>
    %1318 = arith.select %1313, %633, %1317 : vector<8x128xi1>, vector<8x128xf32>
    %1319 = arith.select %1316, %31, %1312 : vector<8x128xi1>, vector<8x128xf32>
    %1320 = arith.select %1313, %635, %1319 : vector<8x128xi1>, vector<8x128xf32>
    %1321 = arith.select %1077, %636, %1318 : vector<8x128xi1>, vector<8x128xf32>
    %1322 = arith.select %1077, %637, %1320 : vector<8x128xi1>, vector<8x128xf32>
    %1323 = arith.mulf %1291, %1320 : vector<8x128xf32>
    %1324 = arith.mulf %1318, %1292 : vector<8x128xf32>
    %1325 = arith.subf %1323, %1324 : vector<8x128xf32>
    %1326 = arith.addf %1300, %1325 : vector<8x128xf32>
    %1327 = arith.mulf %1318, %1322 : vector<8x128xf32>
    %1328 = arith.mulf %1321, %1320 : vector<8x128xf32>
    %1329 = arith.subf %1327, %1328 : vector<8x128xf32>
    %1330 = arith.addf %1326, %1329 : vector<8x128xf32>
    %1331 = arith.subf %941, %946 : vector<8x128xf32>
    %cst_245 = arith.constant 0.000000e+00 : f32
    %1332 = vector.broadcast %cst_245 : f32 to vector<8x128xf32>
    %1333 = arith.cmpf oeq, %1331, %1332 : vector<8x128xf32>
    %cst_246 = arith.constant 1.000000e+00 : f32
    %1334 = vector.broadcast %cst_246 : f32 to vector<8x128xf32>
    %1335 = arith.select %1333, %1334, %1331 : vector<8x128xi1>, vector<8x128xf32>
    %1336 = arith.divf %941, %1335 : vector<8x128xf32>
    %1337 = arith.subf %655, %636 : vector<8x128xf32>
    %1338 = arith.mulf %1336, %1337 : vector<8x128xf32>
    %1339 = arith.addf %636, %1338 : vector<8x128xf32>
    %1340 = arith.subf %657, %637 : vector<8x128xf32>
    %1341 = arith.mulf %1336, %1340 : vector<8x128xf32>
    %1342 = arith.addf %637, %1341 : vector<8x128xf32>
    %1343 = arith.andi %1077, %1079 : vector<8x128xi1>
    %cst_247 = arith.constant dense<true> : vector<8x128xi1>
    %1344 = arith.xori %1077, %cst_247 : vector<8x128xi1>
    %cst_248 = arith.constant dense<true> : vector<8x128xi1>
    %1345 = arith.xori %1079, %cst_248 : vector<8x128xi1>
    %1346 = arith.andi %1344, %1345 : vector<8x128xi1>
    %1347 = arith.select %1346, %23, %1339 : vector<8x128xi1>, vector<8x128xf32>
    %1348 = arith.select %1343, %636, %1347 : vector<8x128xi1>, vector<8x128xf32>
    %1349 = arith.select %1346, %31, %1342 : vector<8x128xi1>, vector<8x128xf32>
    %1350 = arith.select %1343, %637, %1349 : vector<8x128xi1>, vector<8x128xf32>
    %1351 = arith.select %1079, %655, %1348 : vector<8x128xi1>, vector<8x128xf32>
    %1352 = arith.select %1079, %657, %1350 : vector<8x128xi1>, vector<8x128xf32>
    %1353 = arith.mulf %1321, %1350 : vector<8x128xf32>
    %1354 = arith.mulf %1348, %1322 : vector<8x128xf32>
    %1355 = arith.subf %1353, %1354 : vector<8x128xf32>
    %1356 = arith.addf %1330, %1355 : vector<8x128xf32>
    %1357 = arith.mulf %1348, %1352 : vector<8x128xf32>
    %1358 = arith.mulf %1351, %1350 : vector<8x128xf32>
    %1359 = arith.subf %1357, %1358 : vector<8x128xf32>
    %1360 = arith.addf %1356, %1359 : vector<8x128xf32>
    %1361 = arith.subf %946, %951 : vector<8x128xf32>
    %cst_249 = arith.constant 0.000000e+00 : f32
    %1362 = vector.broadcast %cst_249 : f32 to vector<8x128xf32>
    %1363 = arith.cmpf oeq, %1361, %1362 : vector<8x128xf32>
    %cst_250 = arith.constant 1.000000e+00 : f32
    %1364 = vector.broadcast %cst_250 : f32 to vector<8x128xf32>
    %1365 = arith.select %1363, %1364, %1361 : vector<8x128xi1>, vector<8x128xf32>
    %1366 = arith.divf %946, %1365 : vector<8x128xf32>
    %1367 = arith.subf %658, %655 : vector<8x128xf32>
    %1368 = arith.mulf %1366, %1367 : vector<8x128xf32>
    %1369 = arith.addf %655, %1368 : vector<8x128xf32>
    %1370 = arith.subf %659, %657 : vector<8x128xf32>
    %1371 = arith.mulf %1366, %1370 : vector<8x128xf32>
    %1372 = arith.addf %657, %1371 : vector<8x128xf32>
    %1373 = arith.andi %1079, %1081 : vector<8x128xi1>
    %cst_251 = arith.constant dense<true> : vector<8x128xi1>
    %1374 = arith.xori %1079, %cst_251 : vector<8x128xi1>
    %cst_252 = arith.constant dense<true> : vector<8x128xi1>
    %1375 = arith.xori %1081, %cst_252 : vector<8x128xi1>
    %1376 = arith.andi %1374, %1375 : vector<8x128xi1>
    %1377 = arith.select %1376, %23, %1369 : vector<8x128xi1>, vector<8x128xf32>
    %1378 = arith.select %1373, %655, %1377 : vector<8x128xi1>, vector<8x128xf32>
    %1379 = arith.select %1376, %31, %1372 : vector<8x128xi1>, vector<8x128xf32>
    %1380 = arith.select %1373, %657, %1379 : vector<8x128xi1>, vector<8x128xf32>
    %1381 = arith.select %1081, %658, %1378 : vector<8x128xi1>, vector<8x128xf32>
    %1382 = arith.select %1081, %659, %1380 : vector<8x128xi1>, vector<8x128xf32>
    %1383 = arith.mulf %1351, %1380 : vector<8x128xf32>
    %1384 = arith.mulf %1378, %1352 : vector<8x128xf32>
    %1385 = arith.subf %1383, %1384 : vector<8x128xf32>
    %1386 = arith.addf %1360, %1385 : vector<8x128xf32>
    %1387 = arith.mulf %1378, %1382 : vector<8x128xf32>
    %1388 = arith.mulf %1381, %1380 : vector<8x128xf32>
    %1389 = arith.subf %1387, %1388 : vector<8x128xf32>
    %1390 = arith.addf %1386, %1389 : vector<8x128xf32>
    %1391 = arith.subf %951, %956 : vector<8x128xf32>
    %cst_253 = arith.constant 0.000000e+00 : f32
    %1392 = vector.broadcast %cst_253 : f32 to vector<8x128xf32>
    %1393 = arith.cmpf oeq, %1391, %1392 : vector<8x128xf32>
    %cst_254 = arith.constant 1.000000e+00 : f32
    %1394 = vector.broadcast %cst_254 : f32 to vector<8x128xf32>
    %1395 = arith.select %1393, %1394, %1391 : vector<8x128xi1>, vector<8x128xf32>
    %1396 = arith.divf %951, %1395 : vector<8x128xf32>
    %1397 = arith.subf %677, %658 : vector<8x128xf32>
    %1398 = arith.mulf %1396, %1397 : vector<8x128xf32>
    %1399 = arith.addf %658, %1398 : vector<8x128xf32>
    %1400 = arith.subf %679, %659 : vector<8x128xf32>
    %1401 = arith.mulf %1396, %1400 : vector<8x128xf32>
    %1402 = arith.addf %659, %1401 : vector<8x128xf32>
    %1403 = arith.andi %1081, %1083 : vector<8x128xi1>
    %cst_255 = arith.constant dense<true> : vector<8x128xi1>
    %1404 = arith.xori %1081, %cst_255 : vector<8x128xi1>
    %cst_256 = arith.constant dense<true> : vector<8x128xi1>
    %1405 = arith.xori %1083, %cst_256 : vector<8x128xi1>
    %1406 = arith.andi %1404, %1405 : vector<8x128xi1>
    %1407 = arith.select %1406, %23, %1399 : vector<8x128xi1>, vector<8x128xf32>
    %1408 = arith.select %1403, %658, %1407 : vector<8x128xi1>, vector<8x128xf32>
    %1409 = arith.select %1406, %31, %1402 : vector<8x128xi1>, vector<8x128xf32>
    %1410 = arith.select %1403, %659, %1409 : vector<8x128xi1>, vector<8x128xf32>
    %1411 = arith.select %1083, %677, %1408 : vector<8x128xi1>, vector<8x128xf32>
    %1412 = arith.select %1083, %679, %1410 : vector<8x128xi1>, vector<8x128xf32>
    %1413 = arith.mulf %1381, %1410 : vector<8x128xf32>
    %1414 = arith.mulf %1408, %1382 : vector<8x128xf32>
    %1415 = arith.subf %1413, %1414 : vector<8x128xf32>
    %1416 = arith.addf %1390, %1415 : vector<8x128xf32>
    %1417 = arith.mulf %1408, %1412 : vector<8x128xf32>
    %1418 = arith.mulf %1411, %1410 : vector<8x128xf32>
    %1419 = arith.subf %1417, %1418 : vector<8x128xf32>
    %1420 = arith.addf %1416, %1419 : vector<8x128xf32>
    %1421 = arith.subf %956, %961 : vector<8x128xf32>
    %cst_257 = arith.constant 0.000000e+00 : f32
    %1422 = vector.broadcast %cst_257 : f32 to vector<8x128xf32>
    %1423 = arith.cmpf oeq, %1421, %1422 : vector<8x128xf32>
    %cst_258 = arith.constant 1.000000e+00 : f32
    %1424 = vector.broadcast %cst_258 : f32 to vector<8x128xf32>
    %1425 = arith.select %1423, %1424, %1421 : vector<8x128xi1>, vector<8x128xf32>
    %1426 = arith.divf %956, %1425 : vector<8x128xf32>
    %1427 = arith.subf %680, %677 : vector<8x128xf32>
    %1428 = arith.mulf %1426, %1427 : vector<8x128xf32>
    %1429 = arith.addf %677, %1428 : vector<8x128xf32>
    %1430 = arith.subf %681, %679 : vector<8x128xf32>
    %1431 = arith.mulf %1426, %1430 : vector<8x128xf32>
    %1432 = arith.addf %679, %1431 : vector<8x128xf32>
    %1433 = arith.andi %1083, %1085 : vector<8x128xi1>
    %cst_259 = arith.constant dense<true> : vector<8x128xi1>
    %1434 = arith.xori %1083, %cst_259 : vector<8x128xi1>
    %cst_260 = arith.constant dense<true> : vector<8x128xi1>
    %1435 = arith.xori %1085, %cst_260 : vector<8x128xi1>
    %1436 = arith.andi %1434, %1435 : vector<8x128xi1>
    %1437 = arith.select %1436, %23, %1429 : vector<8x128xi1>, vector<8x128xf32>
    %1438 = arith.select %1433, %677, %1437 : vector<8x128xi1>, vector<8x128xf32>
    %1439 = arith.select %1436, %31, %1432 : vector<8x128xi1>, vector<8x128xf32>
    %1440 = arith.select %1433, %679, %1439 : vector<8x128xi1>, vector<8x128xf32>
    %1441 = arith.select %1085, %680, %1438 : vector<8x128xi1>, vector<8x128xf32>
    %1442 = arith.select %1085, %681, %1440 : vector<8x128xi1>, vector<8x128xf32>
    %1443 = arith.mulf %1411, %1440 : vector<8x128xf32>
    %1444 = arith.mulf %1438, %1412 : vector<8x128xf32>
    %1445 = arith.subf %1443, %1444 : vector<8x128xf32>
    %1446 = arith.addf %1420, %1445 : vector<8x128xf32>
    %1447 = arith.mulf %1438, %1442 : vector<8x128xf32>
    %1448 = arith.mulf %1441, %1440 : vector<8x128xf32>
    %1449 = arith.subf %1447, %1448 : vector<8x128xf32>
    %1450 = arith.addf %1446, %1449 : vector<8x128xf32>
    %1451 = arith.subf %961, %966 : vector<8x128xf32>
    %cst_261 = arith.constant 0.000000e+00 : f32
    %1452 = vector.broadcast %cst_261 : f32 to vector<8x128xf32>
    %1453 = arith.cmpf oeq, %1451, %1452 : vector<8x128xf32>
    %cst_262 = arith.constant 1.000000e+00 : f32
    %1454 = vector.broadcast %cst_262 : f32 to vector<8x128xf32>
    %1455 = arith.select %1453, %1454, %1451 : vector<8x128xi1>, vector<8x128xf32>
    %1456 = arith.divf %961, %1455 : vector<8x128xf32>
    %1457 = arith.subf %699, %680 : vector<8x128xf32>
    %1458 = arith.mulf %1456, %1457 : vector<8x128xf32>
    %1459 = arith.addf %680, %1458 : vector<8x128xf32>
    %1460 = arith.subf %701, %681 : vector<8x128xf32>
    %1461 = arith.mulf %1456, %1460 : vector<8x128xf32>
    %1462 = arith.addf %681, %1461 : vector<8x128xf32>
    %1463 = arith.andi %1085, %1087 : vector<8x128xi1>
    %cst_263 = arith.constant dense<true> : vector<8x128xi1>
    %1464 = arith.xori %1085, %cst_263 : vector<8x128xi1>
    %cst_264 = arith.constant dense<true> : vector<8x128xi1>
    %1465 = arith.xori %1087, %cst_264 : vector<8x128xi1>
    %1466 = arith.andi %1464, %1465 : vector<8x128xi1>
    %1467 = arith.select %1466, %23, %1459 : vector<8x128xi1>, vector<8x128xf32>
    %1468 = arith.select %1463, %680, %1467 : vector<8x128xi1>, vector<8x128xf32>
    %1469 = arith.select %1466, %31, %1462 : vector<8x128xi1>, vector<8x128xf32>
    %1470 = arith.select %1463, %681, %1469 : vector<8x128xi1>, vector<8x128xf32>
    %1471 = arith.select %1087, %699, %1468 : vector<8x128xi1>, vector<8x128xf32>
    %1472 = arith.select %1087, %701, %1470 : vector<8x128xi1>, vector<8x128xf32>
    %1473 = arith.mulf %1441, %1470 : vector<8x128xf32>
    %1474 = arith.mulf %1468, %1442 : vector<8x128xf32>
    %1475 = arith.subf %1473, %1474 : vector<8x128xf32>
    %1476 = arith.addf %1450, %1475 : vector<8x128xf32>
    %1477 = arith.mulf %1468, %1472 : vector<8x128xf32>
    %1478 = arith.mulf %1471, %1470 : vector<8x128xf32>
    %1479 = arith.subf %1477, %1478 : vector<8x128xf32>
    %1480 = arith.addf %1476, %1479 : vector<8x128xf32>
    %1481 = arith.subf %966, %971 : vector<8x128xf32>
    %cst_265 = arith.constant 0.000000e+00 : f32
    %1482 = vector.broadcast %cst_265 : f32 to vector<8x128xf32>
    %1483 = arith.cmpf oeq, %1481, %1482 : vector<8x128xf32>
    %cst_266 = arith.constant 1.000000e+00 : f32
    %1484 = vector.broadcast %cst_266 : f32 to vector<8x128xf32>
    %1485 = arith.select %1483, %1484, %1481 : vector<8x128xi1>, vector<8x128xf32>
    %1486 = arith.divf %966, %1485 : vector<8x128xf32>
    %1487 = arith.subf %702, %699 : vector<8x128xf32>
    %1488 = arith.mulf %1486, %1487 : vector<8x128xf32>
    %1489 = arith.addf %699, %1488 : vector<8x128xf32>
    %1490 = arith.subf %703, %701 : vector<8x128xf32>
    %1491 = arith.mulf %1486, %1490 : vector<8x128xf32>
    %1492 = arith.addf %701, %1491 : vector<8x128xf32>
    %1493 = arith.andi %1087, %1089 : vector<8x128xi1>
    %cst_267 = arith.constant dense<true> : vector<8x128xi1>
    %1494 = arith.xori %1087, %cst_267 : vector<8x128xi1>
    %cst_268 = arith.constant dense<true> : vector<8x128xi1>
    %1495 = arith.xori %1089, %cst_268 : vector<8x128xi1>
    %1496 = arith.andi %1494, %1495 : vector<8x128xi1>
    %1497 = arith.select %1496, %23, %1489 : vector<8x128xi1>, vector<8x128xf32>
    %1498 = arith.select %1493, %699, %1497 : vector<8x128xi1>, vector<8x128xf32>
    %1499 = arith.select %1496, %31, %1492 : vector<8x128xi1>, vector<8x128xf32>
    %1500 = arith.select %1493, %701, %1499 : vector<8x128xi1>, vector<8x128xf32>
    %1501 = arith.select %1089, %702, %1498 : vector<8x128xi1>, vector<8x128xf32>
    %1502 = arith.select %1089, %703, %1500 : vector<8x128xi1>, vector<8x128xf32>
    %1503 = arith.mulf %1471, %1500 : vector<8x128xf32>
    %1504 = arith.mulf %1498, %1472 : vector<8x128xf32>
    %1505 = arith.subf %1503, %1504 : vector<8x128xf32>
    %1506 = arith.addf %1480, %1505 : vector<8x128xf32>
    %1507 = arith.mulf %1498, %1502 : vector<8x128xf32>
    %1508 = arith.mulf %1501, %1500 : vector<8x128xf32>
    %1509 = arith.subf %1507, %1508 : vector<8x128xf32>
    %1510 = arith.addf %1506, %1509 : vector<8x128xf32>
    %1511 = arith.subf %971, %976 : vector<8x128xf32>
    %cst_269 = arith.constant 0.000000e+00 : f32
    %1512 = vector.broadcast %cst_269 : f32 to vector<8x128xf32>
    %1513 = arith.cmpf oeq, %1511, %1512 : vector<8x128xf32>
    %cst_270 = arith.constant 1.000000e+00 : f32
    %1514 = vector.broadcast %cst_270 : f32 to vector<8x128xf32>
    %1515 = arith.select %1513, %1514, %1511 : vector<8x128xi1>, vector<8x128xf32>
    %1516 = arith.divf %971, %1515 : vector<8x128xf32>
    %1517 = arith.subf %721, %702 : vector<8x128xf32>
    %1518 = arith.mulf %1516, %1517 : vector<8x128xf32>
    %1519 = arith.addf %702, %1518 : vector<8x128xf32>
    %1520 = arith.subf %723, %703 : vector<8x128xf32>
    %1521 = arith.mulf %1516, %1520 : vector<8x128xf32>
    %1522 = arith.addf %703, %1521 : vector<8x128xf32>
    %1523 = arith.andi %1089, %1091 : vector<8x128xi1>
    %cst_271 = arith.constant dense<true> : vector<8x128xi1>
    %1524 = arith.xori %1089, %cst_271 : vector<8x128xi1>
    %cst_272 = arith.constant dense<true> : vector<8x128xi1>
    %1525 = arith.xori %1091, %cst_272 : vector<8x128xi1>
    %1526 = arith.andi %1524, %1525 : vector<8x128xi1>
    %1527 = arith.select %1526, %23, %1519 : vector<8x128xi1>, vector<8x128xf32>
    %1528 = arith.select %1523, %702, %1527 : vector<8x128xi1>, vector<8x128xf32>
    %1529 = arith.select %1526, %31, %1522 : vector<8x128xi1>, vector<8x128xf32>
    %1530 = arith.select %1523, %703, %1529 : vector<8x128xi1>, vector<8x128xf32>
    %1531 = arith.select %1091, %721, %1528 : vector<8x128xi1>, vector<8x128xf32>
    %1532 = arith.select %1091, %723, %1530 : vector<8x128xi1>, vector<8x128xf32>
    %1533 = arith.mulf %1501, %1530 : vector<8x128xf32>
    %1534 = arith.mulf %1528, %1502 : vector<8x128xf32>
    %1535 = arith.subf %1533, %1534 : vector<8x128xf32>
    %1536 = arith.addf %1510, %1535 : vector<8x128xf32>
    %1537 = arith.mulf %1528, %1532 : vector<8x128xf32>
    %1538 = arith.mulf %1531, %1530 : vector<8x128xf32>
    %1539 = arith.subf %1537, %1538 : vector<8x128xf32>
    %1540 = arith.addf %1536, %1539 : vector<8x128xf32>
    %1541 = arith.subf %976, %981 : vector<8x128xf32>
    %cst_273 = arith.constant 0.000000e+00 : f32
    %1542 = vector.broadcast %cst_273 : f32 to vector<8x128xf32>
    %1543 = arith.cmpf oeq, %1541, %1542 : vector<8x128xf32>
    %cst_274 = arith.constant 1.000000e+00 : f32
    %1544 = vector.broadcast %cst_274 : f32 to vector<8x128xf32>
    %1545 = arith.select %1543, %1544, %1541 : vector<8x128xi1>, vector<8x128xf32>
    %1546 = arith.divf %976, %1545 : vector<8x128xf32>
    %1547 = arith.subf %724, %721 : vector<8x128xf32>
    %1548 = arith.mulf %1546, %1547 : vector<8x128xf32>
    %1549 = arith.addf %721, %1548 : vector<8x128xf32>
    %1550 = arith.subf %725, %723 : vector<8x128xf32>
    %1551 = arith.mulf %1546, %1550 : vector<8x128xf32>
    %1552 = arith.addf %723, %1551 : vector<8x128xf32>
    %1553 = arith.andi %1091, %1093 : vector<8x128xi1>
    %cst_275 = arith.constant dense<true> : vector<8x128xi1>
    %1554 = arith.xori %1091, %cst_275 : vector<8x128xi1>
    %cst_276 = arith.constant dense<true> : vector<8x128xi1>
    %1555 = arith.xori %1093, %cst_276 : vector<8x128xi1>
    %1556 = arith.andi %1554, %1555 : vector<8x128xi1>
    %1557 = arith.select %1556, %23, %1549 : vector<8x128xi1>, vector<8x128xf32>
    %1558 = arith.select %1553, %721, %1557 : vector<8x128xi1>, vector<8x128xf32>
    %1559 = arith.select %1556, %31, %1552 : vector<8x128xi1>, vector<8x128xf32>
    %1560 = arith.select %1553, %723, %1559 : vector<8x128xi1>, vector<8x128xf32>
    %1561 = arith.select %1093, %724, %1558 : vector<8x128xi1>, vector<8x128xf32>
    %1562 = arith.select %1093, %725, %1560 : vector<8x128xi1>, vector<8x128xf32>
    %1563 = arith.mulf %1531, %1560 : vector<8x128xf32>
    %1564 = arith.mulf %1558, %1532 : vector<8x128xf32>
    %1565 = arith.subf %1563, %1564 : vector<8x128xf32>
    %1566 = arith.addf %1540, %1565 : vector<8x128xf32>
    %1567 = arith.mulf %1558, %1562 : vector<8x128xf32>
    %1568 = arith.mulf %1561, %1560 : vector<8x128xf32>
    %1569 = arith.subf %1567, %1568 : vector<8x128xf32>
    %1570 = arith.addf %1566, %1569 : vector<8x128xf32>
    %1571 = arith.subf %981, %986 : vector<8x128xf32>
    %cst_277 = arith.constant 0.000000e+00 : f32
    %1572 = vector.broadcast %cst_277 : f32 to vector<8x128xf32>
    %1573 = arith.cmpf oeq, %1571, %1572 : vector<8x128xf32>
    %cst_278 = arith.constant 1.000000e+00 : f32
    %1574 = vector.broadcast %cst_278 : f32 to vector<8x128xf32>
    %1575 = arith.select %1573, %1574, %1571 : vector<8x128xi1>, vector<8x128xf32>
    %1576 = arith.divf %981, %1575 : vector<8x128xf32>
    %1577 = arith.subf %743, %724 : vector<8x128xf32>
    %1578 = arith.mulf %1576, %1577 : vector<8x128xf32>
    %1579 = arith.addf %724, %1578 : vector<8x128xf32>
    %1580 = arith.subf %745, %725 : vector<8x128xf32>
    %1581 = arith.mulf %1576, %1580 : vector<8x128xf32>
    %1582 = arith.addf %725, %1581 : vector<8x128xf32>
    %1583 = arith.andi %1093, %1095 : vector<8x128xi1>
    %cst_279 = arith.constant dense<true> : vector<8x128xi1>
    %1584 = arith.xori %1093, %cst_279 : vector<8x128xi1>
    %cst_280 = arith.constant dense<true> : vector<8x128xi1>
    %1585 = arith.xori %1095, %cst_280 : vector<8x128xi1>
    %1586 = arith.andi %1584, %1585 : vector<8x128xi1>
    %1587 = arith.select %1586, %23, %1579 : vector<8x128xi1>, vector<8x128xf32>
    %1588 = arith.select %1583, %724, %1587 : vector<8x128xi1>, vector<8x128xf32>
    %1589 = arith.select %1586, %31, %1582 : vector<8x128xi1>, vector<8x128xf32>
    %1590 = arith.select %1583, %725, %1589 : vector<8x128xi1>, vector<8x128xf32>
    %1591 = arith.select %1095, %743, %1588 : vector<8x128xi1>, vector<8x128xf32>
    %1592 = arith.select %1095, %745, %1590 : vector<8x128xi1>, vector<8x128xf32>
    %1593 = arith.mulf %1561, %1590 : vector<8x128xf32>
    %1594 = arith.mulf %1588, %1562 : vector<8x128xf32>
    %1595 = arith.subf %1593, %1594 : vector<8x128xf32>
    %1596 = arith.addf %1570, %1595 : vector<8x128xf32>
    %1597 = arith.mulf %1588, %1592 : vector<8x128xf32>
    %1598 = arith.mulf %1591, %1590 : vector<8x128xf32>
    %1599 = arith.subf %1597, %1598 : vector<8x128xf32>
    %1600 = arith.addf %1596, %1599 : vector<8x128xf32>
    %1601 = arith.subf %986, %991 : vector<8x128xf32>
    %cst_281 = arith.constant 0.000000e+00 : f32
    %1602 = vector.broadcast %cst_281 : f32 to vector<8x128xf32>
    %1603 = arith.cmpf oeq, %1601, %1602 : vector<8x128xf32>
    %cst_282 = arith.constant 1.000000e+00 : f32
    %1604 = vector.broadcast %cst_282 : f32 to vector<8x128xf32>
    %1605 = arith.select %1603, %1604, %1601 : vector<8x128xi1>, vector<8x128xf32>
    %1606 = arith.divf %986, %1605 : vector<8x128xf32>
    %1607 = arith.subf %746, %743 : vector<8x128xf32>
    %1608 = arith.mulf %1606, %1607 : vector<8x128xf32>
    %1609 = arith.addf %743, %1608 : vector<8x128xf32>
    %1610 = arith.subf %747, %745 : vector<8x128xf32>
    %1611 = arith.mulf %1606, %1610 : vector<8x128xf32>
    %1612 = arith.addf %745, %1611 : vector<8x128xf32>
    %1613 = arith.andi %1095, %1097 : vector<8x128xi1>
    %cst_283 = arith.constant dense<true> : vector<8x128xi1>
    %1614 = arith.xori %1095, %cst_283 : vector<8x128xi1>
    %cst_284 = arith.constant dense<true> : vector<8x128xi1>
    %1615 = arith.xori %1097, %cst_284 : vector<8x128xi1>
    %1616 = arith.andi %1614, %1615 : vector<8x128xi1>
    %1617 = arith.select %1616, %23, %1609 : vector<8x128xi1>, vector<8x128xf32>
    %1618 = arith.select %1613, %743, %1617 : vector<8x128xi1>, vector<8x128xf32>
    %1619 = arith.select %1616, %31, %1612 : vector<8x128xi1>, vector<8x128xf32>
    %1620 = arith.select %1613, %745, %1619 : vector<8x128xi1>, vector<8x128xf32>
    %1621 = arith.select %1097, %746, %1618 : vector<8x128xi1>, vector<8x128xf32>
    %1622 = arith.select %1097, %747, %1620 : vector<8x128xi1>, vector<8x128xf32>
    %1623 = arith.mulf %1591, %1620 : vector<8x128xf32>
    %1624 = arith.mulf %1618, %1592 : vector<8x128xf32>
    %1625 = arith.subf %1623, %1624 : vector<8x128xf32>
    %1626 = arith.addf %1600, %1625 : vector<8x128xf32>
    %1627 = arith.mulf %1618, %1622 : vector<8x128xf32>
    %1628 = arith.mulf %1621, %1620 : vector<8x128xf32>
    %1629 = arith.subf %1627, %1628 : vector<8x128xf32>
    %1630 = arith.addf %1626, %1629 : vector<8x128xf32>
    %1631 = arith.subf %991, %996 : vector<8x128xf32>
    %cst_285 = arith.constant 0.000000e+00 : f32
    %1632 = vector.broadcast %cst_285 : f32 to vector<8x128xf32>
    %1633 = arith.cmpf oeq, %1631, %1632 : vector<8x128xf32>
    %cst_286 = arith.constant 1.000000e+00 : f32
    %1634 = vector.broadcast %cst_286 : f32 to vector<8x128xf32>
    %1635 = arith.select %1633, %1634, %1631 : vector<8x128xi1>, vector<8x128xf32>
    %1636 = arith.divf %991, %1635 : vector<8x128xf32>
    %1637 = arith.subf %765, %746 : vector<8x128xf32>
    %1638 = arith.mulf %1636, %1637 : vector<8x128xf32>
    %1639 = arith.addf %746, %1638 : vector<8x128xf32>
    %1640 = arith.subf %767, %747 : vector<8x128xf32>
    %1641 = arith.mulf %1636, %1640 : vector<8x128xf32>
    %1642 = arith.addf %747, %1641 : vector<8x128xf32>
    %1643 = arith.andi %1097, %1099 : vector<8x128xi1>
    %cst_287 = arith.constant dense<true> : vector<8x128xi1>
    %1644 = arith.xori %1097, %cst_287 : vector<8x128xi1>
    %cst_288 = arith.constant dense<true> : vector<8x128xi1>
    %1645 = arith.xori %1099, %cst_288 : vector<8x128xi1>
    %1646 = arith.andi %1644, %1645 : vector<8x128xi1>
    %1647 = arith.select %1646, %23, %1639 : vector<8x128xi1>, vector<8x128xf32>
    %1648 = arith.select %1643, %746, %1647 : vector<8x128xi1>, vector<8x128xf32>
    %1649 = arith.select %1646, %31, %1642 : vector<8x128xi1>, vector<8x128xf32>
    %1650 = arith.select %1643, %747, %1649 : vector<8x128xi1>, vector<8x128xf32>
    %1651 = arith.select %1099, %765, %1648 : vector<8x128xi1>, vector<8x128xf32>
    %1652 = arith.select %1099, %767, %1650 : vector<8x128xi1>, vector<8x128xf32>
    %1653 = arith.mulf %1621, %1650 : vector<8x128xf32>
    %1654 = arith.mulf %1648, %1622 : vector<8x128xf32>
    %1655 = arith.subf %1653, %1654 : vector<8x128xf32>
    %1656 = arith.addf %1630, %1655 : vector<8x128xf32>
    %1657 = arith.mulf %1648, %1652 : vector<8x128xf32>
    %1658 = arith.mulf %1651, %1650 : vector<8x128xf32>
    %1659 = arith.subf %1657, %1658 : vector<8x128xf32>
    %1660 = arith.addf %1656, %1659 : vector<8x128xf32>
    %1661 = arith.subf %996, %1001 : vector<8x128xf32>
    %cst_289 = arith.constant 0.000000e+00 : f32
    %1662 = vector.broadcast %cst_289 : f32 to vector<8x128xf32>
    %1663 = arith.cmpf oeq, %1661, %1662 : vector<8x128xf32>
    %cst_290 = arith.constant 1.000000e+00 : f32
    %1664 = vector.broadcast %cst_290 : f32 to vector<8x128xf32>
    %1665 = arith.select %1663, %1664, %1661 : vector<8x128xi1>, vector<8x128xf32>
    %1666 = arith.divf %996, %1665 : vector<8x128xf32>
    %1667 = arith.subf %768, %765 : vector<8x128xf32>
    %1668 = arith.mulf %1666, %1667 : vector<8x128xf32>
    %1669 = arith.addf %765, %1668 : vector<8x128xf32>
    %1670 = arith.subf %769, %767 : vector<8x128xf32>
    %1671 = arith.mulf %1666, %1670 : vector<8x128xf32>
    %1672 = arith.addf %767, %1671 : vector<8x128xf32>
    %1673 = arith.andi %1099, %1101 : vector<8x128xi1>
    %cst_291 = arith.constant dense<true> : vector<8x128xi1>
    %1674 = arith.xori %1099, %cst_291 : vector<8x128xi1>
    %cst_292 = arith.constant dense<true> : vector<8x128xi1>
    %1675 = arith.xori %1101, %cst_292 : vector<8x128xi1>
    %1676 = arith.andi %1674, %1675 : vector<8x128xi1>
    %1677 = arith.select %1676, %23, %1669 : vector<8x128xi1>, vector<8x128xf32>
    %1678 = arith.select %1673, %765, %1677 : vector<8x128xi1>, vector<8x128xf32>
    %1679 = arith.select %1676, %31, %1672 : vector<8x128xi1>, vector<8x128xf32>
    %1680 = arith.select %1673, %767, %1679 : vector<8x128xi1>, vector<8x128xf32>
    %1681 = arith.select %1101, %768, %1678 : vector<8x128xi1>, vector<8x128xf32>
    %1682 = arith.select %1101, %769, %1680 : vector<8x128xi1>, vector<8x128xf32>
    %1683 = arith.mulf %1651, %1680 : vector<8x128xf32>
    %1684 = arith.mulf %1678, %1652 : vector<8x128xf32>
    %1685 = arith.subf %1683, %1684 : vector<8x128xf32>
    %1686 = arith.addf %1660, %1685 : vector<8x128xf32>
    %1687 = arith.mulf %1678, %1682 : vector<8x128xf32>
    %1688 = arith.mulf %1681, %1680 : vector<8x128xf32>
    %1689 = arith.subf %1687, %1688 : vector<8x128xf32>
    %1690 = arith.addf %1686, %1689 : vector<8x128xf32>
    %1691 = arith.subf %1001, %1006 : vector<8x128xf32>
    %cst_293 = arith.constant 0.000000e+00 : f32
    %1692 = vector.broadcast %cst_293 : f32 to vector<8x128xf32>
    %1693 = arith.cmpf oeq, %1691, %1692 : vector<8x128xf32>
    %cst_294 = arith.constant 1.000000e+00 : f32
    %1694 = vector.broadcast %cst_294 : f32 to vector<8x128xf32>
    %1695 = arith.select %1693, %1694, %1691 : vector<8x128xi1>, vector<8x128xf32>
    %1696 = arith.divf %1001, %1695 : vector<8x128xf32>
    %1697 = arith.subf %787, %768 : vector<8x128xf32>
    %1698 = arith.mulf %1696, %1697 : vector<8x128xf32>
    %1699 = arith.addf %768, %1698 : vector<8x128xf32>
    %1700 = arith.subf %789, %769 : vector<8x128xf32>
    %1701 = arith.mulf %1696, %1700 : vector<8x128xf32>
    %1702 = arith.addf %769, %1701 : vector<8x128xf32>
    %1703 = arith.andi %1101, %1103 : vector<8x128xi1>
    %cst_295 = arith.constant dense<true> : vector<8x128xi1>
    %1704 = arith.xori %1101, %cst_295 : vector<8x128xi1>
    %cst_296 = arith.constant dense<true> : vector<8x128xi1>
    %1705 = arith.xori %1103, %cst_296 : vector<8x128xi1>
    %1706 = arith.andi %1704, %1705 : vector<8x128xi1>
    %1707 = arith.select %1706, %23, %1699 : vector<8x128xi1>, vector<8x128xf32>
    %1708 = arith.select %1703, %768, %1707 : vector<8x128xi1>, vector<8x128xf32>
    %1709 = arith.select %1706, %31, %1702 : vector<8x128xi1>, vector<8x128xf32>
    %1710 = arith.select %1703, %769, %1709 : vector<8x128xi1>, vector<8x128xf32>
    %1711 = arith.select %1103, %787, %1708 : vector<8x128xi1>, vector<8x128xf32>
    %1712 = arith.select %1103, %789, %1710 : vector<8x128xi1>, vector<8x128xf32>
    %1713 = arith.mulf %1681, %1710 : vector<8x128xf32>
    %1714 = arith.mulf %1708, %1682 : vector<8x128xf32>
    %1715 = arith.subf %1713, %1714 : vector<8x128xf32>
    %1716 = arith.addf %1690, %1715 : vector<8x128xf32>
    %1717 = arith.mulf %1708, %1712 : vector<8x128xf32>
    %1718 = arith.mulf %1711, %1710 : vector<8x128xf32>
    %1719 = arith.subf %1717, %1718 : vector<8x128xf32>
    %1720 = arith.addf %1716, %1719 : vector<8x128xf32>
    %1721 = arith.subf %1006, %1011 : vector<8x128xf32>
    %cst_297 = arith.constant 0.000000e+00 : f32
    %1722 = vector.broadcast %cst_297 : f32 to vector<8x128xf32>
    %1723 = arith.cmpf oeq, %1721, %1722 : vector<8x128xf32>
    %cst_298 = arith.constant 1.000000e+00 : f32
    %1724 = vector.broadcast %cst_298 : f32 to vector<8x128xf32>
    %1725 = arith.select %1723, %1724, %1721 : vector<8x128xi1>, vector<8x128xf32>
    %1726 = arith.divf %1006, %1725 : vector<8x128xf32>
    %1727 = arith.subf %790, %787 : vector<8x128xf32>
    %1728 = arith.mulf %1726, %1727 : vector<8x128xf32>
    %1729 = arith.addf %787, %1728 : vector<8x128xf32>
    %1730 = arith.subf %791, %789 : vector<8x128xf32>
    %1731 = arith.mulf %1726, %1730 : vector<8x128xf32>
    %1732 = arith.addf %789, %1731 : vector<8x128xf32>
    %1733 = arith.andi %1103, %1105 : vector<8x128xi1>
    %cst_299 = arith.constant dense<true> : vector<8x128xi1>
    %1734 = arith.xori %1103, %cst_299 : vector<8x128xi1>
    %cst_300 = arith.constant dense<true> : vector<8x128xi1>
    %1735 = arith.xori %1105, %cst_300 : vector<8x128xi1>
    %1736 = arith.andi %1734, %1735 : vector<8x128xi1>
    %1737 = arith.select %1736, %23, %1729 : vector<8x128xi1>, vector<8x128xf32>
    %1738 = arith.select %1733, %787, %1737 : vector<8x128xi1>, vector<8x128xf32>
    %1739 = arith.select %1736, %31, %1732 : vector<8x128xi1>, vector<8x128xf32>
    %1740 = arith.select %1733, %789, %1739 : vector<8x128xi1>, vector<8x128xf32>
    %1741 = arith.select %1105, %790, %1738 : vector<8x128xi1>, vector<8x128xf32>
    %1742 = arith.select %1105, %791, %1740 : vector<8x128xi1>, vector<8x128xf32>
    %1743 = arith.mulf %1711, %1740 : vector<8x128xf32>
    %1744 = arith.mulf %1738, %1712 : vector<8x128xf32>
    %1745 = arith.subf %1743, %1744 : vector<8x128xf32>
    %1746 = arith.addf %1720, %1745 : vector<8x128xf32>
    %1747 = arith.mulf %1738, %1742 : vector<8x128xf32>
    %1748 = arith.mulf %1741, %1740 : vector<8x128xf32>
    %1749 = arith.subf %1747, %1748 : vector<8x128xf32>
    %1750 = arith.addf %1746, %1749 : vector<8x128xf32>
    %1751 = arith.subf %1011, %1016 : vector<8x128xf32>
    %cst_301 = arith.constant 0.000000e+00 : f32
    %1752 = vector.broadcast %cst_301 : f32 to vector<8x128xf32>
    %1753 = arith.cmpf oeq, %1751, %1752 : vector<8x128xf32>
    %cst_302 = arith.constant 1.000000e+00 : f32
    %1754 = vector.broadcast %cst_302 : f32 to vector<8x128xf32>
    %1755 = arith.select %1753, %1754, %1751 : vector<8x128xi1>, vector<8x128xf32>
    %1756 = arith.divf %1011, %1755 : vector<8x128xf32>
    %1757 = arith.subf %809, %790 : vector<8x128xf32>
    %1758 = arith.mulf %1756, %1757 : vector<8x128xf32>
    %1759 = arith.addf %790, %1758 : vector<8x128xf32>
    %1760 = arith.subf %811, %791 : vector<8x128xf32>
    %1761 = arith.mulf %1756, %1760 : vector<8x128xf32>
    %1762 = arith.addf %791, %1761 : vector<8x128xf32>
    %1763 = arith.andi %1105, %1107 : vector<8x128xi1>
    %cst_303 = arith.constant dense<true> : vector<8x128xi1>
    %1764 = arith.xori %1105, %cst_303 : vector<8x128xi1>
    %cst_304 = arith.constant dense<true> : vector<8x128xi1>
    %1765 = arith.xori %1107, %cst_304 : vector<8x128xi1>
    %1766 = arith.andi %1764, %1765 : vector<8x128xi1>
    %1767 = arith.select %1766, %23, %1759 : vector<8x128xi1>, vector<8x128xf32>
    %1768 = arith.select %1763, %790, %1767 : vector<8x128xi1>, vector<8x128xf32>
    %1769 = arith.select %1766, %31, %1762 : vector<8x128xi1>, vector<8x128xf32>
    %1770 = arith.select %1763, %791, %1769 : vector<8x128xi1>, vector<8x128xf32>
    %1771 = arith.select %1107, %809, %1768 : vector<8x128xi1>, vector<8x128xf32>
    %1772 = arith.select %1107, %811, %1770 : vector<8x128xi1>, vector<8x128xf32>
    %1773 = arith.mulf %1741, %1770 : vector<8x128xf32>
    %1774 = arith.mulf %1768, %1742 : vector<8x128xf32>
    %1775 = arith.subf %1773, %1774 : vector<8x128xf32>
    %1776 = arith.addf %1750, %1775 : vector<8x128xf32>
    %1777 = arith.mulf %1768, %1772 : vector<8x128xf32>
    %1778 = arith.mulf %1771, %1770 : vector<8x128xf32>
    %1779 = arith.subf %1777, %1778 : vector<8x128xf32>
    %1780 = arith.addf %1776, %1779 : vector<8x128xf32>
    %1781 = arith.subf %1016, %1021 : vector<8x128xf32>
    %cst_305 = arith.constant 0.000000e+00 : f32
    %1782 = vector.broadcast %cst_305 : f32 to vector<8x128xf32>
    %1783 = arith.cmpf oeq, %1781, %1782 : vector<8x128xf32>
    %cst_306 = arith.constant 1.000000e+00 : f32
    %1784 = vector.broadcast %cst_306 : f32 to vector<8x128xf32>
    %1785 = arith.select %1783, %1784, %1781 : vector<8x128xi1>, vector<8x128xf32>
    %1786 = arith.divf %1016, %1785 : vector<8x128xf32>
    %1787 = arith.subf %812, %809 : vector<8x128xf32>
    %1788 = arith.mulf %1786, %1787 : vector<8x128xf32>
    %1789 = arith.addf %809, %1788 : vector<8x128xf32>
    %1790 = arith.subf %813, %811 : vector<8x128xf32>
    %1791 = arith.mulf %1786, %1790 : vector<8x128xf32>
    %1792 = arith.addf %811, %1791 : vector<8x128xf32>
    %1793 = arith.andi %1107, %1109 : vector<8x128xi1>
    %cst_307 = arith.constant dense<true> : vector<8x128xi1>
    %1794 = arith.xori %1107, %cst_307 : vector<8x128xi1>
    %cst_308 = arith.constant dense<true> : vector<8x128xi1>
    %1795 = arith.xori %1109, %cst_308 : vector<8x128xi1>
    %1796 = arith.andi %1794, %1795 : vector<8x128xi1>
    %1797 = arith.select %1796, %23, %1789 : vector<8x128xi1>, vector<8x128xf32>
    %1798 = arith.select %1793, %809, %1797 : vector<8x128xi1>, vector<8x128xf32>
    %1799 = arith.select %1796, %31, %1792 : vector<8x128xi1>, vector<8x128xf32>
    %1800 = arith.select %1793, %811, %1799 : vector<8x128xi1>, vector<8x128xf32>
    %1801 = arith.select %1109, %812, %1798 : vector<8x128xi1>, vector<8x128xf32>
    %1802 = arith.select %1109, %813, %1800 : vector<8x128xi1>, vector<8x128xf32>
    %1803 = arith.mulf %1771, %1800 : vector<8x128xf32>
    %1804 = arith.mulf %1798, %1772 : vector<8x128xf32>
    %1805 = arith.subf %1803, %1804 : vector<8x128xf32>
    %1806 = arith.addf %1780, %1805 : vector<8x128xf32>
    %1807 = arith.mulf %1798, %1802 : vector<8x128xf32>
    %1808 = arith.mulf %1801, %1800 : vector<8x128xf32>
    %1809 = arith.subf %1807, %1808 : vector<8x128xf32>
    %1810 = arith.addf %1806, %1809 : vector<8x128xf32>
    %1811 = arith.subf %1021, %1026 : vector<8x128xf32>
    %cst_309 = arith.constant 0.000000e+00 : f32
    %1812 = vector.broadcast %cst_309 : f32 to vector<8x128xf32>
    %1813 = arith.cmpf oeq, %1811, %1812 : vector<8x128xf32>
    %cst_310 = arith.constant 1.000000e+00 : f32
    %1814 = vector.broadcast %cst_310 : f32 to vector<8x128xf32>
    %1815 = arith.select %1813, %1814, %1811 : vector<8x128xi1>, vector<8x128xf32>
    %1816 = arith.divf %1021, %1815 : vector<8x128xf32>
    %1817 = arith.subf %831, %812 : vector<8x128xf32>
    %1818 = arith.mulf %1816, %1817 : vector<8x128xf32>
    %1819 = arith.addf %812, %1818 : vector<8x128xf32>
    %1820 = arith.subf %833, %813 : vector<8x128xf32>
    %1821 = arith.mulf %1816, %1820 : vector<8x128xf32>
    %1822 = arith.addf %813, %1821 : vector<8x128xf32>
    %1823 = arith.andi %1109, %1111 : vector<8x128xi1>
    %cst_311 = arith.constant dense<true> : vector<8x128xi1>
    %1824 = arith.xori %1109, %cst_311 : vector<8x128xi1>
    %cst_312 = arith.constant dense<true> : vector<8x128xi1>
    %1825 = arith.xori %1111, %cst_312 : vector<8x128xi1>
    %1826 = arith.andi %1824, %1825 : vector<8x128xi1>
    %1827 = arith.select %1826, %23, %1819 : vector<8x128xi1>, vector<8x128xf32>
    %1828 = arith.select %1823, %812, %1827 : vector<8x128xi1>, vector<8x128xf32>
    %1829 = arith.select %1826, %31, %1822 : vector<8x128xi1>, vector<8x128xf32>
    %1830 = arith.select %1823, %813, %1829 : vector<8x128xi1>, vector<8x128xf32>
    %1831 = arith.select %1111, %831, %1828 : vector<8x128xi1>, vector<8x128xf32>
    %1832 = arith.select %1111, %833, %1830 : vector<8x128xi1>, vector<8x128xf32>
    %1833 = arith.mulf %1801, %1830 : vector<8x128xf32>
    %1834 = arith.mulf %1828, %1802 : vector<8x128xf32>
    %1835 = arith.subf %1833, %1834 : vector<8x128xf32>
    %1836 = arith.addf %1810, %1835 : vector<8x128xf32>
    %1837 = arith.mulf %1828, %1832 : vector<8x128xf32>
    %1838 = arith.mulf %1831, %1830 : vector<8x128xf32>
    %1839 = arith.subf %1837, %1838 : vector<8x128xf32>
    %1840 = arith.addf %1836, %1839 : vector<8x128xf32>
    %1841 = arith.subf %1026, %1031 : vector<8x128xf32>
    %cst_313 = arith.constant 0.000000e+00 : f32
    %1842 = vector.broadcast %cst_313 : f32 to vector<8x128xf32>
    %1843 = arith.cmpf oeq, %1841, %1842 : vector<8x128xf32>
    %cst_314 = arith.constant 1.000000e+00 : f32
    %1844 = vector.broadcast %cst_314 : f32 to vector<8x128xf32>
    %1845 = arith.select %1843, %1844, %1841 : vector<8x128xi1>, vector<8x128xf32>
    %1846 = arith.divf %1026, %1845 : vector<8x128xf32>
    %1847 = arith.subf %834, %831 : vector<8x128xf32>
    %1848 = arith.mulf %1846, %1847 : vector<8x128xf32>
    %1849 = arith.addf %831, %1848 : vector<8x128xf32>
    %1850 = arith.subf %835, %833 : vector<8x128xf32>
    %1851 = arith.mulf %1846, %1850 : vector<8x128xf32>
    %1852 = arith.addf %833, %1851 : vector<8x128xf32>
    %1853 = arith.andi %1111, %1113 : vector<8x128xi1>
    %cst_315 = arith.constant dense<true> : vector<8x128xi1>
    %1854 = arith.xori %1111, %cst_315 : vector<8x128xi1>
    %cst_316 = arith.constant dense<true> : vector<8x128xi1>
    %1855 = arith.xori %1113, %cst_316 : vector<8x128xi1>
    %1856 = arith.andi %1854, %1855 : vector<8x128xi1>
    %1857 = arith.select %1856, %23, %1849 : vector<8x128xi1>, vector<8x128xf32>
    %1858 = arith.select %1853, %831, %1857 : vector<8x128xi1>, vector<8x128xf32>
    %1859 = arith.select %1856, %31, %1852 : vector<8x128xi1>, vector<8x128xf32>
    %1860 = arith.select %1853, %833, %1859 : vector<8x128xi1>, vector<8x128xf32>
    %1861 = arith.select %1113, %834, %1858 : vector<8x128xi1>, vector<8x128xf32>
    %1862 = arith.select %1113, %835, %1860 : vector<8x128xi1>, vector<8x128xf32>
    %1863 = arith.mulf %1831, %1860 : vector<8x128xf32>
    %1864 = arith.mulf %1858, %1832 : vector<8x128xf32>
    %1865 = arith.subf %1863, %1864 : vector<8x128xf32>
    %1866 = arith.addf %1840, %1865 : vector<8x128xf32>
    %1867 = arith.mulf %1858, %1862 : vector<8x128xf32>
    %1868 = arith.mulf %1861, %1860 : vector<8x128xf32>
    %1869 = arith.subf %1867, %1868 : vector<8x128xf32>
    %1870 = arith.addf %1866, %1869 : vector<8x128xf32>
    %1871 = arith.subf %1031, %1036 : vector<8x128xf32>
    %cst_317 = arith.constant 0.000000e+00 : f32
    %1872 = vector.broadcast %cst_317 : f32 to vector<8x128xf32>
    %1873 = arith.cmpf oeq, %1871, %1872 : vector<8x128xf32>
    %cst_318 = arith.constant 1.000000e+00 : f32
    %1874 = vector.broadcast %cst_318 : f32 to vector<8x128xf32>
    %1875 = arith.select %1873, %1874, %1871 : vector<8x128xi1>, vector<8x128xf32>
    %1876 = arith.divf %1031, %1875 : vector<8x128xf32>
    %1877 = arith.subf %853, %834 : vector<8x128xf32>
    %1878 = arith.mulf %1876, %1877 : vector<8x128xf32>
    %1879 = arith.addf %834, %1878 : vector<8x128xf32>
    %1880 = arith.subf %855, %835 : vector<8x128xf32>
    %1881 = arith.mulf %1876, %1880 : vector<8x128xf32>
    %1882 = arith.addf %835, %1881 : vector<8x128xf32>
    %1883 = arith.andi %1113, %1115 : vector<8x128xi1>
    %cst_319 = arith.constant dense<true> : vector<8x128xi1>
    %1884 = arith.xori %1113, %cst_319 : vector<8x128xi1>
    %cst_320 = arith.constant dense<true> : vector<8x128xi1>
    %1885 = arith.xori %1115, %cst_320 : vector<8x128xi1>
    %1886 = arith.andi %1884, %1885 : vector<8x128xi1>
    %1887 = arith.select %1886, %23, %1879 : vector<8x128xi1>, vector<8x128xf32>
    %1888 = arith.select %1883, %834, %1887 : vector<8x128xi1>, vector<8x128xf32>
    %1889 = arith.select %1886, %31, %1882 : vector<8x128xi1>, vector<8x128xf32>
    %1890 = arith.select %1883, %835, %1889 : vector<8x128xi1>, vector<8x128xf32>
    %1891 = arith.select %1115, %853, %1888 : vector<8x128xi1>, vector<8x128xf32>
    %1892 = arith.select %1115, %855, %1890 : vector<8x128xi1>, vector<8x128xf32>
    %1893 = arith.mulf %1861, %1890 : vector<8x128xf32>
    %1894 = arith.mulf %1888, %1862 : vector<8x128xf32>
    %1895 = arith.subf %1893, %1894 : vector<8x128xf32>
    %1896 = arith.addf %1870, %1895 : vector<8x128xf32>
    %1897 = arith.mulf %1888, %1892 : vector<8x128xf32>
    %1898 = arith.mulf %1891, %1890 : vector<8x128xf32>
    %1899 = arith.subf %1897, %1898 : vector<8x128xf32>
    %1900 = arith.addf %1896, %1899 : vector<8x128xf32>
    %1901 = arith.subf %1036, %1041 : vector<8x128xf32>
    %cst_321 = arith.constant 0.000000e+00 : f32
    %1902 = vector.broadcast %cst_321 : f32 to vector<8x128xf32>
    %1903 = arith.cmpf oeq, %1901, %1902 : vector<8x128xf32>
    %cst_322 = arith.constant 1.000000e+00 : f32
    %1904 = vector.broadcast %cst_322 : f32 to vector<8x128xf32>
    %1905 = arith.select %1903, %1904, %1901 : vector<8x128xi1>, vector<8x128xf32>
    %1906 = arith.divf %1036, %1905 : vector<8x128xf32>
    %1907 = arith.subf %856, %853 : vector<8x128xf32>
    %1908 = arith.mulf %1906, %1907 : vector<8x128xf32>
    %1909 = arith.addf %853, %1908 : vector<8x128xf32>
    %1910 = arith.subf %857, %855 : vector<8x128xf32>
    %1911 = arith.mulf %1906, %1910 : vector<8x128xf32>
    %1912 = arith.addf %855, %1911 : vector<8x128xf32>
    %1913 = arith.andi %1115, %1117 : vector<8x128xi1>
    %cst_323 = arith.constant dense<true> : vector<8x128xi1>
    %1914 = arith.xori %1115, %cst_323 : vector<8x128xi1>
    %cst_324 = arith.constant dense<true> : vector<8x128xi1>
    %1915 = arith.xori %1117, %cst_324 : vector<8x128xi1>
    %1916 = arith.andi %1914, %1915 : vector<8x128xi1>
    %1917 = arith.select %1916, %23, %1909 : vector<8x128xi1>, vector<8x128xf32>
    %1918 = arith.select %1913, %853, %1917 : vector<8x128xi1>, vector<8x128xf32>
    %1919 = arith.select %1916, %31, %1912 : vector<8x128xi1>, vector<8x128xf32>
    %1920 = arith.select %1913, %855, %1919 : vector<8x128xi1>, vector<8x128xf32>
    %1921 = arith.select %1117, %856, %1918 : vector<8x128xi1>, vector<8x128xf32>
    %1922 = arith.select %1117, %857, %1920 : vector<8x128xi1>, vector<8x128xf32>
    %1923 = arith.mulf %1891, %1920 : vector<8x128xf32>
    %1924 = arith.mulf %1918, %1892 : vector<8x128xf32>
    %1925 = arith.subf %1923, %1924 : vector<8x128xf32>
    %1926 = arith.addf %1900, %1925 : vector<8x128xf32>
    %1927 = arith.mulf %1918, %1922 : vector<8x128xf32>
    %1928 = arith.mulf %1921, %1920 : vector<8x128xf32>
    %1929 = arith.subf %1927, %1928 : vector<8x128xf32>
    %1930 = arith.addf %1926, %1929 : vector<8x128xf32>
    %1931 = arith.subf %1041, %1046 : vector<8x128xf32>
    %cst_325 = arith.constant 0.000000e+00 : f32
    %1932 = vector.broadcast %cst_325 : f32 to vector<8x128xf32>
    %1933 = arith.cmpf oeq, %1931, %1932 : vector<8x128xf32>
    %cst_326 = arith.constant 1.000000e+00 : f32
    %1934 = vector.broadcast %cst_326 : f32 to vector<8x128xf32>
    %1935 = arith.select %1933, %1934, %1931 : vector<8x128xi1>, vector<8x128xf32>
    %1936 = arith.divf %1041, %1935 : vector<8x128xf32>
    %1937 = arith.subf %875, %856 : vector<8x128xf32>
    %1938 = arith.mulf %1936, %1937 : vector<8x128xf32>
    %1939 = arith.addf %856, %1938 : vector<8x128xf32>
    %1940 = arith.subf %877, %857 : vector<8x128xf32>
    %1941 = arith.mulf %1936, %1940 : vector<8x128xf32>
    %1942 = arith.addf %857, %1941 : vector<8x128xf32>
    %1943 = arith.andi %1117, %1119 : vector<8x128xi1>
    %cst_327 = arith.constant dense<true> : vector<8x128xi1>
    %1944 = arith.xori %1117, %cst_327 : vector<8x128xi1>
    %cst_328 = arith.constant dense<true> : vector<8x128xi1>
    %1945 = arith.xori %1119, %cst_328 : vector<8x128xi1>
    %1946 = arith.andi %1944, %1945 : vector<8x128xi1>
    %1947 = arith.select %1946, %23, %1939 : vector<8x128xi1>, vector<8x128xf32>
    %1948 = arith.select %1943, %856, %1947 : vector<8x128xi1>, vector<8x128xf32>
    %1949 = arith.select %1946, %31, %1942 : vector<8x128xi1>, vector<8x128xf32>
    %1950 = arith.select %1943, %857, %1949 : vector<8x128xi1>, vector<8x128xf32>
    %1951 = arith.select %1119, %875, %1948 : vector<8x128xi1>, vector<8x128xf32>
    %1952 = arith.select %1119, %877, %1950 : vector<8x128xi1>, vector<8x128xf32>
    %1953 = arith.mulf %1921, %1950 : vector<8x128xf32>
    %1954 = arith.mulf %1948, %1922 : vector<8x128xf32>
    %1955 = arith.subf %1953, %1954 : vector<8x128xf32>
    %1956 = arith.addf %1930, %1955 : vector<8x128xf32>
    %1957 = arith.mulf %1948, %1952 : vector<8x128xf32>
    %1958 = arith.mulf %1951, %1950 : vector<8x128xf32>
    %1959 = arith.subf %1957, %1958 : vector<8x128xf32>
    %1960 = arith.addf %1956, %1959 : vector<8x128xf32>
    %1961 = arith.subf %1046, %1051 : vector<8x128xf32>
    %cst_329 = arith.constant 0.000000e+00 : f32
    %1962 = vector.broadcast %cst_329 : f32 to vector<8x128xf32>
    %1963 = arith.cmpf oeq, %1961, %1962 : vector<8x128xf32>
    %cst_330 = arith.constant 1.000000e+00 : f32
    %1964 = vector.broadcast %cst_330 : f32 to vector<8x128xf32>
    %1965 = arith.select %1963, %1964, %1961 : vector<8x128xi1>, vector<8x128xf32>
    %1966 = arith.divf %1046, %1965 : vector<8x128xf32>
    %1967 = arith.subf %878, %875 : vector<8x128xf32>
    %1968 = arith.mulf %1966, %1967 : vector<8x128xf32>
    %1969 = arith.addf %875, %1968 : vector<8x128xf32>
    %1970 = arith.subf %879, %877 : vector<8x128xf32>
    %1971 = arith.mulf %1966, %1970 : vector<8x128xf32>
    %1972 = arith.addf %877, %1971 : vector<8x128xf32>
    %1973 = arith.andi %1119, %1121 : vector<8x128xi1>
    %cst_331 = arith.constant dense<true> : vector<8x128xi1>
    %1974 = arith.xori %1119, %cst_331 : vector<8x128xi1>
    %cst_332 = arith.constant dense<true> : vector<8x128xi1>
    %1975 = arith.xori %1121, %cst_332 : vector<8x128xi1>
    %1976 = arith.andi %1974, %1975 : vector<8x128xi1>
    %1977 = arith.select %1976, %23, %1969 : vector<8x128xi1>, vector<8x128xf32>
    %1978 = arith.select %1973, %875, %1977 : vector<8x128xi1>, vector<8x128xf32>
    %1979 = arith.select %1976, %31, %1972 : vector<8x128xi1>, vector<8x128xf32>
    %1980 = arith.select %1973, %877, %1979 : vector<8x128xi1>, vector<8x128xf32>
    %1981 = arith.select %1121, %878, %1978 : vector<8x128xi1>, vector<8x128xf32>
    %1982 = arith.select %1121, %879, %1980 : vector<8x128xi1>, vector<8x128xf32>
    %1983 = arith.mulf %1951, %1980 : vector<8x128xf32>
    %1984 = arith.mulf %1978, %1952 : vector<8x128xf32>
    %1985 = arith.subf %1983, %1984 : vector<8x128xf32>
    %1986 = arith.addf %1960, %1985 : vector<8x128xf32>
    %1987 = arith.mulf %1978, %1982 : vector<8x128xf32>
    %1988 = arith.mulf %1981, %1980 : vector<8x128xf32>
    %1989 = arith.subf %1987, %1988 : vector<8x128xf32>
    %1990 = arith.addf %1986, %1989 : vector<8x128xf32>
    %1991 = arith.subf %1051, %1056 : vector<8x128xf32>
    %cst_333 = arith.constant 0.000000e+00 : f32
    %1992 = vector.broadcast %cst_333 : f32 to vector<8x128xf32>
    %1993 = arith.cmpf oeq, %1991, %1992 : vector<8x128xf32>
    %cst_334 = arith.constant 1.000000e+00 : f32
    %1994 = vector.broadcast %cst_334 : f32 to vector<8x128xf32>
    %1995 = arith.select %1993, %1994, %1991 : vector<8x128xi1>, vector<8x128xf32>
    %1996 = arith.divf %1051, %1995 : vector<8x128xf32>
    %1997 = arith.subf %897, %878 : vector<8x128xf32>
    %1998 = arith.mulf %1996, %1997 : vector<8x128xf32>
    %1999 = arith.addf %878, %1998 : vector<8x128xf32>
    %2000 = arith.subf %899, %879 : vector<8x128xf32>
    %2001 = arith.mulf %1996, %2000 : vector<8x128xf32>
    %2002 = arith.addf %879, %2001 : vector<8x128xf32>
    %2003 = arith.andi %1121, %1123 : vector<8x128xi1>
    %cst_335 = arith.constant dense<true> : vector<8x128xi1>
    %2004 = arith.xori %1121, %cst_335 : vector<8x128xi1>
    %cst_336 = arith.constant dense<true> : vector<8x128xi1>
    %2005 = arith.xori %1123, %cst_336 : vector<8x128xi1>
    %2006 = arith.andi %2004, %2005 : vector<8x128xi1>
    %2007 = arith.select %2006, %23, %1999 : vector<8x128xi1>, vector<8x128xf32>
    %2008 = arith.select %2003, %878, %2007 : vector<8x128xi1>, vector<8x128xf32>
    %2009 = arith.select %2006, %31, %2002 : vector<8x128xi1>, vector<8x128xf32>
    %2010 = arith.select %2003, %879, %2009 : vector<8x128xi1>, vector<8x128xf32>
    %2011 = arith.select %1123, %897, %2008 : vector<8x128xi1>, vector<8x128xf32>
    %2012 = arith.select %1123, %899, %2010 : vector<8x128xi1>, vector<8x128xf32>
    %2013 = arith.mulf %1981, %2010 : vector<8x128xf32>
    %2014 = arith.mulf %2008, %1982 : vector<8x128xf32>
    %2015 = arith.subf %2013, %2014 : vector<8x128xf32>
    %2016 = arith.addf %1990, %2015 : vector<8x128xf32>
    %2017 = arith.mulf %2008, %2012 : vector<8x128xf32>
    %2018 = arith.mulf %2011, %2010 : vector<8x128xf32>
    %2019 = arith.subf %2017, %2018 : vector<8x128xf32>
    %2020 = arith.addf %2016, %2019 : vector<8x128xf32>
    %2021 = arith.subf %1056, %1061 : vector<8x128xf32>
    %cst_337 = arith.constant 0.000000e+00 : f32
    %2022 = vector.broadcast %cst_337 : f32 to vector<8x128xf32>
    %2023 = arith.cmpf oeq, %2021, %2022 : vector<8x128xf32>
    %cst_338 = arith.constant 1.000000e+00 : f32
    %2024 = vector.broadcast %cst_338 : f32 to vector<8x128xf32>
    %2025 = arith.select %2023, %2024, %2021 : vector<8x128xi1>, vector<8x128xf32>
    %2026 = arith.divf %1056, %2025 : vector<8x128xf32>
    %2027 = arith.subf %900, %897 : vector<8x128xf32>
    %2028 = arith.mulf %2026, %2027 : vector<8x128xf32>
    %2029 = arith.addf %897, %2028 : vector<8x128xf32>
    %2030 = arith.subf %901, %899 : vector<8x128xf32>
    %2031 = arith.mulf %2026, %2030 : vector<8x128xf32>
    %2032 = arith.addf %899, %2031 : vector<8x128xf32>
    %2033 = arith.andi %1123, %1125 : vector<8x128xi1>
    %cst_339 = arith.constant dense<true> : vector<8x128xi1>
    %2034 = arith.xori %1123, %cst_339 : vector<8x128xi1>
    %cst_340 = arith.constant dense<true> : vector<8x128xi1>
    %2035 = arith.xori %1125, %cst_340 : vector<8x128xi1>
    %2036 = arith.andi %2034, %2035 : vector<8x128xi1>
    %2037 = arith.select %2036, %23, %2029 : vector<8x128xi1>, vector<8x128xf32>
    %2038 = arith.select %2033, %897, %2037 : vector<8x128xi1>, vector<8x128xf32>
    %2039 = arith.select %2036, %31, %2032 : vector<8x128xi1>, vector<8x128xf32>
    %2040 = arith.select %2033, %899, %2039 : vector<8x128xi1>, vector<8x128xf32>
    %2041 = arith.select %1125, %900, %2038 : vector<8x128xi1>, vector<8x128xf32>
    %2042 = arith.select %1125, %901, %2040 : vector<8x128xi1>, vector<8x128xf32>
    %2043 = arith.mulf %2011, %2040 : vector<8x128xf32>
    %2044 = arith.mulf %2038, %2012 : vector<8x128xf32>
    %2045 = arith.subf %2043, %2044 : vector<8x128xf32>
    %2046 = arith.addf %2020, %2045 : vector<8x128xf32>
    %2047 = arith.mulf %2038, %2042 : vector<8x128xf32>
    %2048 = arith.mulf %2041, %2040 : vector<8x128xf32>
    %2049 = arith.subf %2047, %2048 : vector<8x128xf32>
    %2050 = arith.addf %2046, %2049 : vector<8x128xf32>
    %2051 = arith.subf %1061, %906 : vector<8x128xf32>
    %cst_341 = arith.constant 0.000000e+00 : f32
    %2052 = vector.broadcast %cst_341 : f32 to vector<8x128xf32>
    %2053 = arith.cmpf oeq, %2051, %2052 : vector<8x128xf32>
    %cst_342 = arith.constant 1.000000e+00 : f32
    %2054 = vector.broadcast %cst_342 : f32 to vector<8x128xf32>
    %2055 = arith.select %2053, %2054, %2051 : vector<8x128xi1>, vector<8x128xf32>
    %2056 = arith.divf %1061, %2055 : vector<8x128xf32>
    %2057 = arith.subf %567, %900 : vector<8x128xf32>
    %2058 = arith.mulf %2056, %2057 : vector<8x128xf32>
    %2059 = arith.addf %900, %2058 : vector<8x128xf32>
    %2060 = arith.subf %569, %901 : vector<8x128xf32>
    %2061 = arith.mulf %2056, %2060 : vector<8x128xf32>
    %2062 = arith.addf %901, %2061 : vector<8x128xf32>
    %2063 = arith.andi %1125, %1063 : vector<8x128xi1>
    %cst_343 = arith.constant dense<true> : vector<8x128xi1>
    %2064 = arith.xori %1125, %cst_343 : vector<8x128xi1>
    %cst_344 = arith.constant dense<true> : vector<8x128xi1>
    %2065 = arith.xori %1063, %cst_344 : vector<8x128xi1>
    %2066 = arith.andi %2064, %2065 : vector<8x128xi1>
    %2067 = arith.select %2066, %23, %2059 : vector<8x128xi1>, vector<8x128xf32>
    %2068 = arith.select %2063, %900, %2067 : vector<8x128xi1>, vector<8x128xf32>
    %2069 = arith.select %2066, %31, %2062 : vector<8x128xi1>, vector<8x128xf32>
    %2070 = arith.select %2063, %901, %2069 : vector<8x128xi1>, vector<8x128xf32>
    %2071 = arith.select %1063, %567, %2068 : vector<8x128xi1>, vector<8x128xf32>
    %2072 = arith.select %1063, %569, %2070 : vector<8x128xi1>, vector<8x128xf32>
    %2073 = arith.mulf %2041, %2070 : vector<8x128xf32>
    %2074 = arith.mulf %2068, %2042 : vector<8x128xf32>
    %2075 = arith.subf %2073, %2074 : vector<8x128xf32>
    %2076 = arith.addf %2050, %2075 : vector<8x128xf32>
    %2077 = arith.mulf %2068, %2072 : vector<8x128xf32>
    %2078 = arith.mulf %2071, %2070 : vector<8x128xf32>
    %2079 = arith.subf %2077, %2078 : vector<8x128xf32>
    %2080 = arith.addf %2076, %2079 : vector<8x128xf32>
    %2081 = arith.mulf %2071, %1145 : vector<8x128xf32>
    %2082 = arith.mulf %1143, %2072 : vector<8x128xf32>
    %2083 = arith.subf %2081, %2082 : vector<8x128xf32>
    %2084 = arith.addf %2080, %2083 : vector<8x128xf32>
    %2085 = math.absf %2084 : vector<8x128xf32>
    %cst_345 = arith.constant 5.000000e-01 : f32
    %2086 = vector.broadcast %cst_345 : f32 to vector<8x128xf32>
    %2087 = arith.mulf %2086, %2085 : vector<8x128xf32>
    %2088 = arith.minimumf %64, %67 : vector<8x128xf32>
    %2089 = arith.minimumf %2087, %2088 : vector<8x128xf32>
    %2090 = arith.addf %64, %67 : vector<8x128xf32>
    %2091 = arith.subf %2090, %2089 : vector<8x128xf32>
    %cst_346 = arith.constant 0.000000e+00 : f32
    %2092 = vector.broadcast %cst_346 : f32 to vector<8x128xf32>
    %2093 = arith.cmpf ogt, %2091, %2092 : vector<8x128xf32>
    %cst_347 = arith.constant 1.000000e+00 : f32
    %2094 = vector.broadcast %cst_347 : f32 to vector<8x128xf32>
    %2095 = arith.select %2093, %2091, %2094 : vector<8x128xi1>, vector<8x128xf32>
    %cst_348 = arith.constant 0.000000e+00 : f32
    %2096 = vector.broadcast %cst_348 : f32 to vector<8x128xf32>
    %2097 = arith.cmpf ogt, %2091, %2096 : vector<8x128xf32>
    %2098 = arith.divf %2089, %2095 : vector<8x128xf32>
    %cst_349 = arith.constant 0.000000e+00 : f32
    %2099 = vector.broadcast %cst_349 : f32 to vector<8x128xf32>
    %2100 = arith.select %2097, %2098, %2099 : vector<8x128xi1>, vector<8x128xf32>
    %cst_350 = arith.constant 1.000000e+00 : f32
    %2101 = vector.broadcast %cst_350 : f32 to vector<8x128xf32>
    %2102 = arith.subf %2101, %2100 : vector<8x128xf32>
    %c0_351 = arith.constant 0 : index
    %c0_352 = arith.constant 0 : index
    %2103 = vector.load %arg3[%c0_351, %c0_352] : memref<8x128xf32, #tpu.memory_space<vmem>>, vector<8x128xf32>
    tpu.vector_store %arg3[%c0_351, %c0_352], %2102 {strides = array<i32>} : memref<8x128xf32, #tpu.memory_space<vmem>>, vector<8x128xf32>,
    return
  }
  func.func @transform_0(%arg0: i32) -> (i32, i32, i32) {
    %c0_i32 = arith.constant 0 : i32
    %c0_i32_0 = arith.constant 0 : i32
    %c0_i32_1 = arith.constant 0 : i32
    return %c0_i32, %arg0, %c0_i32_0 : i32, i32, i32
  }
  func.func @transform_1(%arg0: i32) -> (i32, i32, i32) {
    %c0_i32 = arith.constant 0 : i32
    %c0_i32_0 = arith.constant 0 : i32
    %c0_i32_1 = arith.constant 0 : i32
    return %c0_i32, %arg0, %c0_i32_0 : i32, i32, i32
  }
  func.func @transform_2(%arg0: i32) -> (i32, i32) {
    %c0_i32 = arith.constant 0 : i32
    %c0_i32_0 = arith.constant 0 : i32
    return %arg0, %c0_i32 : i32, i32
  }
}

</mosaic_0001>

<llo_original>
// kernel: tpu_custom_call.1
$region0: #{tpu_custom_call.1}
  #allocation0 [shape = 'u32[]', space=smem, size = 0x4, offset = 0x4, fixed_abs, tag = 'smem constant byte address 0x4 - core index']
  #allocation1 [shape = 'u32[144,128]{1,0:T(1,128)}', space=vmem, size = 0x12000, scoped, tag = 'internal scratch']
  %s0 = inlined_call_operand.hbm [shape: f32[8,8,128], index: 0, kind: input, shape index: {}]
  %s1 = inlined_call_operand.hbm [shape: f32[8,8,128], index: 1, kind: input, shape index: {}]
  %s2 = inlined_call_operand.hbm [shape: f32[8,128], index: 2, kind: output, shape index: {}]
  %s3 = sld [smem:[#allocation0]]
  $region26: #{tpu_custom_call.1} parent=0
    _
  %s5 = ssub.s32 1, %s3
  %s6 = scalar_select 0, %s5, %s3
  $region1: #{tpu_custom_call.1} parent=0
    #allocation2 [shape = 'u8[32768]{0}', space=vmem, size = 0x8000, scoped, tag = 'input window, operand 0, single buffered']
    #allocation3 [shape = 's32[1]{0}', space=sflag, size = 0x4, scoped, tag = 'scoped memory for tpu_custom_call.1']
    #allocation4 [shape = 's32[1]{0}', space=sflag, size = 0x4, scoped, tag = 'scoped memory for tpu_custom_call.1']
    #allocation5 [shape = 'u8[32768]{0}', space=vmem, size = 0x8000, scoped, tag = 'input window, operand 1, single buffered']
    #allocation6 [shape = 's32[1]{0}', space=sflag, size = 0x4, scoped, tag = 'scoped memory for tpu_custom_call.1']
    #allocation7 [shape = 'u8[4096]{0}', space=vmem, size = 0x1000, scoped, tag = 'output window, operand 0, single buffered']
    %7 = vsyncpa [#allocation3], 0
    %8 = vsyncpa [#allocation6], 0
    %9 = vsyncpa [#allocation4], 0
    // Predicated region
    $region2: #{tpu_custom_call.1} parent=1 // pred_check
      _
    $region3: #{tpu_custom_call.1} parent=1 // pred_check_branch
      %11 = sbr.rel (0) target = $region5
    $region4: #{tpu_custom_call.1} parent=1 // pred_region
      %s13 = ssub.s32 1024, 1024
      %14 = vsyncadd [#allocation3], %s13
      %s15 = sshll.u32 [#allocation2], 4
      %s16 = int_to_ptr.vmem [resolvable:$true] %s15
      %21 = dma.hbm_to_vmem [thread:$0]  %s0, 1024, %s16, [#allocation3], 128, 128, 8
    $region5: #{tpu_custom_call.1} parent=1 // pred_fallthru
      _
    // Predicated region
    $region6: #{tpu_custom_call.1} parent=1 // pred_check
      _
    $region7: #{tpu_custom_call.1} parent=1 // pred_check_branch
      %23 = sbr.rel (0) target = $region9
    $region8: #{tpu_custom_call.1} parent=1 // pred_region
      %s25 = ssub.s32 1024, 1024
      %26 = vsyncadd [#allocation6], %s25
      %s27 = sshll.u32 [#allocation5], 4
      %s28 = int_to_ptr.vmem [resolvable:$true] %s27
      %33 = dma.hbm_to_vmem [thread:$0]  %s1, 1024, %s28, [#allocation6], 128, 128, 8
    $region9: #{tpu_custom_call.1} parent=1 // pred_fallthru
      _
    // Predicated region
    $region10: #{tpu_custom_call.1} parent=1 // pred_check
      _
    $region11: #{tpu_custom_call.1} parent=1 // pred_check_branch
      %35 = sbr.rel (0) target = $region13
    $region12: #{tpu_custom_call.1} parent=1 // pred_region
      %36 = dma.done [#allocation3], 1024
    $region13: #{tpu_custom_call.1} parent=1 // pred_fallthru
      _
    // Predicated region
    $region14: #{tpu_custom_call.1} parent=1 // pred_check
      _
    $region15: #{tpu_custom_call.1} parent=1 // pred_check_branch
      %38 = sbr.rel (0) target = $region17
    $region16: #{tpu_custom_call.1} parent=1 // pred_region
      %39 = dma.done [#allocation6], 1024
    $region17: #{tpu_custom_call.1} parent=1 // pred_fallthru
      _
    %v40 = vld [vmem:[#allocation2] sm:$0xff]
    %s41 = scalar_lea.vmem [#allocation2], 16
    %v42 = vld [vmem:[%s41] sm:$0xff]
    %s43 = scalar_lea.vmem [#allocation2], 32
    %v44 = vld [vmem:[%s43] sm:$0xff]
    %s45 = scalar_lea.vmem [#allocation2], 48
    %v46 = vld [vmem:[%s45] sm:$0xff]
    %s47 = scalar_lea.vmem [#allocation2], 8
    %v48 = vld [vmem:[%s47] sm:$0xff]
    %s49 = scalar_lea.vmem [#allocation2], 24
    %v50 = vld [vmem:[%s49] sm:$0xff]
    %s51 = scalar_lea.vmem [#allocation2], 40
    %v52 = vld [vmem:[%s51] sm:$0xff]
    %s53 = scalar_lea.vmem [#allocation2], 56
    %v54 = vld [vmem:[%s53] sm:$0xff]
    %v55 = vld [vmem:[#allocation5] sm:$0xff]
    %s56 = scalar_lea.vmem [#allocation5], 16
    %v57 = vld [vmem:[%s56] sm:$0xff]
    %s58 = scalar_lea.vmem [#allocation5], 32
    %v59 = vld [vmem:[%s58] sm:$0xff]
    %s60 = scalar_lea.vmem [#allocation5], 48
    %v61 = vld [vmem:[%s60] sm:$0xff]
    %s62 = scalar_lea.vmem [#allocation5], 8
    %v63 = vld [vmem:[%s62] sm:$0xff]
    %s64 = scalar_lea.vmem [#allocation5], 24
    %v65 = vld [vmem:[%s64] sm:$0xff]
    %s66 = scalar_lea.vmem [#allocation5], 40
    %v67 = vld [vmem:[%s66] sm:$0xff]
    %s68 = scalar_lea.vmem [#allocation5], 56
    %v69 = vld [vmem:[%s68] sm:$0xff]
    %v70 = vmul.f32 %v40, %v50
    %v71 = vmul.f32 %v42, %v48
    %v72 = vsub.f32 %v70, %v71
    %v73 = vmul.f32 %v42, %v52
    %v74 = vmul.f32 %v44, %v50
    %v75 = vsub.f32 %v73, %v74
    %v76 = vadd.f32 %v72, %v75
    %v77 = vmul.f32 %v44, %v54
    %v78 = vmul.f32 %v46, %v52
    %v79 = vsub.f32 %v77, %v78
    %v80 = vadd.f32 %v76, %v79
    %v81 = vmul.f32 %v46, %v48
    %v82 = vmul.f32 %v40, %v54
    %v83 = vsub.f32 %v81, %v82
    %v84 = vadd.f32 %v80, %v83
    %v85 = vmul.f32 %v55, %v65
    %v86 = vmul.f32 %v57, %v63
    %v87 = vsub.f32 %v85, %v86
    %v88 = vmul.f32 %v57, %v67
    %v89 = vmul.f32 %v59, %v65
    %v90 = vsub.f32 %v88, %v89
    %v91 = vadd.f32 %v87, %v90
    %v92 = vmul.f32 %v59, %v69
    %v93 = vmul.f32 %v61, %v67
    %v94 = vsub.f32 %v92, %v93
    %v95 = vadd.f32 %v91, %v94
    %v96 = vmul.f32 %v61, %v63
    %v97 = vmul.f32 %v55, %v69
    %v98 = vsub.f32 %v96, %v97
    %v99 = vadd.f32 %v95, %v98
    %v100 = vand.u32 2147483647, %v84
    %v101 = vmul.f32 %v100, 0.5
    %v102 = vand.u32 2147483647, %v99
    %v103 = vmul.f32 %v102, 0.5
    %vm104 = vcmp.ge.f32.partialorder %v99, 0.0
    %v105 = vsel %vm104, 1.0, -1.0
    %v106 = vsub.f32 %v57, %v55
    %v107 = vmul.f32 %v105, %v106
    %v108 = vsub.f32 %v59, %v57
    %v109 = vmul.f32 %v105, %v108
    %v110 = vsub.f32 %v61, %v59
    %v111 = vmul.f32 %v105, %v110
    %v112 = vsub.f32 %v55, %v61
    %v113 = vmul.f32 %v105, %v112
    %v114 = vsub.f32 %v65, %v63
    %v115 = vmul.f32 %v105, %v114
    %v116 = vsub.f32 %v67, %v65
    %v117 = vmul.f32 %v105, %v116
    %v118 = vsub.f32 %v69, %v67
    %v119 = vmul.f32 %v105, %v118
    %v120 = vsub.f32 %v63, %v69
    %v121 = vmul.f32 %v105, %v120
    %v122 = vsub.f32 %v48, %v63
    %v123 = vmul.f32 %v107, %v122
    %v124 = vsub.f32 %v40, %v55
    %v125 = vmul.f32 %v115, %v124
    %v126 = vsub.f32 %v123, %v125
    %v127 = vsub.f32 %v50, %v63
    %v128 = vmul.f32 %v107, %v127
    %v129 = vsub.f32 %v42, %v55
    %v130 = vmul.f32 %v115, %v129
    %v131 = vsub.f32 %v128, %v130
    %v132 = vsub.f32 %v52, %v63
    %v133 = vmul.f32 %v107, %v132
    %v134 = vsub.f32 %v44, %v55
    %v135 = vmul.f32 %v115, %v134
    %v136 = vsub.f32 %v133, %v135
    %v137 = vsub.f32 %v54, %v63
    %v138 = vmul.f32 %v107, %v137
    %v139 = vsub.f32 %v46, %v55
    %v140 = vmul.f32 %v115, %v139
    %v141 = vsub.f32 %v138, %v140
    %vm142 = vcmp.ge.f32.partialorder %v126, 0.0
    %vm143 = vcmp.ge.f32.partialorder %v131, 0.0
    %vm144 = vcmp.ge.f32.partialorder %v136, 0.0
    %vm145 = vcmp.ge.f32.partialorder %v141, 0.0
    %v146 = vsub.f32 %v126, %v131
    %vm147 = vcmp.eq.f32.partialorder %v146, 0.0
    %v148 = vsel %vm147, 1.0, %v146
    %v149 = vrcp.pop %v148
    %v150 = vmul.f32 %v126, %v149
    %v151 = vsub.f32 %v42, %v40
    %v152 = vmul.f32 %v150, %v151
    %v153 = vadd.f32 %v40, %v152
    %v154 = vsub.f32 %v50, %v48
    %v155 = vmul.f32 %v150, %v154
    %v156 = vadd.f32 %v48, %v155
    %vm157 = vmand %vm142, %vm143
    %vm158 = vmxor %vm142, 1
    %vm159 = vmxor %vm143, 1
    %vm160 = vmand %vm158, %vm159
    %v161 = vsel %vm160, %v55, %v153
    %v162 = vsel %vm157, %v40, %v161
    %v163 = vsel %vm160, %v63, %v156
    %v164 = vsel %vm157, %v48, %v163
    %v165 = vsel %vm143, %v42, %v162
    %v166 = vsel %vm143, %v50, %v164
    %v167 = vsub.f32 %v131, %v136
    %vm168 = vcmp.eq.f32.partialorder %v167, 0.0
    %v169 = vsel %vm168, 1.0, %v167
    %v170 = vrcp.pop %v169
    %v171 = vmul.f32 %v131, %v170
    %v172 = vsub.f32 %v44, %v42
    %v173 = vmul.f32 %v171, %v172
    %v174 = vadd.f32 %v42, %v173
    %v175 = vsub.f32 %v52, %v50
    %v176 = vmul.f32 %v171, %v175
    %v177 = vadd.f32 %v50, %v176
    %vm178 = vmand %vm143, %vm144
    %vm179 = vmxor %vm144, 1
    %vm180 = vmand %vm159, %vm179
    %v181 = vsel %vm180, %v55, %v174
    %v182 = vsel %vm178, %v42, %v181
    %v183 = vsel %vm180, %v63, %v177
    %v184 = vsel %vm178, %v50, %v183
    %v185 = vsel %vm144, %v44, %v182
    %v186 = vsel %vm144, %v52, %v184
    %v187 = vsub.f32 %v136, %v141
    %vm188 = vcmp.eq.f32.partialorder %v187, 0.0
    %v189 = vsel %vm188, 1.0, %v187
    %v190 = vrcp.pop %v189
    %v191 = vmul.f32 %v136, %v190
    %v192 = vsub.f32 %v46, %v44
    %v193 = vmul.f32 %v191, %v192
    %v194 = vadd.f32 %v44, %v193
    %v195 = vsub.f32 %v54, %v52
    %v196 = vmul.f32 %v191, %v195
    %v197 = vadd.f32 %v52, %v196
    %vm198 = vmand %vm144, %vm145
    %vm199 = vmxor %vm145, 1
    %vm200 = vmand %vm179, %vm199
    %v201 = vsel %vm200, %v55, %v194
    %v202 = vsel %vm198, %v44, %v201
    %v203 = vsel %vm200, %v63, %v197
    %v204 = vsel %vm198, %v52, %v203
    %v205 = vsel %vm145, %v46, %v202
    %v206 = vsel %vm145, %v54, %v204
    %v207 = vsub.f32 %v141, %v126
    %vm208 = vcmp.eq.f32.partialorder %v207, 0.0
    %v209 = vsel %vm208, 1.0, %v207
    %v210 = vrcp.pop %v209
    %v211 = vmul.f32 %v141, %v210
    %v212 = vsub.f32 %v40, %v46
    %v213 = vmul.f32 %v211, %v212
    %v214 = vadd.f32 %v46, %v213
    %v215 = vsub.f32 %v48, %v54
    %v216 = vmul.f32 %v211, %v215
    %v217 = vadd.f32 %v54, %v216
    %vm218 = vmand %vm145, %vm142
    %vm219 = vmand %vm199, %vm158
    %v220 = vsel %vm219, %v55, %v214
    %v221 = vsel %vm218, %v46, %v220
    %v222 = vsel %vm219, %v63, %v217
    %v223 = vsel %vm218, %v54, %v222
    %v224 = vsel %vm142, %v40, %v221
    %v225 = vsel %vm142, %v48, %v223
    %v226 = vsub.f32 %v164, %v65
    %v227 = vmul.f32 %v109, %v226
    %v228 = vsub.f32 %v162, %v57
    %v229 = vmul.f32 %v117, %v228
    %v230 = vsub.f32 %v227, %v229
    %v231 = vsub.f32 %v166, %v65
    %v232 = vmul.f32 %v109, %v231
    %v233 = vsub.f32 %v165, %v57
    %v234 = vmul.f32 %v117, %v233
    %v235 = vsub.f32 %v232, %v234
    %v236 = vsub.f32 %v184, %v65
    %v237 = vmul.f32 %v109, %v236
    %v238 = vsub.f32 %v182, %v57
    %v239 = vmul.f32 %v117, %v238
    %v240 = vsub.f32 %v237, %v239
    %v241 = vsub.f32 %v186, %v65
    %v242 = vmul.f32 %v109, %v241
    %v243 = vsub.f32 %v185, %v57
    %v244 = vmul.f32 %v117, %v243
    %v245 = vsub.f32 %v242, %v244
    %v246 = vsub.f32 %v204, %v65
    %v247 = vmul.f32 %v109, %v246
    %v248 = vsub.f32 %v202, %v57
    %v249 = vmul.f32 %v117, %v248
    %v250 = vsub.f32 %v247, %v249
    %v251 = vsub.f32 %v206, %v65
    %v252 = vmul.f32 %v109, %v251
    %v253 = vsub.f32 %v205, %v57
    %v254 = vmul.f32 %v117, %v253
    %v255 = vsub.f32 %v252, %v254
    %v256 = vsub.f32 %v223, %v65
    %v257 = vmul.f32 %v109, %v256
    %v258 = vsub.f32 %v221, %v57
    %v259 = vmul.f32 %v117, %v258
    %v260 = vsub.f32 %v257, %v259
    %v261 = vsub.f32 %v225, %v65
    %v262 = vmul.f32 %v109, %v261
    %v263 = vsub.f32 %v224, %v57
    %v264 = vmul.f32 %v117, %v263
    %v265 = vsub.f32 %v262, %v264
    %vm266 = vcmp.ge.f32.partialorder %v230, 0.0
    %vm267 = vcmp.ge.f32.partialorder %v235, 0.0
    %vm268 = vcmp.ge.f32.partialorder %v240, 0.0
    %vm269 = vcmp.ge.f32.partialorder %v245, 0.0
    %vm270 = vcmp.ge.f32.partialorder %v250, 0.0
    %vm271 = vcmp.ge.f32.partialorder %v255, 0.0
    %vm272 = vcmp.ge.f32.partialorder %v260, 0.0
    %vm273 = vcmp.ge.f32.partialorder %v265, 0.0
    %v274 = vsub.f32 %v230, %v235
    %vm275 = vcmp.eq.f32.partialorder %v274, 0.0
    %v276 = vsel %vm275, 1.0, %v274
    %v277 = vrcp.pop %v276
    %v278 = vmul.f32 %v230, %v277
    %v279 = vsub.f32 %v165, %v162
    %v280 = vmul.f32 %v278, %v279
    %v281 = vadd.f32 %v162, %v280
    %v282 = vsub.f32 %v166, %v164
    %v283 = vmul.f32 %v278, %v282
    %v284 = vadd.f32 %v164, %v283
    %vm285 = vmand %vm266, %vm267
    %vm286 = vmxor %vm266, 1
    %vm287 = vmxor %vm267, 1
    %vm288 = vmand %vm286, %vm287
    %v289 = vsel %vm288, %v57, %v281
    %v290 = vsel %vm285, %v162, %v289
    %v291 = vsel %vm288, %v65, %v284
    %v292 = vsel %vm285, %v164, %v291
    %v293 = vsel %vm267, %v165, %v290
    %v294 = vsel %vm267, %v166, %v292
    %v295 = vsub.f32 %v235, %v240
    %vm296 = vcmp.eq.f32.partialorder %v295, 0.0
    %v297 = vsel %vm296, 1.0, %v295
    %v298 = vrcp.pop %v297
    %v299 = vmul.f32 %v235, %v298
    %v300 = vsub.f32 %v182, %v165
    %v301 = vmul.f32 %v299, %v300
    %v302 = vadd.f32 %v165, %v301
    %v303 = vsub.f32 %v184, %v166
    %v304 = vmul.f32 %v299, %v303
    %v305 = vadd.f32 %v166, %v304
    %vm306 = vmand %vm267, %vm268
    %vm307 = vmxor %vm268, 1
    %vm308 = vmand %vm287, %vm307
    %v309 = vsel %vm308, %v57, %v302
    %v310 = vsel %vm306, %v165, %v309
    %v311 = vsel %vm308, %v65, %v305
    %v312 = vsel %vm306, %v166, %v311
    %v313 = vsel %vm268, %v182, %v310
    %v314 = vsel %vm268, %v184, %v312
    %v315 = vsub.f32 %v240, %v245
    %vm316 = vcmp.eq.f32.partialorder %v315, 0.0
    %v317 = vsel %vm316, 1.0, %v315
    %v318 = vrcp.pop %v317
    %v319 = vmul.f32 %v240, %v318
    %v320 = vsub.f32 %v185, %v182
    %v321 = vmul.f32 %v319, %v320
    %v322 = vadd.f32 %v182, %v321
    %v323 = vsub.f32 %v186, %v184
    %v324 = vmul.f32 %v319, %v323
    %v325 = vadd.f32 %v184, %v324
    %vm326 = vmand %vm268, %vm269
    %vm327 = vmxor %vm269, 1
    %vm328 = vmand %vm307, %vm327
    %v329 = vsel %vm328, %v57, %v322
    %v330 = vsel %vm326, %v182, %v329
    %v331 = vsel %vm328, %v65, %v325
    %v332 = vsel %vm326, %v184, %v331
    %v333 = vsel %vm269, %v185, %v330
    %v334 = vsel %vm269, %v186, %v332
    %v335 = vsub.f32 %v245, %v250
    %vm336 = vcmp.eq.f32.partialorder %v335, 0.0
    %v337 = vsel %vm336, 1.0, %v335
    %v338 = vrcp.pop %v337
    %v339 = vmul.f32 %v245, %v338
    %v340 = vsub.f32 %v202, %v185
    %v341 = vmul.f32 %v339, %v340
    %v342 = vadd.f32 %v185, %v341
    %v343 = vsub.f32 %v204, %v186
    %v344 = vmul.f32 %v339, %v343
    %v345 = vadd.f32 %v186, %v344
    %vm346 = vmand %vm269, %vm270
    %vm347 = vmxor %vm270, 1
    %vm348 = vmand %vm327, %vm347
    %v349 = vsel %vm348, %v57, %v342
    %v350 = vsel %vm346, %v185, %v349
    %v351 = vsel %vm348, %v65, %v345
    %v352 = vsel %vm346, %v186, %v351
    %v353 = vsel %vm270, %v202, %v350
    %v354 = vsel %vm270, %v204, %v352
    %v355 = vsub.f32 %v250, %v255
    %vm356 = vcmp.eq.f32.partialorder %v355, 0.0
    %v357 = vsel %vm356, 1.0, %v355
    %v358 = vrcp.pop %v357
    %v359 = vmul.f32 %v250, %v358
    %v360 = vsub.f32 %v205, %v202
    %v361 = vmul.f32 %v359, %v360
    %v362 = vadd.f32 %v202, %v361
    %v363 = vsub.f32 %v206, %v204
    %v364 = vmul.f32 %v359, %v363
    %v365 = vadd.f32 %v204, %v364
    %vm366 = vmand %vm270, %vm271
    %vm367 = vmxor %vm271, 1
    %vm368 = vmand %vm347, %vm367
    %v369 = vsel %vm368, %v57, %v362
    %v370 = vsel %vm366, %v202, %v369
    %v371 = vsel %vm368, %v65, %v365
    %v372 = vsel %vm366, %v204, %v371
    %v373 = vsel %vm271, %v205, %v370
    %v374 = vsel %vm271, %v206, %v372
    %v375 = vsub.f32 %v255, %v260
    %vm376 = vcmp.eq.f32.partialorder %v375, 0.0
    %v377 = vsel %vm376, 1.0, %v375
    %v378 = vrcp.pop %v377
    %v379 = vmul.f32 %v255, %v378
    %v380 = vsub.f32 %v221, %v205
    %v381 = vmul.f32 %v379, %v380
    %v382 = vadd.f32 %v205, %v381
    %v383 = vsub.f32 %v223, %v206
    %v384 = vmul.f32 %v379, %v383
    %v385 = vadd.f32 %v206, %v384
    %vm386 = vmand %vm271, %vm272
    %vm387 = vmxor %vm272, 1
    %vm388 = vmand %vm367, %vm387
    %v389 = vsel %vm388, %v57, %v382
    %v390 = vsel %vm386, %v205, %v389
    %v391 = vsel %vm388, %v65, %v385
    %v392 = vsel %vm386, %v206, %v391
    %v393 = vsel %vm272, %v221, %v390
    %v394 = vsel %vm272, %v223, %v392
    %v395 = vsub.f32 %v260, %v265
    %vm396 = vcmp.eq.f32.partialorder %v395, 0.0
    %v397 = vsel %vm396, 1.0, %v395
    %v398 = vrcp.pop %v397
    %v399 = vmul.f32 %v260, %v398
    %v400 = vsub.f32 %v224, %v221
    %v401 = vmul.f32 %v399, %v400
    %v402 = vadd.f32 %v221, %v401
    %v403 = vsub.f32 %v225, %v223
    %v404 = vmul.f32 %v399, %v403
    %v405 = vadd.f32 %v223, %v404
    %vm406 = vmand %vm272, %vm273
    %vm407 = vmxor %vm273, 1
    %vm408 = vmand %vm387, %vm407
    %v409 = vsel %vm408, %v57, %v402
    %v410 = vsel %vm406, %v221, %v409
    %v411 = vsel %vm408, %v65, %v405
    %v412 = vsel %vm406, %v223, %v411
    %v413 = vsel %vm273, %v224, %v410
    %v414 = vsel %vm273, %v225, %v412
    %v415 = vsub.f32 %v265, %v230
    %vm416 = vcmp.eq.f32.partialorder %v415, 0.0
    %v417 = vsel %vm416, 1.0, %v415
    %v418 = vrcp.pop %v417
    %v419 = vmul.f32 %v265, %v418
    %v420 = vsub.f32 %v162, %v224
    %v421 = vmul.f32 %v419, %v420
    %v422 = vadd.f32 %v224, %v421
    %v423 = vsub.f32 %v164, %v225
    %v424 = vmul.f32 %v419, %v423
    %v425 = vadd.f32 %v225, %v424
    %vm426 = vmand %vm273, %vm266
    %vm427 = vmand %vm407, %vm286
    %v428 = vsel %vm427, %v57, %v422
    %v429 = vsel %vm426, %v224, %v428
    %v430 = vsel %vm427, %v65, %v425
    %v431 = vsel %vm426, %v225, %v430
    %v432 = vsel %vm266, %v162, %v429
    %v433 = vsel %vm266, %v164, %v431
    %v434 = vsub.f32 %v292, %v67
    %v435 = vmul.f32 %v111, %v434
    %v436 = vsub.f32 %v290, %v59
    %v437 = vmul.f32 %v119, %v436
    %v438 = vsub.f32 %v435, %v437
    %v439 = vsub.f32 %v294, %v67
    %v440 = vmul.f32 %v111, %v439
    %v441 = vsub.f32 %v293, %v59
    %v442 = vmul.f32 %v119, %v441
    %v443 = vsub.f32 %v440, %v442
    %v444 = vsub.f32 %v312, %v67
    %v445 = vmul.f32 %v111, %v444
    %v446 = vsub.f32 %v310, %v59
    %v447 = vmul.f32 %v119, %v446
    %v448 = vsub.f32 %v445, %v447
    %v449 = vsub.f32 %v314, %v67
    %v450 = vmul.f32 %v111, %v449
    %v451 = vsub.f32 %v313, %v59
    %v452 = vmul.f32 %v119, %v451
    %v453 = vsub.f32 %v450, %v452
    %v454 = vsub.f32 %v332, %v67
    %v455 = vmul.f32 %v111, %v454
    %v456 = vsub.f32 %v330, %v59
    %v457 = vmul.f32 %v119, %v456
    %v458 = vsub.f32 %v455, %v457
    %v459 = vsub.f32 %v334, %v67
    %v460 = vmul.f32 %v111, %v459
    %v461 = vsub.f32 %v333, %v59
    %v462 = vmul.f32 %v119, %v461
    %v463 = vsub.f32 %v460, %v462
    %v464 = vsub.f32 %v352, %v67
    %v465 = vmul.f32 %v111, %v464
    %v466 = vsub.f32 %v350, %v59
    %v467 = vmul.f32 %v119, %v466
    %v468 = vsub.f32 %v465, %v467
    %v469 = vsub.f32 %v354, %v67
    %v470 = vmul.f32 %v111, %v469
    %v471 = vsub.f32 %v353, %v59
    %v472 = vmul.f32 %v119, %v471
    %v473 = vsub.f32 %v470, %v472
    %v474 = vsub.f32 %v372, %v67
    %v475 = vmul.f32 %v111, %v474
    %v476 = vsub.f32 %v370, %v59
    %v477 = vmul.f32 %v119, %v476
    %v478 = vsub.f32 %v475, %v477
    %v479 = vsub.f32 %v374, %v67
    %v480 = vmul.f32 %v111, %v479
    %v481 = vsub.f32 %v373, %v59
    %v482 = vmul.f32 %v119, %v481
    %v483 = vsub.f32 %v480, %v482
    %v484 = vsub.f32 %v392, %v67
    %v485 = vmul.f32 %v111, %v484
    %v486 = vsub.f32 %v390, %v59
    %v487 = vmul.f32 %v119, %v486
    %v488 = vsub.f32 %v485, %v487
    %v489 = vsub.f32 %v394, %v67
    %v490 = vmul.f32 %v111, %v489
    %v491 = vsub.f32 %v393, %v59
    %v492 = vmul.f32 %v119, %v491
    %v493 = vsub.f32 %v490, %v492
    %v494 = vsub.f32 %v412, %v67
    %v495 = vmul.f32 %v111, %v494
    %v496 = vsub.f32 %v410, %v59
    %v497 = vmul.f32 %v119, %v496
    %v498 = vsub.f32 %v495, %v497
    %v499 = vsub.f32 %v414, %v67
    %v500 = vmul.f32 %v111, %v499
    %v501 = vsub.f32 %v413, %v59
    %v502 = vmul.f32 %v119, %v501
    %v503 = vsub.f32 %v500, %v502
    %v504 = vsub.f32 %v431, %v67
    %v505 = vmul.f32 %v111, %v504
    %v506 = vsub.f32 %v429, %v59
    %v507 = vmul.f32 %v119, %v506
    %v508 = vsub.f32 %v505, %v507
    %v509 = vsub.f32 %v433, %v67
    %v510 = vmul.f32 %v111, %v509
    %v511 = vsub.f32 %v432, %v59
    %v512 = vmul.f32 %v119, %v511
    %v513 = vsub.f32 %v510, %v512
    %vm514 = vcmp.ge.f32.partialorder %v438, 0.0
    %vm515 = vcmp.ge.f32.partialorder %v443, 0.0
    %vm516 = vcmp.ge.f32.partialorder %v448, 0.0
    %vm517 = vcmp.ge.f32.partialorder %v453, 0.0
    %vm518 = vcmp.ge.f32.partialorder %v458, 0.0
    %vm519 = vcmp.ge.f32.partialorder %v463, 0.0
    %vm520 = vcmp.ge.f32.partialorder %v468, 0.0
    %vm521 = vcmp.ge.f32.partialorder %v473, 0.0
    %vm522 = vcmp.ge.f32.partialorder %v478, 0.0
    %vm523 = vcmp.ge.f32.partialorder %v483, 0.0
    %vm524 = vcmp.ge.f32.partialorder %v488, 0.0
    %vm525 = vcmp.ge.f32.partialorder %v493, 0.0
    %vm526 = vcmp.ge.f32.partialorder %v498, 0.0
    %vm527 = vcmp.ge.f32.partialorder %v503, 0.0
    %vm528 = vcmp.ge.f32.partialorder %v508, 0.0
    %vm529 = vcmp.ge.f32.partialorder %v513, 0.0
    %v530 = vsub.f32 %v438, %v443
    %vm531 = vcmp.eq.f32.partialorder %v530, 0.0
    %v532 = vsel %vm531, 1.0, %v530
    %v533 = vrcp.pop %v532
    %v534 = vmul.f32 %v438, %v533
    %v535 = vsub.f32 %v293, %v290
    %v536 = vmul.f32 %v534, %v535
    %v537 = vadd.f32 %v290, %v536
    %v538 = vsub.f32 %v294, %v292
    %v539 = vmul.f32 %v534, %v538
    %v540 = vadd.f32 %v292, %v539
    %vm541 = vmand %vm514, %vm515
    %vm542 = vmxor %vm514, 1
    %vm543 = vmxor %vm515, 1
    %vm544 = vmand %vm542, %vm543
    %v545 = vsel %vm544, %v59, %v537
    %v546 = vsel %vm541, %v290, %v545
    %v547 = vsel %vm544, %v67, %v540
    %v548 = vsel %vm541, %v292, %v547
    %v549 = vsel %vm515, %v293, %v546
    %v550 = vsel %vm515, %v294, %v548
    %v551 = vsub.f32 %v443, %v448
    %vm552 = vcmp.eq.f32.partialorder %v551, 0.0
    %v553 = vsel %vm552, 1.0, %v551
    %v554 = vrcp.pop %v553
    %v555 = vmul.f32 %v443, %v554
    %v556 = vsub.f32 %v310, %v293
    %v557 = vmul.f32 %v555, %v556
    %v558 = vadd.f32 %v293, %v557
    %v559 = vsub.f32 %v312, %v294
    %v560 = vmul.f32 %v555, %v559
    %v561 = vadd.f32 %v294, %v560
    %vm562 = vmand %vm515, %vm516
    %vm563 = vmxor %vm516, 1
    %vm564 = vmand %vm543, %vm563
    %v565 = vsel %vm564, %v59, %v558
    %v566 = vsel %vm562, %v293, %v565
    %v567 = vsel %vm564, %v67, %v561
    %v568 = vsel %vm562, %v294, %v567
    %v569 = vsel %vm516, %v310, %v566
    %v570 = vsel %vm516, %v312, %v568
    %v571 = vsub.f32 %v448, %v453
    %vm572 = vcmp.eq.f32.partialorder %v571, 0.0
    %v573 = vsel %vm572, 1.0, %v571
    %v574 = vrcp.pop %v573
    %v575 = vmul.f32 %v448, %v574
    %v576 = vsub.f32 %v313, %v310
    %v577 = vmul.f32 %v575, %v576
    %v578 = vadd.f32 %v310, %v577
    %v579 = vsub.f32 %v314, %v312
    %v580 = vmul.f32 %v575, %v579
    %v581 = vadd.f32 %v312, %v580
    %vm582 = vmand %vm516, %vm517
    %vm583 = vmxor %vm517, 1
    %vm584 = vmand %vm563, %vm583
    %v585 = vsel %vm584, %v59, %v578
    %v586 = vsel %vm582, %v310, %v585
    %v587 = vsel %vm584, %v67, %v581
    %v588 = vsel %vm582, %v312, %v587
    %v589 = vsel %vm517, %v313, %v586
    %v590 = vsel %vm517, %v314, %v588
    %v591 = vsub.f32 %v453, %v458
    %vm592 = vcmp.eq.f32.partialorder %v591, 0.0
    %v593 = vsel %vm592, 1.0, %v591
    %v594 = vrcp.pop %v593
    %v595 = vmul.f32 %v453, %v594
    %v596 = vsub.f32 %v330, %v313
    %v597 = vmul.f32 %v595, %v596
    %v598 = vadd.f32 %v313, %v597
    %v599 = vsub.f32 %v332, %v314
    %v600 = vmul.f32 %v595, %v599
    %v601 = vadd.f32 %v314, %v600
    %vm602 = vmand %vm517, %vm518
    %vm603 = vmxor %vm518, 1
    %vm604 = vmand %vm583, %vm603
    %v605 = vsel %vm604, %v59, %v598
    %v606 = vsel %vm602, %v313, %v605
    %v607 = vsel %vm604, %v67, %v601
    %v608 = vsel %vm602, %v314, %v607
    %v609 = vsel %vm518, %v330, %v606
    %v610 = vsel %vm518, %v332, %v608
    %v611 = vsub.f32 %v458, %v463
    %vm612 = vcmp.eq.f32.partialorder %v611, 0.0
    %v613 = vsel %vm612, 1.0, %v611
    %v614 = vrcp.pop %v613
    %v615 = vmul.f32 %v458, %v614
    %v616 = vsub.f32 %v333, %v330
    %v617 = vmul.f32 %v615, %v616
    %v618 = vadd.f32 %v330, %v617
    %v619 = vsub.f32 %v334, %v332
    %v620 = vmul.f32 %v615, %v619
    %v621 = vadd.f32 %v332, %v620
    %vm622 = vmand %vm518, %vm519
    %vm623 = vmxor %vm519, 1
    %vm624 = vmand %vm603, %vm623
    %v625 = vsel %vm624, %v59, %v618
    %v626 = vsel %vm622, %v330, %v625
    %v627 = vsel %vm624, %v67, %v621
    %v628 = vsel %vm622, %v332, %v627
    %v629 = vsel %vm519, %v333, %v626
    %v630 = vsel %vm519, %v334, %v628
    %v631 = vsub.f32 %v463, %v468
    %vm632 = vcmp.eq.f32.partialorder %v631, 0.0
    %v633 = vsel %vm632, 1.0, %v631
    %v634 = vrcp.pop %v633
    %v635 = vmul.f32 %v463, %v634
    %v636 = vsub.f32 %v350, %v333
    %v637 = vmul.f32 %v635, %v636
    %v638 = vadd.f32 %v333, %v637
    %v639 = vsub.f32 %v352, %v334
    %v640 = vmul.f32 %v635, %v639
    %v641 = vadd.f32 %v334, %v640
    %vm642 = vmand %vm519, %vm520
    %vm643 = vmxor %vm520, 1
    %vm644 = vmand %vm623, %vm643
    %v645 = vsel %vm644, %v59, %v638
    %v646 = vsel %vm642, %v333, %v645
    %v647 = vsel %vm644, %v67, %v641
    %v648 = vsel %vm642, %v334, %v647
    %v649 = vsel %vm520, %v350, %v646
    %v650 = vsel %vm520, %v352, %v648
    %v651 = vsub.f32 %v468, %v473
    %vm652 = vcmp.eq.f32.partialorder %v651, 0.0
    %v653 = vsel %vm652, 1.0, %v651
    %v654 = vrcp.pop %v653
    %v655 = vmul.f32 %v468, %v654
    %v656 = vsub.f32 %v353, %v350
    %v657 = vmul.f32 %v655, %v656
    %v658 = vadd.f32 %v350, %v657
    %v659 = vsub.f32 %v354, %v352
    %v660 = vmul.f32 %v655, %v659
    %v661 = vadd.f32 %v352, %v660
    %vm662 = vmand %vm520, %vm521
    %vm663 = vmxor %vm521, 1
    %vm664 = vmand %vm643, %vm663
    %v665 = vsel %vm664, %v59, %v658
    %v666 = vsel %vm662, %v350, %v665
    %v667 = vsel %vm664, %v67, %v661
    %v668 = vsel %vm662, %v352, %v667
    %v669 = vsel %vm521, %v353, %v666
    %v670 = vsel %vm521, %v354, %v668
    %v671 = vsub.f32 %v473, %v478
    %vm672 = vcmp.eq.f32.partialorder %v671, 0.0
    %v673 = vsel %vm672, 1.0, %v671
    %v674 = vrcp.pop %v673
    %v675 = vmul.f32 %v473, %v674
    %v676 = vsub.f32 %v370, %v353
    %v677 = vmul.f32 %v675, %v676
    %v678 = vadd.f32 %v353, %v677
    %v679 = vsub.f32 %v372, %v354
    %v680 = vmul.f32 %v675, %v679
    %v681 = vadd.f32 %v354, %v680
    %vm682 = vmand %vm521, %vm522
    %vm683 = vmxor %vm522, 1
    %vm684 = vmand %vm663, %vm683
    %v685 = vsel %vm684, %v59, %v678
    %v686 = vsel %vm682, %v353, %v685
    %v687 = vsel %vm684, %v67, %v681
    %v688 = vsel %vm682, %v354, %v687
    %v689 = vsel %vm522, %v370, %v686
    %v690 = vsel %vm522, %v372, %v688
    %v691 = vsub.f32 %v478, %v483
    %vm692 = vcmp.eq.f32.partialorder %v691, 0.0
    %v693 = vsel %vm692, 1.0, %v691
    %v694 = vrcp.pop %v693
    %v695 = vmul.f32 %v478, %v694
    %v696 = vsub.f32 %v373, %v370
    %v697 = vmul.f32 %v695, %v696
    %v698 = vadd.f32 %v370, %v697
    %v699 = vsub.f32 %v374, %v372
    %v700 = vmul.f32 %v695, %v699
    %v701 = vadd.f32 %v372, %v700
    %vm702 = vmand %vm522, %vm523
    %vm703 = vmxor %vm523, 1
    %vm704 = vmand %vm683, %vm703
    %v705 = vsel %vm704, %v59, %v698
    %v706 = vsel %vm702, %v370, %v705
    %v707 = vsel %vm704, %v67, %v701
    %v708 = vsel %vm702, %v372, %v707
    %v709 = vsel %vm523, %v373, %v706
    %v710 = vsel %vm523, %v374, %v708
    %v711 = vsub.f32 %v483, %v488
    %vm712 = vcmp.eq.f32.partialorder %v711, 0.0
    %v713 = vsel %vm712, 1.0, %v711
    %v714 = vrcp.pop %v713
    %v715 = vmul.f32 %v483, %v714
    %v716 = vsub.f32 %v390, %v373
    %v717 = vmul.f32 %v715, %v716
    %v718 = vadd.f32 %v373, %v717
    %v719 = vsub.f32 %v392, %v374
    %v720 = vmul.f32 %v715, %v719
    %v721 = vadd.f32 %v374, %v720
    %vm722 = vmand %vm523, %vm524
    %vm723 = vmxor %vm524, 1
    %vm724 = vmand %vm703, %vm723
    %v725 = vsel %vm724, %v59, %v718
    %v726 = vsel %vm722, %v373, %v725
    %v727 = vsel %vm724, %v67, %v721
    %v728 = vsel %vm722, %v374, %v727
    %v729 = vsel %vm524, %v390, %v726
    %v730 = vsel %vm524, %v392, %v728
    %v731 = vsub.f32 %v488, %v493
    %vm732 = vcmp.eq.f32.partialorder %v731, 0.0
    %v733 = vsel %vm732, 1.0, %v731
    %v734 = vrcp.pop %v733
    %v735 = vmul.f32 %v488, %v734
    %v736 = vsub.f32 %v393, %v390
    %v737 = vmul.f32 %v735, %v736
    %v738 = vadd.f32 %v390, %v737
    %v739 = vsub.f32 %v394, %v392
    %v740 = vmul.f32 %v735, %v739
    %v741 = vadd.f32 %v392, %v740
    %vm742 = vmand %vm524, %vm525
    %vm743 = vmxor %vm525, 1
    %vm744 = vmand %vm723, %vm743
    %v745 = vsel %vm744, %v59, %v738
    %v746 = vsel %vm742, %v390, %v745
    %v747 = vsel %vm744, %v67, %v741
    %v748 = vsel %vm742, %v392, %v747
    %v749 = vsel %vm525, %v393, %v746
    %v750 = vsel %vm525, %v394, %v748
    %v751 = vsub.f32 %v493, %v498
    %vm752 = vcmp.eq.f32.partialorder %v751, 0.0
    %v753 = vsel %vm752, 1.0, %v751
    %v754 = vrcp.pop %v753
    %v755 = vmul.f32 %v493, %v754
    %v756 = vsub.f32 %v410, %v393
    %v757 = vmul.f32 %v755, %v756
    %v758 = vadd.f32 %v393, %v757
    %v759 = vsub.f32 %v412, %v394
    %v760 = vmul.f32 %v755, %v759
    %v761 = vadd.f32 %v394, %v760
    %vm762 = vmand %vm525, %vm526
    %vm763 = vmxor %vm526, 1
    %vm764 = vmand %vm743, %vm763
    %v765 = vsel %vm764, %v59, %v758
    %v766 = vsel %vm762, %v393, %v765
    %v767 = vsel %vm764, %v67, %v761
    %v768 = vsel %vm762, %v394, %v767
    %v769 = vsel %vm526, %v410, %v766
    %v770 = vsel %vm526, %v412, %v768
    %v771 = vsub.f32 %v498, %v503
    %vm772 = vcmp.eq.f32.partialorder %v771, 0.0
    %v773 = vsel %vm772, 1.0, %v771
    %v774 = vrcp.pop %v773
    %v775 = vmul.f32 %v498, %v774
    %v776 = vsub.f32 %v413, %v410
    %v777 = vmul.f32 %v775, %v776
    %v778 = vadd.f32 %v410, %v777
    %v779 = vsub.f32 %v414, %v412
    %v780 = vmul.f32 %v775, %v779
    %v781 = vadd.f32 %v412, %v780
    %vm782 = vmand %vm526, %vm527
    %vm783 = vmxor %vm527, 1
    %vm784 = vmand %vm763, %vm783
    %v785 = vsel %vm784, %v59, %v778
    %v786 = vsel %vm782, %v410, %v785
    %v787 = vsel %vm784, %v67, %v781
    %v788 = vsel %vm782, %v412, %v787
    %v789 = vsel %vm527, %v413, %v786
    %v790 = vsel %vm527, %v414, %v788
    %v791 = vsub.f32 %v503, %v508
    %vm792 = vcmp.eq.f32.partialorder %v791, 0.0
    %v793 = vsel %vm792, 1.0, %v791
    %v794 = vrcp.pop %v793
    %v795 = vmul.f32 %v503, %v794
    %v796 = vsub.f32 %v429, %v413
    %v797 = vmul.f32 %v795, %v796
    %v798 = vadd.f32 %v413, %v797
    %v799 = vsub.f32 %v431, %v414
    %v800 = vmul.f32 %v795, %v799
    %v801 = vadd.f32 %v414, %v800
    %vm802 = vmand %vm527, %vm528
    %vm803 = vmxor %vm528, 1
    %vm804 = vmand %vm783, %vm803
    %v805 = vsel %vm804, %v59, %v798
    %v806 = vsel %vm802, %v413, %v805
    %v807 = vsel %vm804, %v67, %v801
    %v808 = vsel %vm802, %v414, %v807
    %v809 = vsel %vm528, %v429, %v806
    %v810 = vsel %vm528, %v431, %v808
    %v811 = vsub.f32 %v508, %v513
    %vm812 = vcmp.eq.f32.partialorder %v811, 0.0
    %v813 = vsel %vm812, 1.0, %v811
    %v814 = vrcp.pop %v813
    %v815 = vmul.f32 %v508, %v814
    %v816 = vsub.f32 %v432, %v429
    %v817 = vmul.f32 %v815, %v816
    %v818 = vadd.f32 %v429, %v817
    %v819 = vsub.f32 %v433, %v431
    %v820 = vmul.f32 %v815, %v819
    %v821 = vadd.f32 %v431, %v820
    %vm822 = vmand %vm528, %vm529
    %vm823 = vmxor %vm529, 1
    %vm824 = vmand %vm803, %vm823
    %v825 = vsel %vm824, %v59, %v818
    %v826 = vsel %vm822, %v429, %v825
    %v827 = vsel %vm824, %v67, %v821
    %v828 = vsel %vm822, %v431, %v827
    %v829 = vsel %vm529, %v432, %v826
    %v830 = vsel %vm529, %v433, %v828
    %v831 = vsub.f32 %v513, %v438
    %vm832 = vcmp.eq.f32.partialorder %v831, 0.0
    %v833 = vsel %vm832, 1.0, %v831
    %v834 = vrcp.pop %v833
    %v835 = vmul.f32 %v513, %v834
    %v836 = vsub.f32 %v290, %v432
    %v837 = vmul.f32 %v835, %v836
    %v838 = vadd.f32 %v432, %v837
    %v839 = vsub.f32 %v292, %v433
    %v840 = vmul.f32 %v835, %v839
    %v841 = vadd.f32 %v433, %v840
    %vm842 = vmand %vm529, %vm514
    %vm843 = vmand %vm823, %vm542
    %v844 = vsel %vm843, %v59, %v838
    %v845 = vsel %vm842, %v432, %v844
    %v846 = vsel %vm843, %v67, %v841
    %v847 = vsel %vm842, %v433, %v846
    %v848 = vsel %vm514, %v290, %v845
    %v849 = vsel %vm514, %v292, %v847
    %v850 = vsub.f32 %v548, %v69
    %v851 = vmul.f32 %v113, %v850
    %v852 = vsub.f32 %v546, %v61
    %v853 = vmul.f32 %v121, %v852
    %v854 = vsub.f32 %v851, %v853
    %v855 = vsub.f32 %v550, %v69
    %v856 = vmul.f32 %v113, %v855
    %v857 = vsub.f32 %v549, %v61
    %v858 = vmul.f32 %v121, %v857
    %v859 = vsub.f32 %v856, %v858
    %v860 = vsub.f32 %v568, %v69
    %v861 = vmul.f32 %v113, %v860
    %v862 = vsub.f32 %v566, %v61
    %v863 = vmul.f32 %v121, %v862
    %v864 = vsub.f32 %v861, %v863
    %v865 = vsub.f32 %v570, %v69
    %v866 = vmul.f32 %v113, %v865
    %v867 = vsub.f32 %v569, %v61
    %v868 = vmul.f32 %v121, %v867
    %v869 = vsub.f32 %v866, %v868
    %v870 = vsub.f32 %v588, %v69
    %v871 = vmul.f32 %v113, %v870
    %v872 = vsub.f32 %v586, %v61
    %v873 = vmul.f32 %v121, %v872
    %v874 = vsub.f32 %v871, %v873
    %v875 = vsub.f32 %v590, %v69
    %v876 = vmul.f32 %v113, %v875
    %v877 = vsub.f32 %v589, %v61
    %v878 = vmul.f32 %v121, %v877
    %v879 = vsub.f32 %v876, %v878
    %v880 = vsub.f32 %v608, %v69
    %v881 = vmul.f32 %v113, %v880
    %v882 = vsub.f32 %v606, %v61
    %v883 = vmul.f32 %v121, %v882
    %v884 = vsub.f32 %v881, %v883
    %v885 = vsub.f32 %v610, %v69
    %v886 = vmul.f32 %v113, %v885
    %v887 = vsub.f32 %v609, %v61
    %v888 = vmul.f32 %v121, %v887
    %v889 = vsub.f32 %v886, %v888
    %v890 = vsub.f32 %v628, %v69
    %v891 = vmul.f32 %v113, %v890
    %v892 = vsub.f32 %v626, %v61
    %v893 = vmul.f32 %v121, %v892
    %v894 = vsub.f32 %v891, %v893
    %v895 = vsub.f32 %v630, %v69
    %v896 = vmul.f32 %v113, %v895
    %v897 = vsub.f32 %v629, %v61
    %v898 = vmul.f32 %v121, %v897
    %v899 = vsub.f32 %v896, %v898
    %v900 = vsub.f32 %v648, %v69
    %v901 = vmul.f32 %v113, %v900
    %v902 = vsub.f32 %v646, %v61
    %v903 = vmul.f32 %v121, %v902
    %v904 = vsub.f32 %v901, %v903
    %v905 = vsub.f32 %v650, %v69
    %v906 = vmul.f32 %v113, %v905
    %v907 = vsub.f32 %v649, %v61
    %v908 = vmul.f32 %v121, %v907
    %v909 = vsub.f32 %v906, %v908
    %v910 = vsub.f32 %v668, %v69
    %v911 = vmul.f32 %v113, %v910
    %v912 = vsub.f32 %v666, %v61
    %v913 = vmul.f32 %v121, %v912
    %v914 = vsub.f32 %v911, %v913
    %v915 = vsub.f32 %v670, %v69
    %v916 = vmul.f32 %v113, %v915
    %v917 = vsub.f32 %v669, %v61
    %v918 = vmul.f32 %v121, %v917
    %v919 = vsub.f32 %v916, %v918
    %v920 = vsub.f32 %v688, %v69
    %v921 = vmul.f32 %v113, %v920
    %v922 = vsub.f32 %v686, %v61
    %v923 = vmul.f32 %v121, %v922
    %v924 = vsub.f32 %v921, %v923
    %v925 = vsub.f32 %v690, %v69
    %v926 = vmul.f32 %v113, %v925
    %v927 = vsub.f32 %v689, %v61
    %v928 = vmul.f32 %v121, %v927
    %v929 = vsub.f32 %v926, %v928
    %v930 = vsub.f32 %v708, %v69
    %v931 = vmul.f32 %v113, %v930
    %v932 = vsub.f32 %v706, %v61
    %v933 = vmul.f32 %v121, %v932
    %v934 = vsub.f32 %v931, %v933
    %v935 = vsub.f32 %v710, %v69
    %v936 = vmul.f32 %v113, %v935
    %v937 = vsub.f32 %v709, %v61
    %v938 = vmul.f32 %v121, %v937
    %v939 = vsub.f32 %v936, %v938
    %v940 = vsub.f32 %v728, %v69
    %v941 = vmul.f32 %v113, %v940
    %v942 = vsub.f32 %v726, %v61
    %v943 = vmul.f32 %v121, %v942
    %v944 = vsub.f32 %v941, %v943
    %v945 = vsub.f32 %v730, %v69
    %v946 = vmul.f32 %v113, %v945
    %v947 = vsub.f32 %v729, %v61
    %v948 = vmul.f32 %v121, %v947
    %v949 = vsub.f32 %v946, %v948
    %v950 = vsub.f32 %v748, %v69
    %v951 = vmul.f32 %v113, %v950
    %v952 = vsub.f32 %v746, %v61
    %v953 = vmul.f32 %v121, %v952
    %v954 = vsub.f32 %v951, %v953
    %v955 = vsub.f32 %v750, %v69
    %v956 = vmul.f32 %v113, %v955
    %v957 = vsub.f32 %v749, %v61
    %v958 = vmul.f32 %v121, %v957
    %v959 = vsub.f32 %v956, %v958
    %v960 = vsub.f32 %v768, %v69
    %v961 = vmul.f32 %v113, %v960
    %v962 = vsub.f32 %v766, %v61
    %v963 = vmul.f32 %v121, %v962
    %v964 = vsub.f32 %v961, %v963
    %v965 = vsub.f32 %v770, %v69
    %v966 = vmul.f32 %v113, %v965
    %v967 = vsub.f32 %v769, %v61
    %v968 = vmul.f32 %v121, %v967
    %v969 = vsub.f32 %v966, %v968
    %v970 = vsub.f32 %v788, %v69
    %v971 = vmul.f32 %v113, %v970
    %v972 = vsub.f32 %v786, %v61
    %v973 = vmul.f32 %v121, %v972
    %v974 = vsub.f32 %v971, %v973
    %v975 = vsub.f32 %v790, %v69
    %v976 = vmul.f32 %v113, %v975
    %v977 = vsub.f32 %v789, %v61
    %v978 = vmul.f32 %v121, %v977
    %v979 = vsub.f32 %v976, %v978
    %v980 = vsub.f32 %v808, %v69
    %v981 = vmul.f32 %v113, %v980
    %v982 = vsub.f32 %v806, %v61
    %v983 = vmul.f32 %v121, %v982
    %v984 = vsub.f32 %v981, %v983
    %v985 = vsub.f32 %v810, %v69
    %v986 = vmul.f32 %v113, %v985
    %v987 = vsub.f32 %v809, %v61
    %v988 = vmul.f32 %v121, %v987
    %v989 = vsub.f32 %v986, %v988
    %v990 = vsub.f32 %v828, %v69
    %v991 = vmul.f32 %v113, %v990
    %v992 = vsub.f32 %v826, %v61
    %v993 = vmul.f32 %v121, %v992
    %v994 = vsub.f32 %v991, %v993
    %v995 = vsub.f32 %v830, %v69
    %v996 = vmul.f32 %v113, %v995
    %v997 = vsub.f32 %v829, %v61
    %v998 = vmul.f32 %v121, %v997
    %v999 = vsub.f32 %v996, %v998
    %v1000 = vsub.f32 %v847, %v69
    %v1001 = vmul.f32 %v113, %v1000
    %v1002 = vsub.f32 %v845, %v61
    %v1003 = vmul.f32 %v121, %v1002
    %v1004 = vsub.f32 %v1001, %v1003
    %v1005 = vsub.f32 %v849, %v69
    %v1006 = vmul.f32 %v113, %v1005
    %v1007 = vsub.f32 %v848, %v61
    %v1008 = vmul.f32 %v121, %v1007
    %v1009 = vsub.f32 %v1006, %v1008
    %vm1010 = vcmp.ge.f32.partialorder %v854, 0.0
    %vm1011 = vcmp.ge.f32.partialorder %v859, 0.0
    %vm1012 = vcmp.ge.f32.partialorder %v864, 0.0
    %vm1013 = vcmp.ge.f32.partialorder %v869, 0.0
    %vm1014 = vcmp.ge.f32.partialorder %v874, 0.0
    %vm1015 = vcmp.ge.f32.partialorder %v879, 0.0
    %vm1016 = vcmp.ge.f32.partialorder %v884, 0.0
    %vm1017 = vcmp.ge.f32.partialorder %v889, 0.0
    %vm1018 = vcmp.ge.f32.partialorder %v894, 0.0
    %vm1019 = vcmp.ge.f32.partialorder %v899, 0.0
    %vm1020 = vcmp.ge.f32.partialorder %v904, 0.0
    %vm1021 = vcmp.ge.f32.partialorder %v909, 0.0
    %vm1022 = vcmp.ge.f32.partialorder %v914, 0.0
    %vm1023 = vcmp.ge.f32.partialorder %v919, 0.0
    %vm1024 = vcmp.ge.f32.partialorder %v924, 0.0
    %vm1025 = vcmp.ge.f32.partialorder %v929, 0.0
    %vm1026 = vcmp.ge.f32.partialorder %v934, 0.0
    %vm1027 = vcmp.ge.f32.partialorder %v939, 0.0
    %vm1028 = vcmp.ge.f32.partialorder %v944, 0.0
    %vm1029 = vcmp.ge.f32.partialorder %v949, 0.0
    %vm1030 = vcmp.ge.f32.partialorder %v954, 0.0
    %vm1031 = vcmp.ge.f32.partialorder %v959, 0.0
    %vm1032 = vcmp.ge.f32.partialorder %v964, 0.0
    %vm1033 = vcmp.ge.f32.partialorder %v969, 0.0
    %vm1034 = vcmp.ge.f32.partialorder %v974, 0.0
    %vm1035 = vcmp.ge.f32.partialorder %v979, 0.0
    %vm1036 = vcmp.ge.f32.partialorder %v984, 0.0
    %vm1037 = vcmp.ge.f32.partialorder %v989, 0.0
    %vm1038 = vcmp.ge.f32.partialorder %v994, 0.0
    %vm1039 = vcmp.ge.f32.partialorder %v999, 0.0
    %vm1040 = vcmp.ge.f32.partialorder %v1004, 0.0
    %vm1041 = vcmp.ge.f32.partialorder %v1009, 0.0
    %v1042 = vsub.f32 %v854, %v859
    %vm1043 = vcmp.eq.f32.partialorder %v1042, 0.0
    %v1044 = vsel %vm1043, 1.0, %v1042
    %v1045 = vrcp.pop %v1044
    %v1046 = vmul.f32 %v854, %v1045
    %v1047 = vsub.f32 %v549, %v546
    %v1048 = vmul.f32 %v1046, %v1047
    %v1049 = vadd.f32 %v546, %v1048
    %v1050 = vsub.f32 %v550, %v548
    %v1051 = vmul.f32 %v1046, %v1050
    %v1052 = vadd.f32 %v548, %v1051
    %vm1053 = vmand %vm1010, %vm1011
    %vm1054 = vmxor %vm1010, 1
    %vm1055 = vmxor %vm1011, 1
    %vm1056 = vmand %vm1054, %vm1055
    %v1057 = vsel %vm1056, %v61, %v1049
    %v1058 = vsel %vm1053, %v546, %v1057
    %v1059 = vsel %vm1056, %v69, %v1052
    %v1060 = vsel %vm1053, %v548, %v1059
    %v1061 = vsel %vm1011, %v549, %v1058
    %v1062 = vsel %vm1011, %v550, %v1060
    %v1063 = vmul.f32 %v1058, %v1062
    %v1064 = vmul.f32 %v1061, %v1060
    %v1065 = vsub.f32 %v1063, %v1064
    %v1066 = vsub.f32 %v859, %v864
    %vm1067 = vcmp.eq.f32.partialorder %v1066, 0.0
    %v1068 = vsel %vm1067, 1.0, %v1066
    %v1069 = vrcp.pop %v1068
    %v1070 = vmul.f32 %v859, %v1069
    %v1071 = vsub.f32 %v566, %v549
    %v1072 = vmul.f32 %v1070, %v1071
    %v1073 = vadd.f32 %v549, %v1072
    %v1074 = vsub.f32 %v568, %v550
    %v1075 = vmul.f32 %v1070, %v1074
    %v1076 = vadd.f32 %v550, %v1075
    %vm1077 = vmand %vm1011, %vm1012
    %vm1078 = vmxor %vm1012, 1
    %vm1079 = vmand %vm1055, %vm1078
    %v1080 = vsel %vm1079, %v61, %v1073
    %v1081 = vsel %vm1077, %v549, %v1080
    %v1082 = vsel %vm1079, %v69, %v1076
    %v1083 = vsel %vm1077, %v550, %v1082
    %v1084 = vsel %vm1012, %v566, %v1081
    %v1085 = vsel %vm1012, %v568, %v1083
    %v1086 = vmul.f32 %v1061, %v1083
    %v1087 = vmul.f32 %v1081, %v1062
    %v1088 = vsub.f32 %v1086, %v1087
    %v1089 = vadd.f32 %v1065, %v1088
    %v1090 = vmul.f32 %v1081, %v1085
    %v1091 = vmul.f32 %v1084, %v1083
    %v1092 = vsub.f32 %v1090, %v1091
    %v1093 = vadd.f32 %v1089, %v1092
    %v1094 = vsub.f32 %v864, %v869
    %vm1095 = vcmp.eq.f32.partialorder %v1094, 0.0
    %v1096 = vsel %vm1095, 1.0, %v1094
    %v1097 = vrcp.pop %v1096
    %v1098 = vmul.f32 %v864, %v1097
    %v1099 = vsub.f32 %v569, %v566
    %v1100 = vmul.f32 %v1098, %v1099
    %v1101 = vadd.f32 %v566, %v1100
    %v1102 = vsub.f32 %v570, %v568
    %v1103 = vmul.f32 %v1098, %v1102
    %v1104 = vadd.f32 %v568, %v1103
    %vm1105 = vmand %vm1012, %vm1013
    %vm1106 = vmxor %vm1013, 1
    %vm1107 = vmand %vm1078, %vm1106
    %v1108 = vsel %vm1107, %v61, %v1101
    %v1109 = vsel %vm1105, %v566, %v1108
    %v1110 = vsel %vm1107, %v69, %v1104
    %v1111 = vsel %vm1105, %v568, %v1110
    %v1112 = vsel %vm1013, %v569, %v1109
    %v1113 = vsel %vm1013, %v570, %v1111
    %v1114 = vmul.f32 %v1084, %v1111
    %v1115 = vmul.f32 %v1109, %v1085
    %v1116 = vsub.f32 %v1114, %v1115
    %v1117 = vadd.f32 %v1093, %v1116
    %v1118 = vmul.f32 %v1109, %v1113
    %v1119 = vmul.f32 %v1112, %v1111
    %v1120 = vsub.f32 %v1118, %v1119
    %v1121 = vadd.f32 %v1117, %v1120
    %v1122 = vsub.f32 %v869, %v874
    %vm1123 = vcmp.eq.f32.partialorder %v1122, 0.0
    %v1124 = vsel %vm1123, 1.0, %v1122
    %v1125 = vrcp.pop %v1124
    %v1126 = vmul.f32 %v869, %v1125
    %v1127 = vsub.f32 %v586, %v569
    %v1128 = vmul.f32 %v1126, %v1127
    %v1129 = vadd.f32 %v569, %v1128
    %v1130 = vsub.f32 %v588, %v570
    %v1131 = vmul.f32 %v1126, %v1130
    %v1132 = vadd.f32 %v570, %v1131
    %vm1133 = vmand %vm1013, %vm1014
    %vm1134 = vmxor %vm1014, 1
    %vm1135 = vmand %vm1106, %vm1134
    %v1136 = vsel %vm1135, %v61, %v1129
    %v1137 = vsel %vm1133, %v569, %v1136
    %v1138 = vsel %vm1135, %v69, %v1132
    %v1139 = vsel %vm1133, %v570, %v1138
    %v1140 = vsel %vm1014, %v586, %v1137
    %v1141 = vsel %vm1014, %v588, %v1139
    %v1142 = vmul.f32 %v1112, %v1139
    %v1143 = vmul.f32 %v1137, %v1113
    %v1144 = vsub.f32 %v1142, %v1143
    %v1145 = vadd.f32 %v1121, %v1144
    %v1146 = vmul.f32 %v1137, %v1141
    %v1147 = vmul.f32 %v1140, %v1139
    %v1148 = vsub.f32 %v1146, %v1147
    %v1149 = vadd.f32 %v1145, %v1148
    %v1150 = vsub.f32 %v874, %v879
    %vm1151 = vcmp.eq.f32.partialorder %v1150, 0.0
    %v1152 = vsel %vm1151, 1.0, %v1150
    %v1153 = vrcp.pop %v1152
    %v1154 = vmul.f32 %v874, %v1153
    %v1155 = vsub.f32 %v589, %v586
    %v1156 = vmul.f32 %v1154, %v1155
    %v1157 = vadd.f32 %v586, %v1156
    %v1158 = vsub.f32 %v590, %v588
    %v1159 = vmul.f32 %v1154, %v1158
    %v1160 = vadd.f32 %v588, %v1159
    %vm1161 = vmand %vm1014, %vm1015
    %vm1162 = vmxor %vm1015, 1
    %vm1163 = vmand %vm1134, %vm1162
    %v1164 = vsel %vm1163, %v61, %v1157
    %v1165 = vsel %vm1161, %v586, %v1164
    %v1166 = vsel %vm1163, %v69, %v1160
    %v1167 = vsel %vm1161, %v588, %v1166
    %v1168 = vsel %vm1015, %v589, %v1165
    %v1169 = vsel %vm1015, %v590, %v1167
    %v1170 = vmul.f32 %v1140, %v1167
    %v1171 = vmul.f32 %v1165, %v1141
    %v1172 = vsub.f32 %v1170, %v1171
    %v1173 = vadd.f32 %v1149, %v1172
    %v1174 = vmul.f32 %v1165, %v1169
    %v1175 = vmul.f32 %v1168, %v1167
    %v1176 = vsub.f32 %v1174, %v1175
    %v1177 = vadd.f32 %v1173, %v1176
    %v1178 = vsub.f32 %v879, %v884
    %vm1179 = vcmp.eq.f32.partialorder %v1178, 0.0
    %v1180 = vsel %vm1179, 1.0, %v1178
    %v1181 = vrcp.pop %v1180
    %v1182 = vmul.f32 %v879, %v1181
    %v1183 = vsub.f32 %v606, %v589
    %v1184 = vmul.f32 %v1182, %v1183
    %v1185 = vadd.f32 %v589, %v1184
    %v1186 = vsub.f32 %v608, %v590
    %v1187 = vmul.f32 %v1182, %v1186
    %v1188 = vadd.f32 %v590, %v1187
    %vm1189 = vmand %vm1015, %vm1016
    %vm1190 = vmxor %vm1016, 1
    %vm1191 = vmand %vm1162, %vm1190
    %v1192 = vsel %vm1191, %v61, %v1185
    %v1193 = vsel %vm1189, %v589, %v1192
    %v1194 = vsel %vm1191, %v69, %v1188
    %v1195 = vsel %vm1189, %v590, %v1194
    %v1196 = vsel %vm1016, %v606, %v1193
    %v1197 = vsel %vm1016, %v608, %v1195
    %v1198 = vmul.f32 %v1168, %v1195
    %v1199 = vmul.f32 %v1193, %v1169
    %v1200 = vsub.f32 %v1198, %v1199
    %v1201 = vadd.f32 %v1177, %v1200
    %v1202 = vmul.f32 %v1193, %v1197
    %v1203 = vmul.f32 %v1196, %v1195
    %v1204 = vsub.f32 %v1202, %v1203
    %v1205 = vadd.f32 %v1201, %v1204
    %v1206 = vsub.f32 %v884, %v889
    %vm1207 = vcmp.eq.f32.partialorder %v1206, 0.0
    %v1208 = vsel %vm1207, 1.0, %v1206
    %v1209 = vrcp.pop %v1208
    %v1210 = vmul.f32 %v884, %v1209
    %v1211 = vsub.f32 %v609, %v606
    %v1212 = vmul.f32 %v1210, %v1211
    %v1213 = vadd.f32 %v606, %v1212
    %v1214 = vsub.f32 %v610, %v608
    %v1215 = vmul.f32 %v1210, %v1214
    %v1216 = vadd.f32 %v608, %v1215
    %vm1217 = vmand %vm1016, %vm1017
    %vm1218 = vmxor %vm1017, 1
    %vm1219 = vmand %vm1190, %vm1218
    %v1220 = vsel %vm1219, %v61, %v1213
    %v1221 = vsel %vm1217, %v606, %v1220
    %v1222 = vsel %vm1219, %v69, %v1216
    %v1223 = vsel %vm1217, %v608, %v1222
    %v1224 = vsel %vm1017, %v609, %v1221
    %v1225 = vsel %vm1017, %v610, %v1223
    %v1226 = vmul.f32 %v1196, %v1223
    %v1227 = vmul.f32 %v1221, %v1197
    %v1228 = vsub.f32 %v1226, %v1227
    %v1229 = vadd.f32 %v1205, %v1228
    %v1230 = vmul.f32 %v1221, %v1225
    %v1231 = vmul.f32 %v1224, %v1223
    %v1232 = vsub.f32 %v1230, %v1231
    %v1233 = vadd.f32 %v1229, %v1232
    %v1234 = vsub.f32 %v889, %v894
    %vm1235 = vcmp.eq.f32.partialorder %v1234, 0.0
    %v1236 = vsel %vm1235, 1.0, %v1234
    %v1237 = vrcp.pop %v1236
    %v1238 = vmul.f32 %v889, %v1237
    %v1239 = vsub.f32 %v626, %v609
    %v1240 = vmul.f32 %v1238, %v1239
    %v1241 = vadd.f32 %v609, %v1240
    %v1242 = vsub.f32 %v628, %v610
    %v1243 = vmul.f32 %v1238, %v1242
    %v1244 = vadd.f32 %v610, %v1243
    %vm1245 = vmand %vm1017, %vm1018
    %vm1246 = vmxor %vm1018, 1
    %vm1247 = vmand %vm1218, %vm1246
    %v1248 = vsel %vm1247, %v61, %v1241
    %v1249 = vsel %vm1245, %v609, %v1248
    %v1250 = vsel %vm1247, %v69, %v1244
    %v1251 = vsel %vm1245, %v610, %v1250
    %v1252 = vsel %vm1018, %v626, %v1249
    %v1253 = vsel %vm1018, %v628, %v1251
    %v1254 = vmul.f32 %v1224, %v1251
    %v1255 = vmul.f32 %v1249, %v1225
    %v1256 = vsub.f32 %v1254, %v1255
    %v1257 = vadd.f32 %v1233, %v1256
    %v1258 = vmul.f32 %v1249, %v1253
    %v1259 = vmul.f32 %v1252, %v1251
    %v1260 = vsub.f32 %v1258, %v1259
    %v1261 = vadd.f32 %v1257, %v1260
    %v1262 = vsub.f32 %v894, %v899
    %vm1263 = vcmp.eq.f32.partialorder %v1262, 0.0
    %v1264 = vsel %vm1263, 1.0, %v1262
    %v1265 = vrcp.pop %v1264
    %v1266 = vmul.f32 %v894, %v1265
    %v1267 = vsub.f32 %v629, %v626
    %v1268 = vmul.f32 %v1266, %v1267
    %v1269 = vadd.f32 %v626, %v1268
    %v1270 = vsub.f32 %v630, %v628
    %v1271 = vmul.f32 %v1266, %v1270
    %v1272 = vadd.f32 %v628, %v1271
    %vm1273 = vmand %vm1018, %vm1019
    %vm1274 = vmxor %vm1019, 1
    %vm1275 = vmand %vm1246, %vm1274
    %v1276 = vsel %vm1275, %v61, %v1269
    %v1277 = vsel %vm1273, %v626, %v1276
    %v1278 = vsel %vm1275, %v69, %v1272
    %v1279 = vsel %vm1273, %v628, %v1278
    %v1280 = vsel %vm1019, %v629, %v1277
    %v1281 = vsel %vm1019, %v630, %v1279
    %v1282 = vmul.f32 %v1252, %v1279
    %v1283 = vmul.f32 %v1277, %v1253
    %v1284 = vsub.f32 %v1282, %v1283
    %v1285 = vadd.f32 %v1261, %v1284
    %v1286 = vmul.f32 %v1277, %v1281
    %v1287 = vmul.f32 %v1280, %v1279
    %v1288 = vsub.f32 %v1286, %v1287
    %v1289 = vadd.f32 %v1285, %v1288
    %v1290 = vsub.f32 %v899, %v904
    %vm1291 = vcmp.eq.f32.partialorder %v1290, 0.0
    %v1292 = vsel %vm1291, 1.0, %v1290
    %v1293 = vrcp.pop %v1292
    %v1294 = vmul.f32 %v899, %v1293
    %v1295 = vsub.f32 %v646, %v629
    %v1296 = vmul.f32 %v1294, %v1295
    %v1297 = vadd.f32 %v629, %v1296
    %v1298 = vsub.f32 %v648, %v630
    %v1299 = vmul.f32 %v1294, %v1298
    %v1300 = vadd.f32 %v630, %v1299
    %vm1301 = vmand %vm1019, %vm1020
    %vm1302 = vmxor %vm1020, 1
    %vm1303 = vmand %vm1274, %vm1302
    %v1304 = vsel %vm1303, %v61, %v1297
    %v1305 = vsel %vm1301, %v629, %v1304
    %v1306 = vsel %vm1303, %v69, %v1300
    %v1307 = vsel %vm1301, %v630, %v1306
    %v1308 = vsel %vm1020, %v646, %v1305
    %v1309 = vsel %vm1020, %v648, %v1307
    %v1310 = vmul.f32 %v1280, %v1307
    %v1311 = vmul.f32 %v1305, %v1281
    %v1312 = vsub.f32 %v1310, %v1311
    %v1313 = vadd.f32 %v1289, %v1312
    %v1314 = vmul.f32 %v1305, %v1309
    %v1315 = vmul.f32 %v1308, %v1307
    %v1316 = vsub.f32 %v1314, %v1315
    %v1317 = vadd.f32 %v1313, %v1316
    %v1318 = vsub.f32 %v904, %v909
    %vm1319 = vcmp.eq.f32.partialorder %v1318, 0.0
    %v1320 = vsel %vm1319, 1.0, %v1318
    %v1321 = vrcp.pop %v1320
    %v1322 = vmul.f32 %v904, %v1321
    %v1323 = vsub.f32 %v649, %v646
    %v1324 = vmul.f32 %v1322, %v1323
    %v1325 = vadd.f32 %v646, %v1324
    %v1326 = vsub.f32 %v650, %v648
    %v1327 = vmul.f32 %v1322, %v1326
    %v1328 = vadd.f32 %v648, %v1327
    %vm1329 = vmand %vm1020, %vm1021
    %vm1330 = vmxor %vm1021, 1
    %vm1331 = vmand %vm1302, %vm1330
    %v1332 = vsel %vm1331, %v61, %v1325
    %v1333 = vsel %vm1329, %v646, %v1332
    %v1334 = vsel %vm1331, %v69, %v1328
    %v1335 = vsel %vm1329, %v648, %v1334
    %v1336 = vsel %vm1021, %v649, %v1333
    %v1337 = vsel %vm1021, %v650, %v1335
    %v1338 = vmul.f32 %v1308, %v1335
    %v1339 = vmul.f32 %v1333, %v1309
    %v1340 = vsub.f32 %v1338, %v1339
    %v1341 = vadd.f32 %v1317, %v1340
    %v1342 = vmul.f32 %v1333, %v1337
    %v1343 = vmul.f32 %v1336, %v1335
    %v1344 = vsub.f32 %v1342, %v1343
    %v1345 = vadd.f32 %v1341, %v1344
    %v1346 = vsub.f32 %v909, %v914
    %vm1347 = vcmp.eq.f32.partialorder %v1346, 0.0
    %v1348 = vsel %vm1347, 1.0, %v1346
    %v1349 = vrcp.pop %v1348
    %v1350 = vmul.f32 %v909, %v1349
    %v1351 = vsub.f32 %v666, %v649
    %v1352 = vmul.f32 %v1350, %v1351
    %v1353 = vadd.f32 %v649, %v1352
    %v1354 = vsub.f32 %v668, %v650
    %v1355 = vmul.f32 %v1350, %v1354
    %v1356 = vadd.f32 %v650, %v1355
    %vm1357 = vmand %vm1021, %vm1022
    %vm1358 = vmxor %vm1022, 1
    %vm1359 = vmand %vm1330, %vm1358
    %v1360 = vsel %vm1359, %v61, %v1353
    %v1361 = vsel %vm1357, %v649, %v1360
    %v1362 = vsel %vm1359, %v69, %v1356
    %v1363 = vsel %vm1357, %v650, %v1362
    %v1364 = vsel %vm1022, %v666, %v1361
    %v1365 = vsel %vm1022, %v668, %v1363
    %v1366 = vmul.f32 %v1336, %v1363
    %v1367 = vmul.f32 %v1361, %v1337
    %v1368 = vsub.f32 %v1366, %v1367
    %v1369 = vadd.f32 %v1345, %v1368
    %v1370 = vmul.f32 %v1361, %v1365
    %v1371 = vmul.f32 %v1364, %v1363
    %v1372 = vsub.f32 %v1370, %v1371
    %v1373 = vadd.f32 %v1369, %v1372
    %v1374 = vsub.f32 %v914, %v919
    %vm1375 = vcmp.eq.f32.partialorder %v1374, 0.0
    %v1376 = vsel %vm1375, 1.0, %v1374
    %v1377 = vrcp.pop %v1376
    %v1378 = vmul.f32 %v914, %v1377
    %v1379 = vsub.f32 %v669, %v666
    %v1380 = vmul.f32 %v1378, %v1379
    %v1381 = vadd.f32 %v666, %v1380
    %v1382 = vsub.f32 %v670, %v668
    %v1383 = vmul.f32 %v1378, %v1382
    %v1384 = vadd.f32 %v668, %v1383
    %vm1385 = vmand %vm1022, %vm1023
    %vm1386 = vmxor %vm1023, 1
    %vm1387 = vmand %vm1358, %vm1386
    %v1388 = vsel %vm1387, %v61, %v1381
    %v1389 = vsel %vm1385, %v666, %v1388
    %v1390 = vsel %vm1387, %v69, %v1384
    %v1391 = vsel %vm1385, %v668, %v1390
    %v1392 = vsel %vm1023, %v669, %v1389
    %v1393 = vsel %vm1023, %v670, %v1391
    %v1394 = vmul.f32 %v1364, %v1391
    %v1395 = vmul.f32 %v1389, %v1365
    %v1396 = vsub.f32 %v1394, %v1395
    %v1397 = vadd.f32 %v1373, %v1396
    %v1398 = vmul.f32 %v1389, %v1393
    %v1399 = vmul.f32 %v1392, %v1391
    %v1400 = vsub.f32 %v1398, %v1399
    %v1401 = vadd.f32 %v1397, %v1400
    %v1402 = vsub.f32 %v919, %v924
    %vm1403 = vcmp.eq.f32.partialorder %v1402, 0.0
    %v1404 = vsel %vm1403, 1.0, %v1402
    %v1405 = vrcp.pop %v1404
    %v1406 = vmul.f32 %v919, %v1405
    %v1407 = vsub.f32 %v686, %v669
    %v1408 = vmul.f32 %v1406, %v1407
    %v1409 = vadd.f32 %v669, %v1408
    %v1410 = vsub.f32 %v688, %v670
    %v1411 = vmul.f32 %v1406, %v1410
    %v1412 = vadd.f32 %v670, %v1411
    %vm1413 = vmand %vm1023, %vm1024
    %vm1414 = vmxor %vm1024, 1
    %vm1415 = vmand %vm1386, %vm1414
    %v1416 = vsel %vm1415, %v61, %v1409
    %v1417 = vsel %vm1413, %v669, %v1416
    %v1418 = vsel %vm1415, %v69, %v1412
    %v1419 = vsel %vm1413, %v670, %v1418
    %v1420 = vsel %vm1024, %v686, %v1417
    %v1421 = vsel %vm1024, %v688, %v1419
    %v1422 = vmul.f32 %v1392, %v1419
    %v1423 = vmul.f32 %v1417, %v1393
    %v1424 = vsub.f32 %v1422, %v1423
    %v1425 = vadd.f32 %v1401, %v1424
    %v1426 = vmul.f32 %v1417, %v1421
    %v1427 = vmul.f32 %v1420, %v1419
    %v1428 = vsub.f32 %v1426, %v1427
    %v1429 = vadd.f32 %v1425, %v1428
    %v1430 = vsub.f32 %v924, %v929
    %vm1431 = vcmp.eq.f32.partialorder %v1430, 0.0
    %v1432 = vsel %vm1431, 1.0, %v1430
    %v1433 = vrcp.pop %v1432
    %v1434 = vmul.f32 %v924, %v1433
    %v1435 = vsub.f32 %v689, %v686
    %v1436 = vmul.f32 %v1434, %v1435
    %v1437 = vadd.f32 %v686, %v1436
    %v1438 = vsub.f32 %v690, %v688
    %v1439 = vmul.f32 %v1434, %v1438
    %v1440 = vadd.f32 %v688, %v1439
    %vm1441 = vmand %vm1024, %vm1025
    %vm1442 = vmxor %vm1025, 1
    %vm1443 = vmand %vm1414, %vm1442
    %v1444 = vsel %vm1443, %v61, %v1437
    %v1445 = vsel %vm1441, %v686, %v1444
    %v1446 = vsel %vm1443, %v69, %v1440
    %v1447 = vsel %vm1441, %v688, %v1446
    %v1448 = vsel %vm1025, %v689, %v1445
    %v1449 = vsel %vm1025, %v690, %v1447
    %v1450 = vmul.f32 %v1420, %v1447
    %v1451 = vmul.f32 %v1445, %v1421
    %v1452 = vsub.f32 %v1450, %v1451
    %v1453 = vadd.f32 %v1429, %v1452
    %v1454 = vmul.f32 %v1445, %v1449
    %v1455 = vmul.f32 %v1448, %v1447
    %v1456 = vsub.f32 %v1454, %v1455
    %v1457 = vadd.f32 %v1453, %v1456
    %v1458 = vsub.f32 %v929, %v934
    %vm1459 = vcmp.eq.f32.partialorder %v1458, 0.0
    %v1460 = vsel %vm1459, 1.0, %v1458
    %v1461 = vrcp.pop %v1460
    %v1462 = vmul.f32 %v929, %v1461
    %v1463 = vsub.f32 %v706, %v689
    %v1464 = vmul.f32 %v1462, %v1463
    %v1465 = vadd.f32 %v689, %v1464
    %v1466 = vsub.f32 %v708, %v690
    %v1467 = vmul.f32 %v1462, %v1466
    %v1468 = vadd.f32 %v690, %v1467
    %vm1469 = vmand %vm1025, %vm1026
    %vm1470 = vmxor %vm1026, 1
    %vm1471 = vmand %vm1442, %vm1470
    %v1472 = vsel %vm1471, %v61, %v1465
    %v1473 = vsel %vm1469, %v689, %v1472
    %v1474 = vsel %vm1471, %v69, %v1468
    %v1475 = vsel %vm1469, %v690, %v1474
    %v1476 = vsel %vm1026, %v706, %v1473
    %v1477 = vsel %vm1026, %v708, %v1475
    %v1478 = vmul.f32 %v1448, %v1475
    %v1479 = vmul.f32 %v1473, %v1449
    %v1480 = vsub.f32 %v1478, %v1479
    %v1481 = vadd.f32 %v1457, %v1480
    %v1482 = vmul.f32 %v1473, %v1477
    %v1483 = vmul.f32 %v1476, %v1475
    %v1484 = vsub.f32 %v1482, %v1483
    %v1485 = vadd.f32 %v1481, %v1484
    %v1486 = vsub.f32 %v934, %v939
    %vm1487 = vcmp.eq.f32.partialorder %v1486, 0.0
    %v1488 = vsel %vm1487, 1.0, %v1486
    %v1489 = vrcp.pop %v1488
    %v1490 = vmul.f32 %v934, %v1489
    %v1491 = vsub.f32 %v709, %v706
    %v1492 = vmul.f32 %v1490, %v1491
    %v1493 = vadd.f32 %v706, %v1492
    %v1494 = vsub.f32 %v710, %v708
    %v1495 = vmul.f32 %v1490, %v1494
    %v1496 = vadd.f32 %v708, %v1495
    %vm1497 = vmand %vm1026, %vm1027
    %vm1498 = vmxor %vm1027, 1
    %vm1499 = vmand %vm1470, %vm1498
    %v1500 = vsel %vm1499, %v61, %v1493
    %v1501 = vsel %vm1497, %v706, %v1500
    %v1502 = vsel %vm1499, %v69, %v1496
    %v1503 = vsel %vm1497, %v708, %v1502
    %v1504 = vsel %vm1027, %v709, %v1501
    %v1505 = vsel %vm1027, %v710, %v1503
    %v1506 = vmul.f32 %v1476, %v1503
    %v1507 = vmul.f32 %v1501, %v1477
    %v1508 = vsub.f32 %v1506, %v1507
    %v1509 = vadd.f32 %v1485, %v1508
    %v1510 = vmul.f32 %v1501, %v1505
    %v1511 = vmul.f32 %v1504, %v1503
    %v1512 = vsub.f32 %v1510, %v1511
    %v1513 = vadd.f32 %v1509, %v1512
    %v1514 = vsub.f32 %v939, %v944
    %vm1515 = vcmp.eq.f32.partialorder %v1514, 0.0
    %v1516 = vsel %vm1515, 1.0, %v1514
    %v1517 = vrcp.pop %v1516
    %v1518 = vmul.f32 %v939, %v1517
    %v1519 = vsub.f32 %v726, %v709
    %v1520 = vmul.f32 %v1518, %v1519
    %v1521 = vadd.f32 %v709, %v1520
    %v1522 = vsub.f32 %v728, %v710
    %v1523 = vmul.f32 %v1518, %v1522
    %v1524 = vadd.f32 %v710, %v1523
    %vm1525 = vmand %vm1027, %vm1028
    %vm1526 = vmxor %vm1028, 1
    %vm1527 = vmand %vm1498, %vm1526
    %v1528 = vsel %vm1527, %v61, %v1521
    %v1529 = vsel %vm1525, %v709, %v1528
    %v1530 = vsel %vm1527, %v69, %v1524
    %v1531 = vsel %vm1525, %v710, %v1530
    %v1532 = vsel %vm1028, %v726, %v1529
    %v1533 = vsel %vm1028, %v728, %v1531
    %v1534 = vmul.f32 %v1504, %v1531
    %v1535 = vmul.f32 %v1529, %v1505
    %v1536 = vsub.f32 %v1534, %v1535
    %v1537 = vadd.f32 %v1513, %v1536
    %v1538 = vmul.f32 %v1529, %v1533
    %v1539 = vmul.f32 %v1532, %v1531
    %v1540 = vsub.f32 %v1538, %v1539
    %v1541 = vadd.f32 %v1537, %v1540
    %v1542 = vsub.f32 %v944, %v949
    %vm1543 = vcmp.eq.f32.partialorder %v1542, 0.0
    %v1544 = vsel %vm1543, 1.0, %v1542
    %v1545 = vrcp.pop %v1544
    %v1546 = vmul.f32 %v944, %v1545
    %v1547 = vsub.f32 %v729, %v726
    %v1548 = vmul.f32 %v1546, %v1547
    %v1549 = vadd.f32 %v726, %v1548
    %v1550 = vsub.f32 %v730, %v728
    %v1551 = vmul.f32 %v1546, %v1550
    %v1552 = vadd.f32 %v728, %v1551
    %vm1553 = vmand %vm1028, %vm1029
    %vm1554 = vmxor %vm1029, 1
    %vm1555 = vmand %vm1526, %vm1554
    %v1556 = vsel %vm1555, %v61, %v1549
    %v1557 = vsel %vm1553, %v726, %v1556
    %v1558 = vsel %vm1555, %v69, %v1552
    %v1559 = vsel %vm1553, %v728, %v1558
    %v1560 = vsel %vm1029, %v729, %v1557
    %v1561 = vsel %vm1029, %v730, %v1559
    %v1562 = vmul.f32 %v1532, %v1559
    %v1563 = vmul.f32 %v1557, %v1533
    %v1564 = vsub.f32 %v1562, %v1563
    %v1565 = vadd.f32 %v1541, %v1564
    %v1566 = vmul.f32 %v1557, %v1561
    %v1567 = vmul.f32 %v1560, %v1559
    %v1568 = vsub.f32 %v1566, %v1567
    %v1569 = vadd.f32 %v1565, %v1568
    %v1570 = vsub.f32 %v949, %v954
    %vm1571 = vcmp.eq.f32.partialorder %v1570, 0.0
    %v1572 = vsel %vm1571, 1.0, %v1570
    %v1573 = vrcp.pop %v1572
    %v1574 = vmul.f32 %v949, %v1573
    %v1575 = vsub.f32 %v746, %v729
    %v1576 = vmul.f32 %v1574, %v1575
    %v1577 = vadd.f32 %v729, %v1576
    %v1578 = vsub.f32 %v748, %v730
    %v1579 = vmul.f32 %v1574, %v1578
    %v1580 = vadd.f32 %v730, %v1579
    %vm1581 = vmand %vm1029, %vm1030
    %vm1582 = vmxor %vm1030, 1
    %vm1583 = vmand %vm1554, %vm1582
    %v1584 = vsel %vm1583, %v61, %v1577
    %v1585 = vsel %vm1581, %v729, %v1584
    %v1586 = vsel %vm1583, %v69, %v1580
    %v1587 = vsel %vm1581, %v730, %v1586
    %v1588 = vsel %vm1030, %v746, %v1585
    %v1589 = vsel %vm1030, %v748, %v1587
    %v1590 = vmul.f32 %v1560, %v1587
    %v1591 = vmul.f32 %v1585, %v1561
    %v1592 = vsub.f32 %v1590, %v1591
    %v1593 = vadd.f32 %v1569, %v1592
    %v1594 = vmul.f32 %v1585, %v1589
    %v1595 = vmul.f32 %v1588, %v1587
    %v1596 = vsub.f32 %v1594, %v1595
    %v1597 = vadd.f32 %v1593, %v1596
    %v1598 = vsub.f32 %v954, %v959
    %vm1599 = vcmp.eq.f32.partialorder %v1598, 0.0
    %v1600 = vsel %vm1599, 1.0, %v1598
    %v1601 = vrcp.pop %v1600
    %v1602 = vmul.f32 %v954, %v1601
    %v1603 = vsub.f32 %v749, %v746
    %v1604 = vmul.f32 %v1602, %v1603
    %v1605 = vadd.f32 %v746, %v1604
    %v1606 = vsub.f32 %v750, %v748
    %v1607 = vmul.f32 %v1602, %v1606
    %v1608 = vadd.f32 %v748, %v1607
    %vm1609 = vmand %vm1030, %vm1031
    %vm1610 = vmxor %vm1031, 1
    %vm1611 = vmand %vm1582, %vm1610
    %v1612 = vsel %vm1611, %v61, %v1605
    %v1613 = vsel %vm1609, %v746, %v1612
    %v1614 = vsel %vm1611, %v69, %v1608
    %v1615 = vsel %vm1609, %v748, %v1614
    %v1616 = vsel %vm1031, %v749, %v1613
    %v1617 = vsel %vm1031, %v750, %v1615
    %v1618 = vmul.f32 %v1588, %v1615
    %v1619 = vmul.f32 %v1613, %v1589
    %v1620 = vsub.f32 %v1618, %v1619
    %v1621 = vadd.f32 %v1597, %v1620
    %v1622 = vmul.f32 %v1613, %v1617
    %v1623 = vmul.f32 %v1616, %v1615
    %v1624 = vsub.f32 %v1622, %v1623
    %v1625 = vadd.f32 %v1621, %v1624
    %v1626 = vsub.f32 %v959, %v964
    %vm1627 = vcmp.eq.f32.partialorder %v1626, 0.0
    %v1628 = vsel %vm1627, 1.0, %v1626
    %v1629 = vrcp.pop %v1628
    %v1630 = vmul.f32 %v959, %v1629
    %v1631 = vsub.f32 %v766, %v749
    %v1632 = vmul.f32 %v1630, %v1631
    %v1633 = vadd.f32 %v749, %v1632
    %v1634 = vsub.f32 %v768, %v750
    %v1635 = vmul.f32 %v1630, %v1634
    %v1636 = vadd.f32 %v750, %v1635
    %vm1637 = vmand %vm1031, %vm1032
    %vm1638 = vmxor %vm1032, 1
    %vm1639 = vmand %vm1610, %vm1638
    %v1640 = vsel %vm1639, %v61, %v1633
    %v1641 = vsel %vm1637, %v749, %v1640
    %v1642 = vsel %vm1639, %v69, %v1636
    %v1643 = vsel %vm1637, %v750, %v1642
    %v1644 = vsel %vm1032, %v766, %v1641
    %v1645 = vsel %vm1032, %v768, %v1643
    %v1646 = vmul.f32 %v1616, %v1643
    %v1647 = vmul.f32 %v1641, %v1617
    %v1648 = vsub.f32 %v1646, %v1647
    %v1649 = vadd.f32 %v1625, %v1648
    %v1650 = vmul.f32 %v1641, %v1645
    %v1651 = vmul.f32 %v1644, %v1643
    %v1652 = vsub.f32 %v1650, %v1651
    %v1653 = vadd.f32 %v1649, %v1652
    %v1654 = vsub.f32 %v964, %v969
    %vm1655 = vcmp.eq.f32.partialorder %v1654, 0.0
    %v1656 = vsel %vm1655, 1.0, %v1654
    %v1657 = vrcp.pop %v1656
    %v1658 = vmul.f32 %v964, %v1657
    %v1659 = vsub.f32 %v769, %v766
    %v1660 = vmul.f32 %v1658, %v1659
    %v1661 = vadd.f32 %v766, %v1660
    %v1662 = vsub.f32 %v770, %v768
    %v1663 = vmul.f32 %v1658, %v1662
    %v1664 = vadd.f32 %v768, %v1663
    %vm1665 = vmand %vm1032, %vm1033
    %vm1666 = vmxor %vm1033, 1
    %vm1667 = vmand %vm1638, %vm1666
    %v1668 = vsel %vm1667, %v61, %v1661
    %v1669 = vsel %vm1665, %v766, %v1668
    %v1670 = vsel %vm1667, %v69, %v1664
    %v1671 = vsel %vm1665, %v768, %v1670
    %v1672 = vsel %vm1033, %v769, %v1669
    %v1673 = vsel %vm1033, %v770, %v1671
    %v1674 = vmul.f32 %v1644, %v1671
    %v1675 = vmul.f32 %v1669, %v1645
    %v1676 = vsub.f32 %v1674, %v1675
    %v1677 = vadd.f32 %v1653, %v1676
    %v1678 = vmul.f32 %v1669, %v1673
    %v1679 = vmul.f32 %v1672, %v1671
    %v1680 = vsub.f32 %v1678, %v1679
    %v1681 = vadd.f32 %v1677, %v1680
    %v1682 = vsub.f32 %v969, %v974
    %vm1683 = vcmp.eq.f32.partialorder %v1682, 0.0
    %v1684 = vsel %vm1683, 1.0, %v1682
    %v1685 = vrcp.pop %v1684
    %v1686 = vmul.f32 %v969, %v1685
    %v1687 = vsub.f32 %v786, %v769
    %v1688 = vmul.f32 %v1686, %v1687
    %v1689 = vadd.f32 %v769, %v1688
    %v1690 = vsub.f32 %v788, %v770
    %v1691 = vmul.f32 %v1686, %v1690
    %v1692 = vadd.f32 %v770, %v1691
    %vm1693 = vmand %vm1033, %vm1034
    %vm1694 = vmxor %vm1034, 1
    %vm1695 = vmand %vm1666, %vm1694
    %v1696 = vsel %vm1695, %v61, %v1689
    %v1697 = vsel %vm1693, %v769, %v1696
    %v1698 = vsel %vm1695, %v69, %v1692
    %v1699 = vsel %vm1693, %v770, %v1698
    %v1700 = vsel %vm1034, %v786, %v1697
    %v1701 = vsel %vm1034, %v788, %v1699
    %v1702 = vmul.f32 %v1672, %v1699
    %v1703 = vmul.f32 %v1697, %v1673
    %v1704 = vsub.f32 %v1702, %v1703
    %v1705 = vadd.f32 %v1681, %v1704
    %v1706 = vmul.f32 %v1697, %v1701
    %v1707 = vmul.f32 %v1700, %v1699
    %v1708 = vsub.f32 %v1706, %v1707
    %v1709 = vadd.f32 %v1705, %v1708
    %v1710 = vsub.f32 %v974, %v979
    %vm1711 = vcmp.eq.f32.partialorder %v1710, 0.0
    %v1712 = vsel %vm1711, 1.0, %v1710
    %v1713 = vrcp.pop %v1712
    %v1714 = vmul.f32 %v974, %v1713
    %v1715 = vsub.f32 %v789, %v786
    %v1716 = vmul.f32 %v1714, %v1715
    %v1717 = vadd.f32 %v786, %v1716
    %v1718 = vsub.f32 %v790, %v788
    %v1719 = vmul.f32 %v1714, %v1718
    %v1720 = vadd.f32 %v788, %v1719
    %vm1721 = vmand %vm1034, %vm1035
    %vm1722 = vmxor %vm1035, 1
    %vm1723 = vmand %vm1694, %vm1722
    %v1724 = vsel %vm1723, %v61, %v1717
    %v1725 = vsel %vm1721, %v786, %v1724
    %v1726 = vsel %vm1723, %v69, %v1720
    %v1727 = vsel %vm1721, %v788, %v1726
    %v1728 = vsel %vm1035, %v789, %v1725
    %v1729 = vsel %vm1035, %v790, %v1727
    %v1730 = vmul.f32 %v1700, %v1727
    %v1731 = vmul.f32 %v1725, %v1701
    %v1732 = vsub.f32 %v1730, %v1731
    %v1733 = vadd.f32 %v1709, %v1732
    %v1734 = vmul.f32 %v1725, %v1729
    %v1735 = vmul.f32 %v1728, %v1727
    %v1736 = vsub.f32 %v1734, %v1735
    %v1737 = vadd.f32 %v1733, %v1736
    %v1738 = vsub.f32 %v979, %v984
    %vm1739 = vcmp.eq.f32.partialorder %v1738, 0.0
    %v1740 = vsel %vm1739, 1.0, %v1738
    %v1741 = vrcp.pop %v1740
    %v1742 = vmul.f32 %v979, %v1741
    %v1743 = vsub.f32 %v806, %v789
    %v1744 = vmul.f32 %v1742, %v1743
    %v1745 = vadd.f32 %v789, %v1744
    %v1746 = vsub.f32 %v808, %v790
    %v1747 = vmul.f32 %v1742, %v1746
    %v1748 = vadd.f32 %v790, %v1747
    %vm1749 = vmand %vm1035, %vm1036
    %vm1750 = vmxor %vm1036, 1
    %vm1751 = vmand %vm1722, %vm1750
    %v1752 = vsel %vm1751, %v61, %v1745
    %v1753 = vsel %vm1749, %v789, %v1752
    %v1754 = vsel %vm1751, %v69, %v1748
    %v1755 = vsel %vm1749, %v790, %v1754
    %v1756 = vsel %vm1036, %v806, %v1753
    %v1757 = vsel %vm1036, %v808, %v1755
    %v1758 = vmul.f32 %v1728, %v1755
    %v1759 = vmul.f32 %v1753, %v1729
    %v1760 = vsub.f32 %v1758, %v1759
    %v1761 = vadd.f32 %v1737, %v1760
    %v1762 = vmul.f32 %v1753, %v1757
    %v1763 = vmul.f32 %v1756, %v1755
    %v1764 = vsub.f32 %v1762, %v1763
    %v1765 = vadd.f32 %v1761, %v1764
    %v1766 = vsub.f32 %v984, %v989
    %vm1767 = vcmp.eq.f32.partialorder %v1766, 0.0
    %v1768 = vsel %vm1767, 1.0, %v1766
    %v1769 = vrcp.pop %v1768
    %v1770 = vmul.f32 %v984, %v1769
    %v1771 = vsub.f32 %v809, %v806
    %v1772 = vmul.f32 %v1770, %v1771
    %v1773 = vadd.f32 %v806, %v1772
    %v1774 = vsub.f32 %v810, %v808
    %v1775 = vmul.f32 %v1770, %v1774
    %v1776 = vadd.f32 %v808, %v1775
    %vm1777 = vmand %vm1036, %vm1037
    %vm1778 = vmxor %vm1037, 1
    %vm1779 = vmand %vm1750, %vm1778
    %v1780 = vsel %vm1779, %v61, %v1773
    %v1781 = vsel %vm1777, %v806, %v1780
    %v1782 = vsel %vm1779, %v69, %v1776
    %v1783 = vsel %vm1777, %v808, %v1782
    %v1784 = vsel %vm1037, %v809, %v1781
    %v1785 = vsel %vm1037, %v810, %v1783
    %v1786 = vmul.f32 %v1756, %v1783
    %v1787 = vmul.f32 %v1781, %v1757
    %v1788 = vsub.f32 %v1786, %v1787
    %v1789 = vadd.f32 %v1765, %v1788
    %v1790 = vmul.f32 %v1781, %v1785
    %v1791 = vmul.f32 %v1784, %v1783
    %v1792 = vsub.f32 %v1790, %v1791
    %v1793 = vadd.f32 %v1789, %v1792
    %v1794 = vsub.f32 %v989, %v994
    %vm1795 = vcmp.eq.f32.partialorder %v1794, 0.0
    %v1796 = vsel %vm1795, 1.0, %v1794
    %v1797 = vrcp.pop %v1796
    %v1798 = vmul.f32 %v989, %v1797
    %v1799 = vsub.f32 %v826, %v809
    %v1800 = vmul.f32 %v1798, %v1799
    %v1801 = vadd.f32 %v809, %v1800
    %v1802 = vsub.f32 %v828, %v810
    %v1803 = vmul.f32 %v1798, %v1802
    %v1804 = vadd.f32 %v810, %v1803
    %vm1805 = vmand %vm1037, %vm1038
    %vm1806 = vmxor %vm1038, 1
    %vm1807 = vmand %vm1778, %vm1806
    %v1808 = vsel %vm1807, %v61, %v1801
    %v1809 = vsel %vm1805, %v809, %v1808
    %v1810 = vsel %vm1807, %v69, %v1804
    %v1811 = vsel %vm1805, %v810, %v1810
    %v1812 = vsel %vm1038, %v826, %v1809
    %v1813 = vsel %vm1038, %v828, %v1811
    %v1814 = vmul.f32 %v1784, %v1811
    %v1815 = vmul.f32 %v1809, %v1785
    %v1816 = vsub.f32 %v1814, %v1815
    %v1817 = vadd.f32 %v1793, %v1816
    %v1818 = vmul.f32 %v1809, %v1813
    %v1819 = vmul.f32 %v1812, %v1811
    %v1820 = vsub.f32 %v1818, %v1819
    %v1821 = vadd.f32 %v1817, %v1820
    %v1822 = vsub.f32 %v994, %v999
    %vm1823 = vcmp.eq.f32.partialorder %v1822, 0.0
    %v1824 = vsel %vm1823, 1.0, %v1822
    %v1825 = vrcp.pop %v1824
    %v1826 = vmul.f32 %v994, %v1825
    %v1827 = vsub.f32 %v829, %v826
    %v1828 = vmul.f32 %v1826, %v1827
    %v1829 = vadd.f32 %v826, %v1828
    %v1830 = vsub.f32 %v830, %v828
    %v1831 = vmul.f32 %v1826, %v1830
    %v1832 = vadd.f32 %v828, %v1831
    %vm1833 = vmand %vm1038, %vm1039
    %vm1834 = vmxor %vm1039, 1
    %vm1835 = vmand %vm1806, %vm1834
    %v1836 = vsel %vm1835, %v61, %v1829
    %v1837 = vsel %vm1833, %v826, %v1836
    %v1838 = vsel %vm1835, %v69, %v1832
    %v1839 = vsel %vm1833, %v828, %v1838
    %v1840 = vsel %vm1039, %v829, %v1837
    %v1841 = vsel %vm1039, %v830, %v1839
    %v1842 = vmul.f32 %v1812, %v1839
    %v1843 = vmul.f32 %v1837, %v1813
    %v1844 = vsub.f32 %v1842, %v1843
    %v1845 = vadd.f32 %v1821, %v1844
    %v1846 = vmul.f32 %v1837, %v1841
    %v1847 = vmul.f32 %v1840, %v1839
    %v1848 = vsub.f32 %v1846, %v1847
    %v1849 = vadd.f32 %v1845, %v1848
    %v1850 = vsub.f32 %v999, %v1004
    %vm1851 = vcmp.eq.f32.partialorder %v1850, 0.0
    %v1852 = vsel %vm1851, 1.0, %v1850
    %v1853 = vrcp.pop %v1852
    %v1854 = vmul.f32 %v999, %v1853
    %v1855 = vsub.f32 %v845, %v829
    %v1856 = vmul.f32 %v1854, %v1855
    %v1857 = vadd.f32 %v829, %v1856
    %v1858 = vsub.f32 %v847, %v830
    %v1859 = vmul.f32 %v1854, %v1858
    %v1860 = vadd.f32 %v830, %v1859
    %vm1861 = vmand %vm1039, %vm1040
    %vm1862 = vmxor %vm1040, 1
    %vm1863 = vmand %vm1834, %vm1862
    %v1864 = vsel %vm1863, %v61, %v1857
    %v1865 = vsel %vm1861, %v829, %v1864
    %v1866 = vsel %vm1863, %v69, %v1860
    %v1867 = vsel %vm1861, %v830, %v1866
    %v1868 = vsel %vm1040, %v845, %v1865
    %v1869 = vsel %vm1040, %v847, %v1867
    %v1870 = vmul.f32 %v1840, %v1867
    %v1871 = vmul.f32 %v1865, %v1841
    %v1872 = vsub.f32 %v1870, %v1871
    %v1873 = vadd.f32 %v1849, %v1872
    %v1874 = vmul.f32 %v1865, %v1869
    %v1875 = vmul.f32 %v1868, %v1867
    %v1876 = vsub.f32 %v1874, %v1875
    %v1877 = vadd.f32 %v1873, %v1876
    %v1878 = vsub.f32 %v1004, %v1009
    %vm1879 = vcmp.eq.f32.partialorder %v1878, 0.0
    %v1880 = vsel %vm1879, 1.0, %v1878
    %v1881 = vrcp.pop %v1880
    %v1882 = vmul.f32 %v1004, %v1881
    %v1883 = vsub.f32 %v848, %v845
    %v1884 = vmul.f32 %v1882, %v1883
    %v1885 = vadd.f32 %v845, %v1884
    %v1886 = vsub.f32 %v849, %v847
    %v1887 = vmul.f32 %v1882, %v1886
    %v1888 = vadd.f32 %v847, %v1887
    %vm1889 = vmand %vm1040, %vm1041
    %vm1890 = vmxor %vm1041, 1
    %vm1891 = vmand %vm1862, %vm1890
    %v1892 = vsel %vm1891, %v61, %v1885
    %v1893 = vsel %vm1889, %v845, %v1892
    %v1894 = vsel %vm1891, %v69, %v1888
    %v1895 = vsel %vm1889, %v847, %v1894
    %v1896 = vsel %vm1041, %v848, %v1893
    %v1897 = vsel %vm1041, %v849, %v1895
    %v1898 = vmul.f32 %v1868, %v1895
    %v1899 = vmul.f32 %v1893, %v1869
    %v1900 = vsub.f32 %v1898, %v1899
    %v1901 = vadd.f32 %v1877, %v1900
    %v1902 = vmul.f32 %v1893, %v1897
    %v1903 = vmul.f32 %v1896, %v1895
    %v1904 = vsub.f32 %v1902, %v1903
    %v1905 = vadd.f32 %v1901, %v1904
    %v1906 = vsub.f32 %v1009, %v854
    %vm1907 = vcmp.eq.f32.partialorder %v1906, 0.0
    %v1908 = vsel %vm1907, 1.0, %v1906
    %v1909 = vrcp.pop %v1908
    %v1910 = vmul.f32 %v1009, %v1909
    %v1911 = vsub.f32 %v546, %v848
    %v1912 = vmul.f32 %v1910, %v1911
    %v1913 = vadd.f32 %v848, %v1912
    %v1914 = vsub.f32 %v548, %v849
    %v1915 = vmul.f32 %v1910, %v1914
    %v1916 = vadd.f32 %v849, %v1915
    %vm1917 = vmand %vm1041, %vm1010
    %vm1918 = vmand %vm1890, %vm1054
    %v1919 = vsel %vm1918, %v61, %v1913
    %v1920 = vsel %vm1917, %v848, %v1919
    %v1921 = vsel %vm1918, %v69, %v1916
    %v1922 = vsel %vm1917, %v849, %v1921
    %v1923 = vsel %vm1010, %v546, %v1920
    %v1924 = vsel %vm1010, %v548, %v1922
    %v1925 = vmul.f32 %v1896, %v1922
    %v1926 = vmul.f32 %v1920, %v1897
    %v1927 = vsub.f32 %v1925, %v1926
    %v1928 = vadd.f32 %v1905, %v1927
    %v1929 = vmul.f32 %v1920, %v1924
    %v1930 = vmul.f32 %v1923, %v1922
    %v1931 = vsub.f32 %v1929, %v1930
    %v1932 = vadd.f32 %v1928, %v1931
    %v1933 = vmul.f32 %v1923, %v1060
    %v1934 = vmul.f32 %v1058, %v1924
    %v1935 = vsub.f32 %v1933, %v1934
    %v1936 = vadd.f32 %v1932, %v1935
    %v1937 = vand.u32 2147483647, %v1936
    %v1938 = vmul.f32 %v1937, 0.5
    %v1939 = vmin.f32 %v101, %v103
    %v1940 = vmin.f32 %v1938, %v1939
    %v1941 = vadd.f32 %v101, %v103
    %v1942 = vsub.f32 %v1941, %v1940
    %vm1943 = vcmp.gt.f32.partialorder %v1942, 0.0
    %v1944 = vsel %vm1943, %v1942, 1.0
    %v1945 = vrcp.pop %v1944
    %v1946 = vmul.f32 %v1940, %v1945
    %v1947 = vsel %vm1943, %v1946, 0.0
    %v1948 = vsub.f32 1.0, %v1947
    %1949 = vst [vmem:[#allocation7] sm:$0xff] %v1948
    // Predicated region
    $region18: #{tpu_custom_call.1} parent=1 // pred_check
      _
    $region19: #{tpu_custom_call.1} parent=1 // pred_check_branch
      %1951 = sbr.rel (0) target = $region21
    $region20: #{tpu_custom_call.1} parent=1 // pred_region
      %s1953 = ssub.s32 128, 128
      %1954 = vsyncadd [#allocation4], %s1953
      %s1956 = sshll.u32 [#allocation7], 4
      %s1957 = int_to_ptr.vmem [resolvable:$true] %s1956
      %1959 = dma.vmem_to_hbm [thread:$0]  %s1957, 128, %s2, [#allocation4]
    $region21: #{tpu_custom_call.1} parent=1 // pred_fallthru
      _
    // Predicated region
    $region22: #{tpu_custom_call.1} parent=1 // pred_check
      _
    $region23: #{tpu_custom_call.1} parent=1 // pred_check_branch
      %1961 = sbr.rel (0) target = $region25
    $region24: #{tpu_custom_call.1} parent=1 // pred_region
      %1962 = dma.done [#allocation4], 128
    $region25: #{tpu_custom_call.1} parent=1 // pred_fallthru
      _
    %1963 = vsyncpa [#allocation3], 1
    %1964 = vsyncpa [#allocation6], 1
    %1965 = vsyncpa [#allocation4], 1

</llo_original>
